<compile_context>
chip_gen: v7x
topology: tpu7x:2x2x1
jax: 0.10.0
libtpu: 0.0.40
codegen_flags: <defaults>
</compile_context>

<pallas_src>
import math
import functools

import jax
import jax.numpy as jnp
from jax import lax
from jax.experimental import pallas as pl
from jax.experimental.pallas import tpu as pltpu

EPS = 1e-5  # nn.LayerNorm default


# ----------------------------- Pallas kernel -----------------------------

def _decoder_stack_kernel(x_emb_ref, src_ref, sa_w_ref, ca_w_ref, w1_ref, b1_ref,
                          w2_ref, vec_ref, wout_ref, bout_ref, o_ref, x_state,
                          *, B, Sq, Sk, heads):
    """One grid step == one decoder layer.

    x_emb_ref : (B*Sq, E)   embedded target tokens (read only at layer 0)
    src_ref   : (B*Sk, E)   encoder output (key/value source for cross-attn)
    sa_w_ref  : (1, 4, E, E) self-attn  [Wq*scale (block-diag), Wk, Wv, Wo]
    ca_w_ref  : (1, 4, E, E) cross-attn [Wq*scale (block-diag), Wk, Wv, Wo]
    w1_ref    : (1, E, H)   FFN first linear
    b1_ref    : (1, 1, H)
    w2_ref    : (1, H, E)   FFN second linear
    vec_ref   : (1, 9, E)   [sa_bo, ln1_g, ln1_b, ca_bo, ln2_g, ln2_b, b2, ln3_g, ln3_b]
    wout_ref  : (E, Np)     lane-padded vocab projection (constant across layers)
    bout_ref  : (1, Np)
    o_ref     : (B*Sq, Np)  logits (lane-dense, written once; resident across grid)
    x_state   : VMEM (B*Sq, E) f32 activation carried across layers
    """
    l = pl.program_id(0)
    E = x_state.shape[1]
    D = E // heads

    @pl.when(l == 0)
    def _():
        x_state[...] = x_emb_ref[...].astype(jnp.float32)

    x = x_state[...]                              # (B*Sq, E) f32
    src = src_ref[...].astype(jnp.float32)        # (B*Sk, E) f32
    vec = vec_ref[0]                              # (9, E)

    # Causal mask for the masked self-attention (static shapes).
    row = lax.broadcasted_iota(jnp.int32, (Sq, Sq), 0)
    col = lax.broadcasted_iota(jnp.int32, (Sq, Sq), 1)
    causal_keep = col <= row

    def layer_norm(y, g, b):
        mean = jnp.mean(y, axis=-1, keepdims=True)
        var = jnp.mean((y - mean) ** 2, axis=-1, keepdims=True)
        return (y - mean) * lax.rsqrt(var + EPS) * g + b

    def mha(xq, xkv, w_ref, bo, keep, sq, sk):
        wq = w_ref[0, 0]; wk = w_ref[0, 1]; wv = w_ref[0, 2]; wo = w_ref[0, 3]
        # Fused lane-dense projections over the whole flattened batch.
        q = jnp.dot(xq, wq, preferred_element_type=jnp.float32)    # (B*sq, E)
        k = jnp.dot(xkv, wk, preferred_element_type=jnp.float32)   # (B*sk, E)
        v = jnp.dot(xkv, wv, preferred_element_type=jnp.float32)   # (B*sk, E)
        ctx_rows = []
        for b in range(B):
            qb = q[b * sq:(b + 1) * sq]
            kb = k[b * sk:(b + 1) * sk]
            vb = v[b * sk:(b + 1) * sk]
            head_ctx = []
            for h in range(heads):
                lo, hi = h * D, (h + 1) * D
                # q · kᵀ without a transpose copy (contract on the D axis).
                s = lax.dot_general(qb[:, lo:hi], kb[:, lo:hi],
                                    (((1,), (1,)), ((), ())),
                                    preferred_element_type=jnp.float32)   # (sq, sk)
                if keep is not None:
                    s = jnp.where(keep, s, jnp.float32(-1e20))  # masked_fill(mask==0,-1e20)
                m = jnp.max(s, axis=-1, keepdims=True)
                p = jnp.exp(s - m)
                p = p / jnp.sum(p, axis=-1, keepdims=True)       # exact softmax (f32)
                head_ctx.append(jnp.dot(p, vb[:, lo:hi],
                                        preferred_element_type=jnp.float32))  # (sq, D)
            ctx_rows.append(jnp.concatenate(head_ctx, axis=-1))  # (sq, E)
        ctx = jnp.concatenate(ctx_rows, axis=0)                  # (B*sq, E)
        # Single fused output projection (K = E) instead of per-head K = D matmuls.
        return jnp.dot(ctx, wo, preferred_element_type=jnp.float32) + bo

    # --- masked self-attention + Add&LN ---
    a = mha(x, x, sa_w_ref, vec[0:1], causal_keep, Sq, Sq)
    x = layer_norm(x + a, vec[1:2], vec[2:3])
    # --- cross-attention (value=src, key=src, query=x) + Add&LN ---
    a = mha(x, src, ca_w_ref, vec[3:4], None, Sq, Sk)
    x = layer_norm(x + a, vec[4:5], vec[5:6])
    # --- position-wise FFN + Add&LN ---
    h1 = jnp.maximum(
        jnp.dot(x, w1_ref[0], preferred_element_type=jnp.float32) + b1_ref[0], 0.0)
    f = jnp.dot(h1, w2_ref[0], preferred_element_type=jnp.float32) + vec[6:7]
    x = layer_norm(x + f, vec[7:8], vec[8:9])

    x_state[...] = x

    # Fused final vocab projection. The output block index is constant across the
    # grid, so it stays resident in VMEM and is written back to HBM exactly once.
    o_ref[...] = (jnp.dot(x, wout_ref[...], preferred_element_type=jnp.float32)
                  + bout_ref[...]).astype(o_ref.dtype)


def decoder_stack(x2d, src2d, prepped, *, B, Sq, Sk, heads):
    """Run the entire decoder stack (+ final linear) in one pallas_call."""
    E = x2d.shape[1]
    H = prepped["w1"].shape[2]
    Np = prepped["w_out"].shape[1]
    n_layers = prepped["sa_w"].shape[0]
    kern = functools.partial(_decoder_stack_kernel, B=B, Sq=Sq, Sk=Sk, heads=heads)
    return pl.pallas_call(
        kern,
        out_shape=jax.ShapeDtypeStruct((B * Sq, Np), x2d.dtype),
        grid=(n_layers,),
        in_specs=[
            pl.BlockSpec((B * Sq, E), lambda l: (0, 0)),         # x_emb (constant)
            pl.BlockSpec((B * Sk, E), lambda l: (0, 0)),         # src   (constant)
            pl.BlockSpec((1, 4, E, E), lambda l: (l, 0, 0, 0)),  # self-attn weights
            pl.BlockSpec((1, 4, E, E), lambda l: (l, 0, 0, 0)),  # cross-attn weights
            pl.BlockSpec((1, E, H), lambda l: (l, 0, 0)),        # FFN w1
            pl.BlockSpec((1, 1, H), lambda l: (l, 0, 0)),        # FFN b1
            pl.BlockSpec((1, H, E), lambda l: (l, 0, 0)),        # FFN w2
            pl.BlockSpec((1, 9, E), lambda l: (l, 0, 0)),        # biases + LN params
            pl.BlockSpec((E, Np), lambda l: (0, 0)),             # vocab W (constant)
            pl.BlockSpec((1, Np), lambda l: (0, 0)),             # vocab b (constant)
        ],
        out_specs=pl.BlockSpec((B * Sq, Np), lambda l: (0, 0)),
        scratch_shapes=[pltpu.VMEM((B * Sq, E), jnp.float32)],
        compiler_params=pltpu.CompilerParams(
            dimension_semantics=("arbitrary",)),
    )(x2d, src2d, prepped["sa_w"], prepped["ca_w"], prepped["w1"], prepped["b1"],
      prepped["w2"], prepped["vecs"], prepped["w_out"], prepped["b_out"])


# ----------------------------- Model (JAX glue) -----------------------------

def sinusoidal_pos_encoding(max_len, d_model):
    pos = jnp.arange(max_len, dtype=jnp.float32)[:, None]
    i = jnp.arange(0, d_model, 2, dtype=jnp.float32)[None, :]
    angle = pos / jnp.power(10000.0, i / d_model)
    pe = jnp.zeros((max_len, d_model), jnp.float32)
    pe = pe.at[:, 0::2].set(jnp.sin(angle))
    pe = pe.at[:, 1::2].set(jnp.cos(angle))
    return pe


def prepare_params(params, heads):
    """One-time weight prep (hoisted out of the forward):
    - expand shared per-head (D,D) Q/K/V weights to block-diagonal (E,E) (jnp.kron)
      and fold the 1/sqrt(D) attention scale into W_q,
    - stack per-layer tensors along a leading layer axis for grid=(L,),
    - lane-pad the vocab projection to a multiple of 128 for unmasked stores."""
    E = params["tok_emb"].shape[1]
    D = E // heads
    scale = 1.0 / math.sqrt(D)
    eye = jnp.eye(heads, dtype=jnp.float32)

    sa_w, ca_w, w1, b1, w2, vecs = [], [], [], [], [], []
    for p in params["layers"]:
        sp, cp = p["self_attn"], p["cross_attn"]
        sa_w.append(jnp.stack([jnp.kron(eye, sp["w_q"]) * scale,
                               jnp.kron(eye, sp["w_k"]),
                               jnp.kron(eye, sp["w_v"]),
                               sp["w_o"]]))
        ca_w.append(jnp.stack([jnp.kron(eye, cp["w_q"]) * scale,
                               jnp.kron(eye, cp["w_k"]),
                               jnp.kron(eye, cp["w_v"]),
                               cp["w_o"]]))
        w1.append(p["w1"])
        b1.append(p["b1"].reshape(1, -1))
        w2.append(p["w2"])
        vecs.append(jnp.stack([sp["b_o"], p["ln1_g"], p["ln1_b"],
                               cp["b_o"], p["ln2_g"], p["ln2_b"],
                               p["b2"], p["ln3_g"], p["ln3_b"]]))

    vocab = params["w_out"].shape[1]
    vocab_pad = ((vocab + 127) // 128) * 128
    return {
        "tok_emb": params["tok_emb"],
        "pos_enc": params["pos_enc"],
        "sa_w": jnp.stack(sa_w),                       # (L, 4, E, E)
        "ca_w": jnp.stack(ca_w),                       # (L, 4, E, E)
        "w1": jnp.stack(w1),                           # (L, E, H)
        "b1": jnp.stack(b1),                           # (L, 1, H)
        "w2": jnp.stack(w2),                           # (L, H, E)
        "vecs": jnp.stack(vecs),                       # (L, 9, E)
        "w_out": jnp.pad(params["w_out"], ((0, 0), (0, vocab_pad - vocab))),
        "b_out": jnp.pad(params["b_out"], (0, vocab_pad - vocab)).reshape(1, vocab_pad),
    }


def decoder_forward(prepped, trg_tokens, src, *, heads, vocab):
    B, S = trg_tokens.shape
    Sk = src.shape[1]
    E = prepped["tok_emb"].shape[1]

    # TransformerEmbedding = token embedding + sinusoidal positional encoding
    # (dropout is identity in eval mode).  Gather stays in plain JAX.
    x = jnp.take(prepped["tok_emb"], trg_tokens, axis=0) + prepped["pos_enc"][:S][None]

    # Single fused pallas_call: all decoder layers + final vocab projection.
    logits_pad = decoder_stack(x.reshape(B * S, E), src.reshape(B * Sk, E),
                               prepped, B=B, Sq=S, Sk=Sk, heads=heads)
    Np = logits_pad.shape[-1]
    return logits_pad.reshape(B, S, Np)[:, :, :vocab]


# ----------------------------- Deterministic parameter init -----------------------------

def init_params(key, vocab, max_len, embed, heads, hidden, n_layers):
    D = embed // heads
    keys = jax.random.split(key, 2 + n_layers)

    def dense(k, shape, scale=0.02):
        return (scale * jax.random.normal(k, shape)).astype(jnp.float32)

    def attn_params(k):
        ks = jax.random.split(k, 4)
        return {
            "w_v": dense(ks[0], (D, D)),
            "w_k": dense(ks[1], (D, D)),
            "w_q": dense(ks[2], (D, D)),
            "w_o": dense(ks[3], (embed, embed)),
            "b_o": jnp.zeros((embed,), jnp.float32),
        }

    layers = []
    for li in range(n_layers):
        ks = jax.random.split(keys[2 + li], 4)
        layers.append({
            "self_attn": attn_params(ks[0]),
            "cross_attn": attn_params(ks[1]),
            "ln1_g": jnp.ones((embed,), jnp.float32), "ln1_b": jnp.zeros((embed,), jnp.float32),
            "ln2_g": jnp.ones((embed,), jnp.float32), "ln2_b": jnp.zeros((embed,), jnp.float32),
            "ln3_g": jnp.ones((embed,), jnp.float32), "ln3_b": jnp.zeros((embed,), jnp.float32),
            "w1": dense(ks[2], (embed, hidden)), "b1": jnp.zeros((hidden,), jnp.float32),
            "w2": dense(ks[3], (hidden, embed)), "b2": jnp.zeros((embed,), jnp.float32),
        })

    return {
        "tok_emb": dense(keys[0], (vocab, embed), scale=1.0),
        "pos_enc": sinusoidal_pos_encoding(max_len, embed),
        "layers": layers,
        "w_out": dense(keys[1], (embed, vocab)),
        "b_out": jnp.zeros((vocab,), jnp.float32),
    }


# ----------------------------- main -----------------------------

if __name__ == "__main__":
    vocab, max_len = 50, 16
    embed, heads, hidden, n_layers = 32, 4, 64, 2
    B, S_trg, S_src = 2, 8, 8

    root = jax.random.PRNGKey(0)
    k_param, k_trg, k_src = jax.random.split(root, 3)

    params = init_params(k_param, vocab, max_len, embed, heads, hidden, n_layers)
    prepped = prepare_params(params, heads)   # one-time kron / pad / stacking

    trg = jax.random.randint(k_trg, (B, S_trg), 0, vocab, dtype=jnp.int32)   # target token ids
    src = jax.random.normal(k_src, (B, S_src, embed), dtype=jnp.float32)     # encoder output

    fwd = jax.jit(functools.partial(decoder_forward, heads=heads, vocab=vocab))
    out = fwd(prepped, trg, src)
    jax.block_until_ready(out)

    assert out.shape == (B, S_trg, vocab)
    assert bool(jnp.isfinite(out).all())
    print("KERNEL_OK")
</pallas_src>

<mosaic_0001>
module attributes {stable_mosaic.version = 11 : i64} {
  func.func @_decoder_stack_kernel(%arg0: i32, %arg1: memref<16x32xf32, #tpu.memory_space<vmem>>, %arg2: memref<16x32xf32, #tpu.memory_space<vmem>>, %arg3: memref<1x4x32x32xf32, #tpu.memory_space<vmem>>, %arg4: memref<1x4x32x32xf32, #tpu.memory_space<vmem>>, %arg5: memref<1x32x64xf32, #tpu.memory_space<vmem>>, %arg6: memref<1x1x64xf32, #tpu.memory_space<vmem>>, %arg7: memref<1x64x32xf32, #tpu.memory_space<vmem>>, %arg8: memref<1x9x32xf32, #tpu.memory_space<vmem>>, %arg9: memref<32x128xf32, #tpu.memory_space<vmem>>, %arg10: memref<1x128xf32, #tpu.memory_space<vmem>>, %arg11: memref<16x128xf32, #tpu.memory_space<vmem>>, %arg12: memref<16x32xf32, #tpu.memory_space<vmem>>) attributes {dimension_semantics = [#tpu.dimension_semantics<arbitrary>], iteration_bounds = array<i64: 2>, scalar_prefetch = 0 : i64, scratch_operands = 1 : i64, tpu.core_type = #tpu.core_type<tc>, window_params = [{pipeline_mode = #tpu.pipeline_mode<synchronous>, transform_indices = @transform_0, window_bounds = array<i64: 16, 32>}, {pipeline_mode = #tpu.pipeline_mode<synchronous>, transform_indices = @transform_1, window_bounds = array<i64: 16, 32>}, {transform_indices = @transform_2, window_bounds = array<i64: 1, 4, 32, 32>}, {transform_indices = @transform_3, window_bounds = array<i64: 1, 4, 32, 32>}, {transform_indices = @transform_4, window_bounds = array<i64: 1, 32, 64>}, {transform_indices = @transform_5, window_bounds = array<i64: 1, 1, 64>}, {transform_indices = @transform_6, window_bounds = array<i64: 1, 64, 32>}, {transform_indices = @transform_7, window_bounds = array<i64: 1, 9, 32>}, {pipeline_mode = #tpu.pipeline_mode<synchronous>, transform_indices = @transform_8, window_bounds = array<i64: 32, 128>}, {pipeline_mode = #tpu.pipeline_mode<synchronous>, transform_indices = @transform_9, window_bounds = array<i64: 1, 128>}, {pipeline_mode = #tpu.pipeline_mode<synchronous>, transform_indices = @transform_10, window_bounds = array<i64: 16, 128>}]} {
    %c0_i32 = arith.constant 0 : i32
    %0 = arith.cmpi eq, %arg0, %c0_i32 : i32
    %1 = arith.extui %0 : i1 to i32
    %c0_i32_0 = arith.constant 0 : i32
    %2 = arith.cmpi ne, %1, %c0_i32_0 : i32
    scf.if %2 {
      %c0_151 = arith.constant 0 : index
      %c0_152 = arith.constant 0 : index
      %395 = vector.load %arg1[%c0_151, %c0_152] : memref<16x32xf32, #tpu.memory_space<vmem>>, vector<16x32xf32>
      %c0_153 = arith.constant 0 : index
      %c0_154 = arith.constant 0 : index
      %396 = vector.load %arg12[%c0_153, %c0_154] : memref<16x32xf32, #tpu.memory_space<vmem>>, vector<16x32xf32>
      tpu.vector_store %arg12[%c0_153, %c0_154], %395 {strides = array<i32>} : memref<16x32xf32, #tpu.memory_space<vmem>>, vector<16x32xf32>,
    } else {
    }
    %c0 = arith.constant 0 : index
    %c0_1 = arith.constant 0 : index
    %3 = vector.load %arg12[%c0, %c0_1] : memref<16x32xf32, #tpu.memory_space<vmem>>, vector<16x32xf32>
    %c0_2 = arith.constant 0 : index
    %c0_3 = arith.constant 0 : index
    %4 = vector.load %arg2[%c0_2, %c0_3] : memref<16x32xf32, #tpu.memory_space<vmem>>, vector<16x32xf32>
    %c0_4 = arith.constant 0 : index
    %c0_5 = arith.constant 0 : index
    %c0_6 = arith.constant 0 : index
    %5 = vector.load %arg8[%c0_4, %c0_5, %c0_6] : memref<1x9x32xf32, #tpu.memory_space<vmem>>, vector<1x9x32xf32>
    %6 = vector.shape_cast %5 : vector<1x9x32xf32> to vector<9x32xf32>
    %7 = tpu.iota {dimensions = array<i32: 0>} : vector<8x8xi32>
    %8 = tpu.iota {dimensions = array<i32: 1>} : vector<8x8xi32>
    %9 = arith.cmpi sle, %8, %7 : vector<8x8xi32>
    %10 = vector.extract_strided_slice %6 {offsets = [0, 0], sizes = [1, 32], strides = [1, 1]} : vector<9x32xf32> to vector<1x32xf32>
    %c0_7 = arith.constant 0 : index
    %c0_8 = arith.constant 0 : index
    %c0_9 = arith.constant 0 : index
    %c0_10 = arith.constant 0 : index
    %11 = vector.load %arg3[%c0_7, %c0_8, %c0_9, %c0_10] : memref<1x4x32x32xf32, #tpu.memory_space<vmem>>, vector<1x1x32x32xf32>
    %12 = vector.shape_cast %11 : vector<1x1x32x32xf32> to vector<32x32xf32>
    %c0_11 = arith.constant 0 : index
    %c1 = arith.constant 1 : index
    %c0_12 = arith.constant 0 : index
    %c0_13 = arith.constant 0 : index
    %13 = vector.load %arg3[%c0_11, %c1, %c0_12, %c0_13] : memref<1x4x32x32xf32, #tpu.memory_space<vmem>>, vector<1x1x32x32xf32>
    %14 = vector.shape_cast %13 : vector<1x1x32x32xf32> to vector<32x32xf32>
    %c0_14 = arith.constant 0 : index
    %c2 = arith.constant 2 : index
    %c0_15 = arith.constant 0 : index
    %c0_16 = arith.constant 0 : index
    %15 = vector.load %arg3[%c0_14, %c2, %c0_15, %c0_16] : memref<1x4x32x32xf32, #tpu.memory_space<vmem>>, vector<1x1x32x32xf32>
    %16 = vector.shape_cast %15 : vector<1x1x32x32xf32> to vector<32x32xf32>
    %c0_17 = arith.constant 0 : index
    %c3 = arith.constant 3 : index
    %c0_18 = arith.constant 0 : index
    %c0_19 = arith.constant 0 : index
    %17 = vector.load %arg3[%c0_17, %c3, %c0_18, %c0_19] : memref<1x4x32x32xf32, #tpu.memory_space<vmem>>, vector<1x1x32x32xf32>
    %18 = vector.shape_cast %17 : vector<1x1x32x32xf32> to vector<32x32xf32>
    %cst = arith.constant dense<0.000000e+00> : vector<16x32xf32>
    %19 = tpu.matmul %3, %12, %cst {dimension_numbers = #tpu.dot_dimension_numbers<[1], [0], [0], [1], [0, 0, 1, 1], [], []>} : vector<16x32xf32>, vector<32x32xf32>, vector<16x32xf32> -> vector<16x32xf32>
    %cst_20 = arith.constant dense<0.000000e+00> : vector<16x32xf32>
    %20 = tpu.matmul %3, %14, %cst_20 {dimension_numbers = #tpu.dot_dimension_numbers<[1], [0], [0], [1], [0, 0, 1, 1], [], []>} : vector<16x32xf32>, vector<32x32xf32>, vector<16x32xf32> -> vector<16x32xf32>
    %cst_21 = arith.constant dense<0.000000e+00> : vector<16x32xf32>
    %21 = tpu.matmul %3, %16, %cst_21 {dimension_numbers = #tpu.dot_dimension_numbers<[1], [0], [0], [1], [0, 0, 1, 1], [], []>} : vector<16x32xf32>, vector<32x32xf32>, vector<16x32xf32> -> vector<16x32xf32>
    %22 = vector.extract_strided_slice %19 {offsets = [0, 0], sizes = [8, 32], strides = [1, 1]} : vector<16x32xf32> to vector<8x32xf32>
    %23 = vector.extract_strided_slice %20 {offsets = [0, 0], sizes = [8, 32], strides = [1, 1]} : vector<16x32xf32> to vector<8x32xf32>
    %24 = vector.extract_strided_slice %21 {offsets = [0, 0], sizes = [8, 32], strides = [1, 1]} : vector<16x32xf32> to vector<8x32xf32>
    %25 = vector.extract_strided_slice %22 {offsets = [0, 0], sizes = [8, 8], strides = [1, 1]} : vector<8x32xf32> to vector<8x8xf32>
    %26 = vector.extract_strided_slice %23 {offsets = [0, 0], sizes = [8, 8], strides = [1, 1]} : vector<8x32xf32> to vector<8x8xf32>
    %cst_22 = arith.constant dense<0.000000e+00> : vector<8x8xf32>
    %27 = tpu.matmul %25, %26, %cst_22 {dimension_numbers = #tpu.dot_dimension_numbers<[1], [1], [0], [0], [0, 0, 1, 0], [], []>} : vector<8x8xf32>, vector<8x8xf32>, vector<8x8xf32> -> vector<8x8xf32>
    %cst_23 = arith.constant -1.000000e+20 : f32
    %28 = vector.broadcast %cst_23 : f32 to vector<8x8xf32>
    %29 = arith.select %9, %27, %28 : vector<8x8xi1>, vector<8x8xf32>
    %cst_24 = arith.constant dense<0xFF800000> : vector<8xf32>
    %30 = vector.multi_reduction <maximumf>, %29, %cst_24 [1] : vector<8x8xf32> to vector<8xf32>
    %31 = vector.shape_cast %30 : vector<8xf32> to vector<8x1xf32>
    %32 = vector.broadcast %31 : vector<8x1xf32> to vector<8x8xf32>
    %33 = arith.subf %29, %32 : vector<8x8xf32>
    %34 = math.exp %33 : vector<8x8xf32>
    %cst_25 = arith.constant dense<0.000000e+00> : vector<8xf32>
    %35 = vector.multi_reduction <add>, %34, %cst_25 [1] : vector<8x8xf32> to vector<8xf32>
    %36 = vector.shape_cast %35 : vector<8xf32> to vector<8x1xf32>
    %37 = vector.broadcast %36 : vector<8x1xf32> to vector<8x8xf32>
    %38 = arith.divf %34, %37 : vector<8x8xf32>
    %39 = vector.extract_strided_slice %24 {offsets = [0, 0], sizes = [8, 8], strides = [1, 1]} : vector<8x32xf32> to vector<8x8xf32>
    %cst_26 = arith.constant dense<0.000000e+00> : vector<8x8xf32>
    %40 = tpu.matmul %38, %39, %cst_26 {dimension_numbers = #tpu.dot_dimension_numbers<[1], [0], [0], [1], [0, 0, 1, 1], [], []>} : vector<8x8xf32>, vector<8x8xf32>, vector<8x8xf32> -> vector<8x8xf32>
    %41 = vector.extract_strided_slice %22 {offsets = [0, 8], sizes = [8, 8], strides = [1, 1]} : vector<8x32xf32> to vector<8x8xf32>
    %42 = vector.extract_strided_slice %23 {offsets = [0, 8], sizes = [8, 8], strides = [1, 1]} : vector<8x32xf32> to vector<8x8xf32>
    %cst_27 = arith.constant dense<0.000000e+00> : vector<8x8xf32>
    %43 = tpu.matmul %41, %42, %cst_27 {dimension_numbers = #tpu.dot_dimension_numbers<[1], [1], [0], [0], [0, 0, 1, 0], [], []>} : vector<8x8xf32>, vector<8x8xf32>, vector<8x8xf32> -> vector<8x8xf32>
    %cst_28 = arith.constant -1.000000e+20 : f32
    %44 = vector.broadcast %cst_28 : f32 to vector<8x8xf32>
    %45 = arith.select %9, %43, %44 : vector<8x8xi1>, vector<8x8xf32>
    %cst_29 = arith.constant dense<0xFF800000> : vector<8xf32>
    %46 = vector.multi_reduction <maximumf>, %45, %cst_29 [1] : vector<8x8xf32> to vector<8xf32>
    %47 = vector.shape_cast %46 : vector<8xf32> to vector<8x1xf32>
    %48 = vector.broadcast %47 : vector<8x1xf32> to vector<8x8xf32>
    %49 = arith.subf %45, %48 : vector<8x8xf32>
    %50 = math.exp %49 : vector<8x8xf32>
    %cst_30 = arith.constant dense<0.000000e+00> : vector<8xf32>
    %51 = vector.multi_reduction <add>, %50, %cst_30 [1] : vector<8x8xf32> to vector<8xf32>
    %52 = vector.shape_cast %51 : vector<8xf32> to vector<8x1xf32>
    %53 = vector.broadcast %52 : vector<8x1xf32> to vector<8x8xf32>
    %54 = arith.divf %50, %53 : vector<8x8xf32>
    %55 = vector.extract_strided_slice %24 {offsets = [0, 8], sizes = [8, 8], strides = [1, 1]} : vector<8x32xf32> to vector<8x8xf32>
    %cst_31 = arith.constant dense<0.000000e+00> : vector<8x8xf32>
    %56 = tpu.matmul %54, %55, %cst_31 {dimension_numbers = #tpu.dot_dimension_numbers<[1], [0], [0], [1], [0, 0, 1, 1], [], []>} : vector<8x8xf32>, vector<8x8xf32>, vector<8x8xf32> -> vector<8x8xf32>
    %57 = vector.extract_strided_slice %22 {offsets = [0, 16], sizes = [8, 8], strides = [1, 1]} : vector<8x32xf32> to vector<8x8xf32>
    %58 = vector.extract_strided_slice %23 {offsets = [0, 16], sizes = [8, 8], strides = [1, 1]} : vector<8x32xf32> to vector<8x8xf32>
    %cst_32 = arith.constant dense<0.000000e+00> : vector<8x8xf32>
    %59 = tpu.matmul %57, %58, %cst_32 {dimension_numbers = #tpu.dot_dimension_numbers<[1], [1], [0], [0], [0, 0, 1, 0], [], []>} : vector<8x8xf32>, vector<8x8xf32>, vector<8x8xf32> -> vector<8x8xf32>
    %cst_33 = arith.constant -1.000000e+20 : f32
    %60 = vector.broadcast %cst_33 : f32 to vector<8x8xf32>
    %61 = arith.select %9, %59, %60 : vector<8x8xi1>, vector<8x8xf32>
    %cst_34 = arith.constant dense<0xFF800000> : vector<8xf32>
    %62 = vector.multi_reduction <maximumf>, %61, %cst_34 [1] : vector<8x8xf32> to vector<8xf32>
    %63 = vector.shape_cast %62 : vector<8xf32> to vector<8x1xf32>
    %64 = vector.broadcast %63 : vector<8x1xf32> to vector<8x8xf32>
    %65 = arith.subf %61, %64 : vector<8x8xf32>
    %66 = math.exp %65 : vector<8x8xf32>
    %cst_35 = arith.constant dense<0.000000e+00> : vector<8xf32>
    %67 = vector.multi_reduction <add>, %66, %cst_35 [1] : vector<8x8xf32> to vector<8xf32>
    %68 = vector.shape_cast %67 : vector<8xf32> to vector<8x1xf32>
    %69 = vector.broadcast %68 : vector<8x1xf32> to vector<8x8xf32>
    %70 = arith.divf %66, %69 : vector<8x8xf32>
    %71 = vector.extract_strided_slice %24 {offsets = [0, 16], sizes = [8, 8], strides = [1, 1]} : vector<8x32xf32> to vector<8x8xf32>
    %cst_36 = arith.constant dense<0.000000e+00> : vector<8x8xf32>
    %72 = tpu.matmul %70, %71, %cst_36 {dimension_numbers = #tpu.dot_dimension_numbers<[1], [0], [0], [1], [0, 0, 1, 1], [], []>} : vector<8x8xf32>, vector<8x8xf32>, vector<8x8xf32> -> vector<8x8xf32>
    %73 = vector.extract_strided_slice %22 {offsets = [0, 24], sizes = [8, 8], strides = [1, 1]} : vector<8x32xf32> to vector<8x8xf32>
    %74 = vector.extract_strided_slice %23 {offsets = [0, 24], sizes = [8, 8], strides = [1, 1]} : vector<8x32xf32> to vector<8x8xf32>
    %cst_37 = arith.constant dense<0.000000e+00> : vector<8x8xf32>
    %75 = tpu.matmul %73, %74, %cst_37 {dimension_numbers = #tpu.dot_dimension_numbers<[1], [1], [0], [0], [0, 0, 1, 0], [], []>} : vector<8x8xf32>, vector<8x8xf32>, vector<8x8xf32> -> vector<8x8xf32>
    %cst_38 = arith.constant -1.000000e+20 : f32
    %76 = vector.broadcast %cst_38 : f32 to vector<8x8xf32>
    %77 = arith.select %9, %75, %76 : vector<8x8xi1>, vector<8x8xf32>
    %cst_39 = arith.constant dense<0xFF800000> : vector<8xf32>
    %78 = vector.multi_reduction <maximumf>, %77, %cst_39 [1] : vector<8x8xf32> to vector<8xf32>
    %79 = vector.shape_cast %78 : vector<8xf32> to vector<8x1xf32>
    %80 = vector.broadcast %79 : vector<8x1xf32> to vector<8x8xf32>
    %81 = arith.subf %77, %80 : vector<8x8xf32>
    %82 = math.exp %81 : vector<8x8xf32>
    %cst_40 = arith.constant dense<0.000000e+00> : vector<8xf32>
    %83 = vector.multi_reduction <add>, %82, %cst_40 [1] : vector<8x8xf32> to vector<8xf32>
    %84 = vector.shape_cast %83 : vector<8xf32> to vector<8x1xf32>
    %85 = vector.broadcast %84 : vector<8x1xf32> to vector<8x8xf32>
    %86 = arith.divf %82, %85 : vector<8x8xf32>
    %87 = vector.extract_strided_slice %24 {offsets = [0, 24], sizes = [8, 8], strides = [1, 1]} : vector<8x32xf32> to vector<8x8xf32>
    %cst_41 = arith.constant dense<0.000000e+00> : vector<8x8xf32>
    %88 = tpu.matmul %86, %87, %cst_41 {dimension_numbers = #tpu.dot_dimension_numbers<[1], [0], [0], [1], [0, 0, 1, 1], [], []>} : vector<8x8xf32>, vector<8x8xf32>, vector<8x8xf32> -> vector<8x8xf32>
    %89 = tpu.concatenate %40, %56, %72, %88 in 1 : vector<8x8xf32>, vector<8x8xf32>, vector<8x8xf32>, vector<8x8xf32> -> vector<8x32xf32>
    %90 = vector.extract_strided_slice %19 {offsets = [8, 0], sizes = [8, 32], strides = [1, 1]} : vector<16x32xf32> to vector<8x32xf32>
    %91 = vector.extract_strided_slice %20 {offsets = [8, 0], sizes = [8, 32], strides = [1, 1]} : vector<16x32xf32> to vector<8x32xf32>
    %92 = vector.extract_strided_slice %21 {offsets = [8, 0], sizes = [8, 32], strides = [1, 1]} : vector<16x32xf32> to vector<8x32xf32>
    %93 = vector.extract_strided_slice %90 {offsets = [0, 0], sizes = [8, 8], strides = [1, 1]} : vector<8x32xf32> to vector<8x8xf32>
    %94 = vector.extract_strided_slice %91 {offsets = [0, 0], sizes = [8, 8], strides = [1, 1]} : vector<8x32xf32> to vector<8x8xf32>
    %cst_42 = arith.constant dense<0.000000e+00> : vector<8x8xf32>
    %95 = tpu.matmul %93, %94, %cst_42 {dimension_numbers = #tpu.dot_dimension_numbers<[1], [1], [0], [0], [0, 0, 1, 0], [], []>} : vector<8x8xf32>, vector<8x8xf32>, vector<8x8xf32> -> vector<8x8xf32>
    %cst_43 = arith.constant -1.000000e+20 : f32
    %96 = vector.broadcast %cst_43 : f32 to vector<8x8xf32>
    %97 = arith.select %9, %95, %96 : vector<8x8xi1>, vector<8x8xf32>
    %cst_44 = arith.constant dense<0xFF800000> : vector<8xf32>
    %98 = vector.multi_reduction <maximumf>, %97, %cst_44 [1] : vector<8x8xf32> to vector<8xf32>
    %99 = vector.shape_cast %98 : vector<8xf32> to vector<8x1xf32>
    %100 = vector.broadcast %99 : vector<8x1xf32> to vector<8x8xf32>
    %101 = arith.subf %97, %100 : vector<8x8xf32>
    %102 = math.exp %101 : vector<8x8xf32>
    %cst_45 = arith.constant dense<0.000000e+00> : vector<8xf32>
    %103 = vector.multi_reduction <add>, %102, %cst_45 [1] : vector<8x8xf32> to vector<8xf32>
    %104 = vector.shape_cast %103 : vector<8xf32> to vector<8x1xf32>
    %105 = vector.broadcast %104 : vector<8x1xf32> to vector<8x8xf32>
    %106 = arith.divf %102, %105 : vector<8x8xf32>
    %107 = vector.extract_strided_slice %92 {offsets = [0, 0], sizes = [8, 8], strides = [1, 1]} : vector<8x32xf32> to vector<8x8xf32>
    %cst_46 = arith.constant dense<0.000000e+00> : vector<8x8xf32>
    %108 = tpu.matmul %106, %107, %cst_46 {dimension_numbers = #tpu.dot_dimension_numbers<[1], [0], [0], [1], [0, 0, 1, 1], [], []>} : vector<8x8xf32>, vector<8x8xf32>, vector<8x8xf32> -> vector<8x8xf32>
    %109 = vector.extract_strided_slice %90 {offsets = [0, 8], sizes = [8, 8], strides = [1, 1]} : vector<8x32xf32> to vector<8x8xf32>
    %110 = vector.extract_strided_slice %91 {offsets = [0, 8], sizes = [8, 8], strides = [1, 1]} : vector<8x32xf32> to vector<8x8xf32>
    %cst_47 = arith.constant dense<0.000000e+00> : vector<8x8xf32>
    %111 = tpu.matmul %109, %110, %cst_47 {dimension_numbers = #tpu.dot_dimension_numbers<[1], [1], [0], [0], [0, 0, 1, 0], [], []>} : vector<8x8xf32>, vector<8x8xf32>, vector<8x8xf32> -> vector<8x8xf32>
    %cst_48 = arith.constant -1.000000e+20 : f32
    %112 = vector.broadcast %cst_48 : f32 to vector<8x8xf32>
    %113 = arith.select %9, %111, %112 : vector<8x8xi1>, vector<8x8xf32>
    %cst_49 = arith.constant dense<0xFF800000> : vector<8xf32>
    %114 = vector.multi_reduction <maximumf>, %113, %cst_49 [1] : vector<8x8xf32> to vector<8xf32>
    %115 = vector.shape_cast %114 : vector<8xf32> to vector<8x1xf32>
    %116 = vector.broadcast %115 : vector<8x1xf32> to vector<8x8xf32>
    %117 = arith.subf %113, %116 : vector<8x8xf32>
    %118 = math.exp %117 : vector<8x8xf32>
    %cst_50 = arith.constant dense<0.000000e+00> : vector<8xf32>
    %119 = vector.multi_reduction <add>, %118, %cst_50 [1] : vector<8x8xf32> to vector<8xf32>
    %120 = vector.shape_cast %119 : vector<8xf32> to vector<8x1xf32>
    %121 = vector.broadcast %120 : vector<8x1xf32> to vector<8x8xf32>
    %122 = arith.divf %118, %121 : vector<8x8xf32>
    %123 = vector.extract_strided_slice %92 {offsets = [0, 8], sizes = [8, 8], strides = [1, 1]} : vector<8x32xf32> to vector<8x8xf32>
    %cst_51 = arith.constant dense<0.000000e+00> : vector<8x8xf32>
    %124 = tpu.matmul %122, %123, %cst_51 {dimension_numbers = #tpu.dot_dimension_numbers<[1], [0], [0], [1], [0, 0, 1, 1], [], []>} : vector<8x8xf32>, vector<8x8xf32>, vector<8x8xf32> -> vector<8x8xf32>
    %125 = vector.extract_strided_slice %90 {offsets = [0, 16], sizes = [8, 8], strides = [1, 1]} : vector<8x32xf32> to vector<8x8xf32>
    %126 = vector.extract_strided_slice %91 {offsets = [0, 16], sizes = [8, 8], strides = [1, 1]} : vector<8x32xf32> to vector<8x8xf32>
    %cst_52 = arith.constant dense<0.000000e+00> : vector<8x8xf32>
    %127 = tpu.matmul %125, %126, %cst_52 {dimension_numbers = #tpu.dot_dimension_numbers<[1], [1], [0], [0], [0, 0, 1, 0], [], []>} : vector<8x8xf32>, vector<8x8xf32>, vector<8x8xf32> -> vector<8x8xf32>
    %cst_53 = arith.constant -1.000000e+20 : f32
    %128 = vector.broadcast %cst_53 : f32 to vector<8x8xf32>
    %129 = arith.select %9, %127, %128 : vector<8x8xi1>, vector<8x8xf32>
    %cst_54 = arith.constant dense<0xFF800000> : vector<8xf32>
    %130 = vector.multi_reduction <maximumf>, %129, %cst_54 [1] : vector<8x8xf32> to vector<8xf32>
    %131 = vector.shape_cast %130 : vector<8xf32> to vector<8x1xf32>
    %132 = vector.broadcast %131 : vector<8x1xf32> to vector<8x8xf32>
    %133 = arith.subf %129, %132 : vector<8x8xf32>
    %134 = math.exp %133 : vector<8x8xf32>
    %cst_55 = arith.constant dense<0.000000e+00> : vector<8xf32>
    %135 = vector.multi_reduction <add>, %134, %cst_55 [1] : vector<8x8xf32> to vector<8xf32>
    %136 = vector.shape_cast %135 : vector<8xf32> to vector<8x1xf32>
    %137 = vector.broadcast %136 : vector<8x1xf32> to vector<8x8xf32>
    %138 = arith.divf %134, %137 : vector<8x8xf32>
    %139 = vector.extract_strided_slice %92 {offsets = [0, 16], sizes = [8, 8], strides = [1, 1]} : vector<8x32xf32> to vector<8x8xf32>
    %cst_56 = arith.constant dense<0.000000e+00> : vector<8x8xf32>
    %140 = tpu.matmul %138, %139, %cst_56 {dimension_numbers = #tpu.dot_dimension_numbers<[1], [0], [0], [1], [0, 0, 1, 1], [], []>} : vector<8x8xf32>, vector<8x8xf32>, vector<8x8xf32> -> vector<8x8xf32>
    %141 = vector.extract_strided_slice %90 {offsets = [0, 24], sizes = [8, 8], strides = [1, 1]} : vector<8x32xf32> to vector<8x8xf32>
    %142 = vector.extract_strided_slice %91 {offsets = [0, 24], sizes = [8, 8], strides = [1, 1]} : vector<8x32xf32> to vector<8x8xf32>
    %cst_57 = arith.constant dense<0.000000e+00> : vector<8x8xf32>
    %143 = tpu.matmul %141, %142, %cst_57 {dimension_numbers = #tpu.dot_dimension_numbers<[1], [1], [0], [0], [0, 0, 1, 0], [], []>} : vector<8x8xf32>, vector<8x8xf32>, vector<8x8xf32> -> vector<8x8xf32>
    %cst_58 = arith.constant -1.000000e+20 : f32
    %144 = vector.broadcast %cst_58 : f32 to vector<8x8xf32>
    %145 = arith.select %9, %143, %144 : vector<8x8xi1>, vector<8x8xf32>
    %cst_59 = arith.constant dense<0xFF800000> : vector<8xf32>
    %146 = vector.multi_reduction <maximumf>, %145, %cst_59 [1] : vector<8x8xf32> to vector<8xf32>
    %147 = vector.shape_cast %146 : vector<8xf32> to vector<8x1xf32>
    %148 = vector.broadcast %147 : vector<8x1xf32> to vector<8x8xf32>
    %149 = arith.subf %145, %148 : vector<8x8xf32>
    %150 = math.exp %149 : vector<8x8xf32>
    %cst_60 = arith.constant dense<0.000000e+00> : vector<8xf32>
    %151 = vector.multi_reduction <add>, %150, %cst_60 [1] : vector<8x8xf32> to vector<8xf32>
    %152 = vector.shape_cast %151 : vector<8xf32> to vector<8x1xf32>
    %153 = vector.broadcast %152 : vector<8x1xf32> to vector<8x8xf32>
    %154 = arith.divf %150, %153 : vector<8x8xf32>
    %155 = vector.extract_strided_slice %92 {offsets = [0, 24], sizes = [8, 8], strides = [1, 1]} : vector<8x32xf32> to vector<8x8xf32>
    %cst_61 = arith.constant dense<0.000000e+00> : vector<8x8xf32>
    %156 = tpu.matmul %154, %155, %cst_61 {dimension_numbers = #tpu.dot_dimension_numbers<[1], [0], [0], [1], [0, 0, 1, 1], [], []>} : vector<8x8xf32>, vector<8x8xf32>, vector<8x8xf32> -> vector<8x8xf32>
    %157 = tpu.concatenate %108, %124, %140, %156 in 1 : vector<8x8xf32>, vector<8x8xf32>, vector<8x8xf32>, vector<8x8xf32> -> vector<8x32xf32>
    %158 = tpu.concatenate %89, %157 in 0 : vector<8x32xf32>, vector<8x32xf32> -> vector<16x32xf32>
    %cst_62 = arith.constant dense<0.000000e+00> : vector<16x32xf32>
    %159 = tpu.matmul %158, %18, %cst_62 {dimension_numbers = #tpu.dot_dimension_numbers<[1], [0], [0], [1], [0, 0, 1, 1], [], []>} : vector<16x32xf32>, vector<32x32xf32>, vector<16x32xf32> -> vector<16x32xf32>
    %160 = vector.broadcast %10 : vector<1x32xf32> to vector<16x32xf32>
    %161 = arith.addf %159, %160 : vector<16x32xf32>
    %162 = arith.addf %3, %161 : vector<16x32xf32>
    %163 = vector.extract_strided_slice %6 {offsets = [1, 0], sizes = [1, 32], strides = [1, 1]} : vector<9x32xf32> to vector<1x32xf32>
    %164 = vector.extract_strided_slice %6 {offsets = [2, 0], sizes = [1, 32], strides = [1, 1]} : vector<9x32xf32> to vector<1x32xf32>
    %cst_63 = arith.constant dense<0.000000e+00> : vector<16xf32>
    %165 = vector.multi_reduction <add>, %162, %cst_63 [1] : vector<16x32xf32> to vector<16xf32>
    %166 = vector.shape_cast %165 : vector<16xf32> to vector<16x1xf32>
    %cst_64 = arith.constant 3.200000e+01 : f32
    %167 = vector.broadcast %cst_64 : f32 to vector<16x1xf32>
    %168 = arith.divf %166, %167 : vector<16x1xf32>
    %169 = vector.broadcast %168 : vector<16x1xf32> to vector<16x32xf32>
    %170 = arith.subf %162, %169 : vector<16x32xf32>
    %171 = arith.mulf %170, %170 : vector<16x32xf32>
    %cst_65 = arith.constant dense<0.000000e+00> : vector<16xf32>
    %172 = vector.multi_reduction <add>, %171, %cst_65 [1] : vector<16x32xf32> to vector<16xf32>
    %173 = vector.shape_cast %172 : vector<16xf32> to vector<16x1xf32>
    %cst_66 = arith.constant 3.200000e+01 : f32
    %174 = vector.broadcast %cst_66 : f32 to vector<16x1xf32>
    %175 = arith.divf %173, %174 : vector<16x1xf32>
    %176 = vector.broadcast %168 : vector<16x1xf32> to vector<16x32xf32>
    %177 = arith.subf %162, %176 : vector<16x32xf32>
    %cst_67 = arith.constant 9.99999974E-6 : f32
    %178 = vector.broadcast %cst_67 : f32 to vector<16x1xf32>
    %179 = arith.addf %175, %178 : vector<16x1xf32>
    %180 = math.rsqrt %179 : vector<16x1xf32>
    %181 = vector.broadcast %180 : vector<16x1xf32> to vector<16x32xf32>
    %182 = arith.mulf %177, %181 : vector<16x32xf32>
    %183 = vector.broadcast %163 : vector<1x32xf32> to vector<16x32xf32>
    %184 = arith.mulf %182, %183 : vector<16x32xf32>
    %185 = vector.broadcast %164 : vector<1x32xf32> to vector<16x32xf32>
    %186 = arith.addf %184, %185 : vector<16x32xf32>
    %187 = vector.extract_strided_slice %6 {offsets = [3, 0], sizes = [1, 32], strides = [1, 1]} : vector<9x32xf32> to vector<1x32xf32>
    %c0_68 = arith.constant 0 : index
    %c0_69 = arith.constant 0 : index
    %c0_70 = arith.constant 0 : index
    %c0_71 = arith.constant 0 : index
    %188 = vector.load %arg4[%c0_68, %c0_69, %c0_70, %c0_71] : memref<1x4x32x32xf32, #tpu.memory_space<vmem>>, vector<1x1x32x32xf32>
    %189 = vector.shape_cast %188 : vector<1x1x32x32xf32> to vector<32x32xf32>
    %c0_72 = arith.constant 0 : index
    %c1_73 = arith.constant 1 : index
    %c0_74 = arith.constant 0 : index
    %c0_75 = arith.constant 0 : index
    %190 = vector.load %arg4[%c0_72, %c1_73, %c0_74, %c0_75] : memref<1x4x32x32xf32, #tpu.memory_space<vmem>>, vector<1x1x32x32xf32>
    %191 = vector.shape_cast %190 : vector<1x1x32x32xf32> to vector<32x32xf32>
    %c0_76 = arith.constant 0 : index
    %c2_77 = arith.constant 2 : index
    %c0_78 = arith.constant 0 : index
    %c0_79 = arith.constant 0 : index
    %192 = vector.load %arg4[%c0_76, %c2_77, %c0_78, %c0_79] : memref<1x4x32x32xf32, #tpu.memory_space<vmem>>, vector<1x1x32x32xf32>
    %193 = vector.shape_cast %192 : vector<1x1x32x32xf32> to vector<32x32xf32>
    %c0_80 = arith.constant 0 : index
    %c3_81 = arith.constant 3 : index
    %c0_82 = arith.constant 0 : index
    %c0_83 = arith.constant 0 : index
    %194 = vector.load %arg4[%c0_80, %c3_81, %c0_82, %c0_83] : memref<1x4x32x32xf32, #tpu.memory_space<vmem>>, vector<1x1x32x32xf32>
    %195 = vector.shape_cast %194 : vector<1x1x32x32xf32> to vector<32x32xf32>
    %cst_84 = arith.constant dense<0.000000e+00> : vector<16x32xf32>
    %196 = tpu.matmul %186, %189, %cst_84 {dimension_numbers = #tpu.dot_dimension_numbers<[1], [0], [0], [1], [0, 0, 1, 1], [], []>} : vector<16x32xf32>, vector<32x32xf32>, vector<16x32xf32> -> vector<16x32xf32>
    %cst_85 = arith.constant dense<0.000000e+00> : vector<16x32xf32>
    %197 = tpu.matmul %4, %191, %cst_85 {dimension_numbers = #tpu.dot_dimension_numbers<[1], [0], [0], [1], [0, 0, 1, 1], [], []>} : vector<16x32xf32>, vector<32x32xf32>, vector<16x32xf32> -> vector<16x32xf32>
    %cst_86 = arith.constant dense<0.000000e+00> : vector<16x32xf32>
    %198 = tpu.matmul %4, %193, %cst_86 {dimension_numbers = #tpu.dot_dimension_numbers<[1], [0], [0], [1], [0, 0, 1, 1], [], []>} : vector<16x32xf32>, vector<32x32xf32>, vector<16x32xf32> -> vector<16x32xf32>
    %199 = vector.extract_strided_slice %196 {offsets = [0, 0], sizes = [8, 32], strides = [1, 1]} : vector<16x32xf32> to vector<8x32xf32>
    %200 = vector.extract_strided_slice %197 {offsets = [0, 0], sizes = [8, 32], strides = [1, 1]} : vector<16x32xf32> to vector<8x32xf32>
    %201 = vector.extract_strided_slice %198 {offsets = [0, 0], sizes = [8, 32], strides = [1, 1]} : vector<16x32xf32> to vector<8x32xf32>
    %202 = vector.extract_strided_slice %199 {offsets = [0, 0], sizes = [8, 8], strides = [1, 1]} : vector<8x32xf32> to vector<8x8xf32>
    %203 = vector.extract_strided_slice %200 {offsets = [0, 0], sizes = [8, 8], strides = [1, 1]} : vector<8x32xf32> to vector<8x8xf32>
    %cst_87 = arith.constant dense<0.000000e+00> : vector<8x8xf32>
    %204 = tpu.matmul %202, %203, %cst_87 {dimension_numbers = #tpu.dot_dimension_numbers<[1], [1], [0], [0], [0, 0, 1, 0], [], []>} : vector<8x8xf32>, vector<8x8xf32>, vector<8x8xf32> -> vector<8x8xf32>
    %cst_88 = arith.constant dense<0xFF800000> : vector<8xf32>
    %205 = vector.multi_reduction <maximumf>, %204, %cst_88 [1] : vector<8x8xf32> to vector<8xf32>
    %206 = vector.shape_cast %205 : vector<8xf32> to vector<8x1xf32>
    %207 = vector.broadcast %206 : vector<8x1xf32> to vector<8x8xf32>
    %208 = arith.subf %204, %207 : vector<8x8xf32>
    %209 = math.exp %208 : vector<8x8xf32>
    %cst_89 = arith.constant dense<0.000000e+00> : vector<8xf32>
    %210 = vector.multi_reduction <add>, %209, %cst_89 [1] : vector<8x8xf32> to vector<8xf32>
    %211 = vector.shape_cast %210 : vector<8xf32> to vector<8x1xf32>
    %212 = vector.broadcast %211 : vector<8x1xf32> to vector<8x8xf32>
    %213 = arith.divf %209, %212 : vector<8x8xf32>
    %214 = vector.extract_strided_slice %201 {offsets = [0, 0], sizes = [8, 8], strides = [1, 1]} : vector<8x32xf32> to vector<8x8xf32>
    %cst_90 = arith.constant dense<0.000000e+00> : vector<8x8xf32>
    %215 = tpu.matmul %213, %214, %cst_90 {dimension_numbers = #tpu.dot_dimension_numbers<[1], [0], [0], [1], [0, 0, 1, 1], [], []>} : vector<8x8xf32>, vector<8x8xf32>, vector<8x8xf32> -> vector<8x8xf32>
    %216 = vector.extract_strided_slice %199 {offsets = [0, 8], sizes = [8, 8], strides = [1, 1]} : vector<8x32xf32> to vector<8x8xf32>
    %217 = vector.extract_strided_slice %200 {offsets = [0, 8], sizes = [8, 8], strides = [1, 1]} : vector<8x32xf32> to vector<8x8xf32>
    %cst_91 = arith.constant dense<0.000000e+00> : vector<8x8xf32>
    %218 = tpu.matmul %216, %217, %cst_91 {dimension_numbers = #tpu.dot_dimension_numbers<[1], [1], [0], [0], [0, 0, 1, 0], [], []>} : vector<8x8xf32>, vector<8x8xf32>, vector<8x8xf32> -> vector<8x8xf32>
    %cst_92 = arith.constant dense<0xFF800000> : vector<8xf32>
    %219 = vector.multi_reduction <maximumf>, %218, %cst_92 [1] : vector<8x8xf32> to vector<8xf32>
    %220 = vector.shape_cast %219 : vector<8xf32> to vector<8x1xf32>
    %221 = vector.broadcast %220 : vector<8x1xf32> to vector<8x8xf32>
    %222 = arith.subf %218, %221 : vector<8x8xf32>
    %223 = math.exp %222 : vector<8x8xf32>
    %cst_93 = arith.constant dense<0.000000e+00> : vector<8xf32>
    %224 = vector.multi_reduction <add>, %223, %cst_93 [1] : vector<8x8xf32> to vector<8xf32>
    %225 = vector.shape_cast %224 : vector<8xf32> to vector<8x1xf32>
    %226 = vector.broadcast %225 : vector<8x1xf32> to vector<8x8xf32>
    %227 = arith.divf %223, %226 : vector<8x8xf32>
    %228 = vector.extract_strided_slice %201 {offsets = [0, 8], sizes = [8, 8], strides = [1, 1]} : vector<8x32xf32> to vector<8x8xf32>
    %cst_94 = arith.constant dense<0.000000e+00> : vector<8x8xf32>
    %229 = tpu.matmul %227, %228, %cst_94 {dimension_numbers = #tpu.dot_dimension_numbers<[1], [0], [0], [1], [0, 0, 1, 1], [], []>} : vector<8x8xf32>, vector<8x8xf32>, vector<8x8xf32> -> vector<8x8xf32>
    %230 = vector.extract_strided_slice %199 {offsets = [0, 16], sizes = [8, 8], strides = [1, 1]} : vector<8x32xf32> to vector<8x8xf32>
    %231 = vector.extract_strided_slice %200 {offsets = [0, 16], sizes = [8, 8], strides = [1, 1]} : vector<8x32xf32> to vector<8x8xf32>
    %cst_95 = arith.constant dense<0.000000e+00> : vector<8x8xf32>
    %232 = tpu.matmul %230, %231, %cst_95 {dimension_numbers = #tpu.dot_dimension_numbers<[1], [1], [0], [0], [0, 0, 1, 0], [], []>} : vector<8x8xf32>, vector<8x8xf32>, vector<8x8xf32> -> vector<8x8xf32>
    %cst_96 = arith.constant dense<0xFF800000> : vector<8xf32>
    %233 = vector.multi_reduction <maximumf>, %232, %cst_96 [1] : vector<8x8xf32> to vector<8xf32>
    %234 = vector.shape_cast %233 : vector<8xf32> to vector<8x1xf32>
    %235 = vector.broadcast %234 : vector<8x1xf32> to vector<8x8xf32>
    %236 = arith.subf %232, %235 : vector<8x8xf32>
    %237 = math.exp %236 : vector<8x8xf32>
    %cst_97 = arith.constant dense<0.000000e+00> : vector<8xf32>
    %238 = vector.multi_reduction <add>, %237, %cst_97 [1] : vector<8x8xf32> to vector<8xf32>
    %239 = vector.shape_cast %238 : vector<8xf32> to vector<8x1xf32>
    %240 = vector.broadcast %239 : vector<8x1xf32> to vector<8x8xf32>
    %241 = arith.divf %237, %240 : vector<8x8xf32>
    %242 = vector.extract_strided_slice %201 {offsets = [0, 16], sizes = [8, 8], strides = [1, 1]} : vector<8x32xf32> to vector<8x8xf32>
    %cst_98 = arith.constant dense<0.000000e+00> : vector<8x8xf32>
    %243 = tpu.matmul %241, %242, %cst_98 {dimension_numbers = #tpu.dot_dimension_numbers<[1], [0], [0], [1], [0, 0, 1, 1], [], []>} : vector<8x8xf32>, vector<8x8xf32>, vector<8x8xf32> -> vector<8x8xf32>
    %244 = vector.extract_strided_slice %199 {offsets = [0, 24], sizes = [8, 8], strides = [1, 1]} : vector<8x32xf32> to vector<8x8xf32>
    %245 = vector.extract_strided_slice %200 {offsets = [0, 24], sizes = [8, 8], strides = [1, 1]} : vector<8x32xf32> to vector<8x8xf32>
    %cst_99 = arith.constant dense<0.000000e+00> : vector<8x8xf32>
    %246 = tpu.matmul %244, %245, %cst_99 {dimension_numbers = #tpu.dot_dimension_numbers<[1], [1], [0], [0], [0, 0, 1, 0], [], []>} : vector<8x8xf32>, vector<8x8xf32>, vector<8x8xf32> -> vector<8x8xf32>
    %cst_100 = arith.constant dense<0xFF800000> : vector<8xf32>
    %247 = vector.multi_reduction <maximumf>, %246, %cst_100 [1] : vector<8x8xf32> to vector<8xf32>
    %248 = vector.shape_cast %247 : vector<8xf32> to vector<8x1xf32>
    %249 = vector.broadcast %248 : vector<8x1xf32> to vector<8x8xf32>
    %250 = arith.subf %246, %249 : vector<8x8xf32>
    %251 = math.exp %250 : vector<8x8xf32>
    %cst_101 = arith.constant dense<0.000000e+00> : vector<8xf32>
    %252 = vector.multi_reduction <add>, %251, %cst_101 [1] : vector<8x8xf32> to vector<8xf32>
    %253 = vector.shape_cast %252 : vector<8xf32> to vector<8x1xf32>
    %254 = vector.broadcast %253 : vector<8x1xf32> to vector<8x8xf32>
    %255 = arith.divf %251, %254 : vector<8x8xf32>
    %256 = vector.extract_strided_slice %201 {offsets = [0, 24], sizes = [8, 8], strides = [1, 1]} : vector<8x32xf32> to vector<8x8xf32>
    %cst_102 = arith.constant dense<0.000000e+00> : vector<8x8xf32>
    %257 = tpu.matmul %255, %256, %cst_102 {dimension_numbers = #tpu.dot_dimension_numbers<[1], [0], [0], [1], [0, 0, 1, 1], [], []>} : vector<8x8xf32>, vector<8x8xf32>, vector<8x8xf32> -> vector<8x8xf32>
    %258 = tpu.concatenate %215, %229, %243, %257 in 1 : vector<8x8xf32>, vector<8x8xf32>, vector<8x8xf32>, vector<8x8xf32> -> vector<8x32xf32>
    %259 = vector.extract_strided_slice %196 {offsets = [8, 0], sizes = [8, 32], strides = [1, 1]} : vector<16x32xf32> to vector<8x32xf32>
    %260 = vector.extract_strided_slice %197 {offsets = [8, 0], sizes = [8, 32], strides = [1, 1]} : vector<16x32xf32> to vector<8x32xf32>
    %261 = vector.extract_strided_slice %198 {offsets = [8, 0], sizes = [8, 32], strides = [1, 1]} : vector<16x32xf32> to vector<8x32xf32>
    %262 = vector.extract_strided_slice %259 {offsets = [0, 0], sizes = [8, 8], strides = [1, 1]} : vector<8x32xf32> to vector<8x8xf32>
    %263 = vector.extract_strided_slice %260 {offsets = [0, 0], sizes = [8, 8], strides = [1, 1]} : vector<8x32xf32> to vector<8x8xf32>
    %cst_103 = arith.constant dense<0.000000e+00> : vector<8x8xf32>
    %264 = tpu.matmul %262, %263, %cst_103 {dimension_numbers = #tpu.dot_dimension_numbers<[1], [1], [0], [0], [0, 0, 1, 0], [], []>} : vector<8x8xf32>, vector<8x8xf32>, vector<8x8xf32> -> vector<8x8xf32>
    %cst_104 = arith.constant dense<0xFF800000> : vector<8xf32>
    %265 = vector.multi_reduction <maximumf>, %264, %cst_104 [1] : vector<8x8xf32> to vector<8xf32>
    %266 = vector.shape_cast %265 : vector<8xf32> to vector<8x1xf32>
    %267 = vector.broadcast %266 : vector<8x1xf32> to vector<8x8xf32>
    %268 = arith.subf %264, %267 : vector<8x8xf32>
    %269 = math.exp %268 : vector<8x8xf32>
    %cst_105 = arith.constant dense<0.000000e+00> : vector<8xf32>
    %270 = vector.multi_reduction <add>, %269, %cst_105 [1] : vector<8x8xf32> to vector<8xf32>
    %271 = vector.shape_cast %270 : vector<8xf32> to vector<8x1xf32>
    %272 = vector.broadcast %271 : vector<8x1xf32> to vector<8x8xf32>
    %273 = arith.divf %269, %272 : vector<8x8xf32>
    %274 = vector.extract_strided_slice %261 {offsets = [0, 0], sizes = [8, 8], strides = [1, 1]} : vector<8x32xf32> to vector<8x8xf32>
    %cst_106 = arith.constant dense<0.000000e+00> : vector<8x8xf32>
    %275 = tpu.matmul %273, %274, %cst_106 {dimension_numbers = #tpu.dot_dimension_numbers<[1], [0], [0], [1], [0, 0, 1, 1], [], []>} : vector<8x8xf32>, vector<8x8xf32>, vector<8x8xf32> -> vector<8x8xf32>
    %276 = vector.extract_strided_slice %259 {offsets = [0, 8], sizes = [8, 8], strides = [1, 1]} : vector<8x32xf32> to vector<8x8xf32>
    %277 = vector.extract_strided_slice %260 {offsets = [0, 8], sizes = [8, 8], strides = [1, 1]} : vector<8x32xf32> to vector<8x8xf32>
    %cst_107 = arith.constant dense<0.000000e+00> : vector<8x8xf32>
    %278 = tpu.matmul %276, %277, %cst_107 {dimension_numbers = #tpu.dot_dimension_numbers<[1], [1], [0], [0], [0, 0, 1, 0], [], []>} : vector<8x8xf32>, vector<8x8xf32>, vector<8x8xf32> -> vector<8x8xf32>
    %cst_108 = arith.constant dense<0xFF800000> : vector<8xf32>
    %279 = vector.multi_reduction <maximumf>, %278, %cst_108 [1] : vector<8x8xf32> to vector<8xf32>
    %280 = vector.shape_cast %279 : vector<8xf32> to vector<8x1xf32>
    %281 = vector.broadcast %280 : vector<8x1xf32> to vector<8x8xf32>
    %282 = arith.subf %278, %281 : vector<8x8xf32>
    %283 = math.exp %282 : vector<8x8xf32>
    %cst_109 = arith.constant dense<0.000000e+00> : vector<8xf32>
    %284 = vector.multi_reduction <add>, %283, %cst_109 [1] : vector<8x8xf32> to vector<8xf32>
    %285 = vector.shape_cast %284 : vector<8xf32> to vector<8x1xf32>
    %286 = vector.broadcast %285 : vector<8x1xf32> to vector<8x8xf32>
    %287 = arith.divf %283, %286 : vector<8x8xf32>
    %288 = vector.extract_strided_slice %261 {offsets = [0, 8], sizes = [8, 8], strides = [1, 1]} : vector<8x32xf32> to vector<8x8xf32>
    %cst_110 = arith.constant dense<0.000000e+00> : vector<8x8xf32>
    %289 = tpu.matmul %287, %288, %cst_110 {dimension_numbers = #tpu.dot_dimension_numbers<[1], [0], [0], [1], [0, 0, 1, 1], [], []>} : vector<8x8xf32>, vector<8x8xf32>, vector<8x8xf32> -> vector<8x8xf32>
    %290 = vector.extract_strided_slice %259 {offsets = [0, 16], sizes = [8, 8], strides = [1, 1]} : vector<8x32xf32> to vector<8x8xf32>
    %291 = vector.extract_strided_slice %260 {offsets = [0, 16], sizes = [8, 8], strides = [1, 1]} : vector<8x32xf32> to vector<8x8xf32>
    %cst_111 = arith.constant dense<0.000000e+00> : vector<8x8xf32>
    %292 = tpu.matmul %290, %291, %cst_111 {dimension_numbers = #tpu.dot_dimension_numbers<[1], [1], [0], [0], [0, 0, 1, 0], [], []>} : vector<8x8xf32>, vector<8x8xf32>, vector<8x8xf32> -> vector<8x8xf32>
    %cst_112 = arith.constant dense<0xFF800000> : vector<8xf32>
    %293 = vector.multi_reduction <maximumf>, %292, %cst_112 [1] : vector<8x8xf32> to vector<8xf32>
    %294 = vector.shape_cast %293 : vector<8xf32> to vector<8x1xf32>
    %295 = vector.broadcast %294 : vector<8x1xf32> to vector<8x8xf32>
    %296 = arith.subf %292, %295 : vector<8x8xf32>
    %297 = math.exp %296 : vector<8x8xf32>
    %cst_113 = arith.constant dense<0.000000e+00> : vector<8xf32>
    %298 = vector.multi_reduction <add>, %297, %cst_113 [1] : vector<8x8xf32> to vector<8xf32>
    %299 = vector.shape_cast %298 : vector<8xf32> to vector<8x1xf32>
    %300 = vector.broadcast %299 : vector<8x1xf32> to vector<8x8xf32>
    %301 = arith.divf %297, %300 : vector<8x8xf32>
    %302 = vector.extract_strided_slice %261 {offsets = [0, 16], sizes = [8, 8], strides = [1, 1]} : vector<8x32xf32> to vector<8x8xf32>
    %cst_114 = arith.constant dense<0.000000e+00> : vector<8x8xf32>
    %303 = tpu.matmul %301, %302, %cst_114 {dimension_numbers = #tpu.dot_dimension_numbers<[1], [0], [0], [1], [0, 0, 1, 1], [], []>} : vector<8x8xf32>, vector<8x8xf32>, vector<8x8xf32> -> vector<8x8xf32>
    %304 = vector.extract_strided_slice %259 {offsets = [0, 24], sizes = [8, 8], strides = [1, 1]} : vector<8x32xf32> to vector<8x8xf32>
    %305 = vector.extract_strided_slice %260 {offsets = [0, 24], sizes = [8, 8], strides = [1, 1]} : vector<8x32xf32> to vector<8x8xf32>
    %cst_115 = arith.constant dense<0.000000e+00> : vector<8x8xf32>
    %306 = tpu.matmul %304, %305, %cst_115 {dimension_numbers = #tpu.dot_dimension_numbers<[1], [1], [0], [0], [0, 0, 1, 0], [], []>} : vector<8x8xf32>, vector<8x8xf32>, vector<8x8xf32> -> vector<8x8xf32>
    %cst_116 = arith.constant dense<0xFF800000> : vector<8xf32>
    %307 = vector.multi_reduction <maximumf>, %306, %cst_116 [1] : vector<8x8xf32> to vector<8xf32>
    %308 = vector.shape_cast %307 : vector<8xf32> to vector<8x1xf32>
    %309 = vector.broadcast %308 : vector<8x1xf32> to vector<8x8xf32>
    %310 = arith.subf %306, %309 : vector<8x8xf32>
    %311 = math.exp %310 : vector<8x8xf32>
    %cst_117 = arith.constant dense<0.000000e+00> : vector<8xf32>
    %312 = vector.multi_reduction <add>, %311, %cst_117 [1] : vector<8x8xf32> to vector<8xf32>
    %313 = vector.shape_cast %312 : vector<8xf32> to vector<8x1xf32>
    %314 = vector.broadcast %313 : vector<8x1xf32> to vector<8x8xf32>
    %315 = arith.divf %311, %314 : vector<8x8xf32>
    %316 = vector.extract_strided_slice %261 {offsets = [0, 24], sizes = [8, 8], strides = [1, 1]} : vector<8x32xf32> to vector<8x8xf32>
    %cst_118 = arith.constant dense<0.000000e+00> : vector<8x8xf32>
    %317 = tpu.matmul %315, %316, %cst_118 {dimension_numbers = #tpu.dot_dimension_numbers<[1], [0], [0], [1], [0, 0, 1, 1], [], []>} : vector<8x8xf32>, vector<8x8xf32>, vector<8x8xf32> -> vector<8x8xf32>
    %318 = tpu.concatenate %275, %289, %303, %317 in 1 : vector<8x8xf32>, vector<8x8xf32>, vector<8x8xf32>, vector<8x8xf32> -> vector<8x32xf32>
    %319 = tpu.concatenate %258, %318 in 0 : vector<8x32xf32>, vector<8x32xf32> -> vector<16x32xf32>
    %cst_119 = arith.constant dense<0.000000e+00> : vector<16x32xf32>
    %320 = tpu.matmul %319, %195, %cst_119 {dimension_numbers = #tpu.dot_dimension_numbers<[1], [0], [0], [1], [0, 0, 1, 1], [], []>} : vector<16x32xf32>, vector<32x32xf32>, vector<16x32xf32> -> vector<16x32xf32>
    %321 = vector.broadcast %187 : vector<1x32xf32> to vector<16x32xf32>
    %322 = arith.addf %320, %321 : vector<16x32xf32>
    %323 = arith.addf %186, %322 : vector<16x32xf32>
    %324 = vector.extract_strided_slice %6 {offsets = [4, 0], sizes = [1, 32], strides = [1, 1]} : vector<9x32xf32> to vector<1x32xf32>
    %325 = vector.extract_strided_slice %6 {offsets = [5, 0], sizes = [1, 32], strides = [1, 1]} : vector<9x32xf32> to vector<1x32xf32>
    %cst_120 = arith.constant dense<0.000000e+00> : vector<16xf32>
    %326 = vector.multi_reduction <add>, %323, %cst_120 [1] : vector<16x32xf32> to vector<16xf32>
    %327 = vector.shape_cast %326 : vector<16xf32> to vector<16x1xf32>
    %cst_121 = arith.constant 3.200000e+01 : f32
    %328 = vector.broadcast %cst_121 : f32 to vector<16x1xf32>
    %329 = arith.divf %327, %328 : vector<16x1xf32>
    %330 = vector.broadcast %329 : vector<16x1xf32> to vector<16x32xf32>
    %331 = arith.subf %323, %330 : vector<16x32xf32>
    %332 = arith.mulf %331, %331 : vector<16x32xf32>
    %cst_122 = arith.constant dense<0.000000e+00> : vector<16xf32>
    %333 = vector.multi_reduction <add>, %332, %cst_122 [1] : vector<16x32xf32> to vector<16xf32>
    %334 = vector.shape_cast %333 : vector<16xf32> to vector<16x1xf32>
    %cst_123 = arith.constant 3.200000e+01 : f32
    %335 = vector.broadcast %cst_123 : f32 to vector<16x1xf32>
    %336 = arith.divf %334, %335 : vector<16x1xf32>
    %337 = vector.broadcast %329 : vector<16x1xf32> to vector<16x32xf32>
    %338 = arith.subf %323, %337 : vector<16x32xf32>
    %cst_124 = arith.constant 9.99999974E-6 : f32
    %339 = vector.broadcast %cst_124 : f32 to vector<16x1xf32>
    %340 = arith.addf %336, %339 : vector<16x1xf32>
    %341 = math.rsqrt %340 : vector<16x1xf32>
    %342 = vector.broadcast %341 : vector<16x1xf32> to vector<16x32xf32>
    %343 = arith.mulf %338, %342 : vector<16x32xf32>
    %344 = vector.broadcast %324 : vector<1x32xf32> to vector<16x32xf32>
    %345 = arith.mulf %343, %344 : vector<16x32xf32>
    %346 = vector.broadcast %325 : vector<1x32xf32> to vector<16x32xf32>
    %347 = arith.addf %345, %346 : vector<16x32xf32>
    %c0_125 = arith.constant 0 : index
    %c0_126 = arith.constant 0 : index
    %c0_127 = arith.constant 0 : index
    %348 = vector.load %arg5[%c0_125, %c0_126, %c0_127] : memref<1x32x64xf32, #tpu.memory_space<vmem>>, vector<1x32x64xf32>
    %349 = vector.shape_cast %348 : vector<1x32x64xf32> to vector<32x64xf32>
    %cst_128 = arith.constant dense<0.000000e+00> : vector<16x64xf32>
    %350 = tpu.matmul %347, %349, %cst_128 {dimension_numbers = #tpu.dot_dimension_numbers<[1], [0], [0], [1], [0, 0, 1, 1], [], []>} : vector<16x32xf32>, vector<32x64xf32>, vector<16x64xf32> -> vector<16x64xf32>
    %c0_129 = arith.constant 0 : index
    %c0_130 = arith.constant 0 : index
    %c0_131 = arith.constant 0 : index
    %351 = vector.load %arg6[%c0_129, %c0_130, %c0_131] : memref<1x1x64xf32, #tpu.memory_space<vmem>>, vector<1x1x64xf32>
    %352 = vector.shape_cast %351 : vector<1x1x64xf32> to vector<1x64xf32>
    %353 = vector.broadcast %352 : vector<1x64xf32> to vector<16x64xf32>
    %354 = arith.addf %350, %353 : vector<16x64xf32>
    %cst_132 = arith.constant 0.000000e+00 : f32
    %355 = vector.broadcast %cst_132 : f32 to vector<16x64xf32>
    %356 = arith.maximumf %354, %355 : vector<16x64xf32>
    %c0_133 = arith.constant 0 : index
    %c0_134 = arith.constant 0 : index
    %c0_135 = arith.constant 0 : index
    %357 = vector.load %arg7[%c0_133, %c0_134, %c0_135] : memref<1x64x32xf32, #tpu.memory_space<vmem>>, vector<1x64x32xf32>
    %358 = vector.shape_cast %357 : vector<1x64x32xf32> to vector<64x32xf32>
    %cst_136 = arith.constant dense<0.000000e+00> : vector<16x32xf32>
    %359 = tpu.matmul %356, %358, %cst_136 {dimension_numbers = #tpu.dot_dimension_numbers<[1], [0], [0], [1], [0, 0, 1, 1], [], []>} : vector<16x64xf32>, vector<64x32xf32>, vector<16x32xf32> -> vector<16x32xf32>
    %360 = vector.extract_strided_slice %6 {offsets = [6, 0], sizes = [1, 32], strides = [1, 1]} : vector<9x32xf32> to vector<1x32xf32>
    %361 = vector.broadcast %360 : vector<1x32xf32> to vector<16x32xf32>
    %362 = arith.addf %359, %361 : vector<16x32xf32>
    %363 = arith.addf %347, %362 : vector<16x32xf32>
    %364 = vector.extract_strided_slice %6 {offsets = [7, 0], sizes = [1, 32], strides = [1, 1]} : vector<9x32xf32> to vector<1x32xf32>
    %365 = vector.extract_strided_slice %6 {offsets = [8, 0], sizes = [1, 32], strides = [1, 1]} : vector<9x32xf32> to vector<1x32xf32>
    %cst_137 = arith.constant dense<0.000000e+00> : vector<16xf32>
    %366 = vector.multi_reduction <add>, %363, %cst_137 [1] : vector<16x32xf32> to vector<16xf32>
    %367 = vector.shape_cast %366 : vector<16xf32> to vector<16x1xf32>
    %cst_138 = arith.constant 3.200000e+01 : f32
    %368 = vector.broadcast %cst_138 : f32 to vector<16x1xf32>
    %369 = arith.divf %367, %368 : vector<16x1xf32>
    %370 = vector.broadcast %369 : vector<16x1xf32> to vector<16x32xf32>
    %371 = arith.subf %363, %370 : vector<16x32xf32>
    %372 = arith.mulf %371, %371 : vector<16x32xf32>
    %cst_139 = arith.constant dense<0.000000e+00> : vector<16xf32>
    %373 = vector.multi_reduction <add>, %372, %cst_139 [1] : vector<16x32xf32> to vector<16xf32>
    %374 = vector.shape_cast %373 : vector<16xf32> to vector<16x1xf32>
    %cst_140 = arith.constant 3.200000e+01 : f32
    %375 = vector.broadcast %cst_140 : f32 to vector<16x1xf32>
    %376 = arith.divf %374, %375 : vector<16x1xf32>
    %377 = vector.broadcast %369 : vector<16x1xf32> to vector<16x32xf32>
    %378 = arith.subf %363, %377 : vector<16x32xf32>
    %cst_141 = arith.constant 9.99999974E-6 : f32
    %379 = vector.broadcast %cst_141 : f32 to vector<16x1xf32>
    %380 = arith.addf %376, %379 : vector<16x1xf32>
    %381 = math.rsqrt %380 : vector<16x1xf32>
    %382 = vector.broadcast %381 : vector<16x1xf32> to vector<16x32xf32>
    %383 = arith.mulf %378, %382 : vector<16x32xf32>
    %384 = vector.broadcast %364 : vector<1x32xf32> to vector<16x32xf32>
    %385 = arith.mulf %383, %384 : vector<16x32xf32>
    %386 = vector.broadcast %365 : vector<1x32xf32> to vector<16x32xf32>
    %387 = arith.addf %385, %386 : vector<16x32xf32>
    %c0_142 = arith.constant 0 : index
    %c0_143 = arith.constant 0 : index
    %388 = vector.load %arg12[%c0_142, %c0_143] : memref<16x32xf32, #tpu.memory_space<vmem>>, vector<16x32xf32>
    tpu.vector_store %arg12[%c0_142, %c0_143], %387 {strides = array<i32>} : memref<16x32xf32, #tpu.memory_space<vmem>>, vector<16x32xf32>,
    %c0_144 = arith.constant 0 : index
    %c0_145 = arith.constant 0 : index
    %389 = vector.load %arg9[%c0_144, %c0_145] : memref<32x128xf32, #tpu.memory_space<vmem>>, vector<32x128xf32>
    %cst_146 = arith.constant dense<0.000000e+00> : vector<16x128xf32>
    %390 = tpu.matmul %387, %389, %cst_146 {dimension_numbers = #tpu.dot_dimension_numbers<[1], [0], [0], [1], [0, 0, 1, 1], [], []>} : vector<16x32xf32>, vector<32x128xf32>, vector<16x128xf32> -> vector<16x128xf32>
    %c0_147 = arith.constant 0 : index
    %c0_148 = arith.constant 0 : index
    %391 = vector.load %arg10[%c0_147, %c0_148] : memref<1x128xf32, #tpu.memory_space<vmem>>, vector<1x128xf32>
    %392 = vector.broadcast %391 : vector<1x128xf32> to vector<16x128xf32>
    %393 = arith.addf %390, %392 : vector<16x128xf32>
    %c0_149 = arith.constant 0 : index
    %c0_150 = arith.constant 0 : index
    %394 = vector.load %arg11[%c0_149, %c0_150] : memref<16x128xf32, #tpu.memory_space<vmem>>, vector<16x128xf32>
    tpu.vector_store %arg11[%c0_149, %c0_150], %393 {strides = array<i32>} : memref<16x128xf32, #tpu.memory_space<vmem>>, vector<16x128xf32>,
    return
  }
  func.func @transform_0(%arg0: i32) -> (i32, i32) {
    %c0_i32 = arith.constant 0 : i32
    %c0_i32_0 = arith.constant 0 : i32
    %c0_i32_1 = arith.constant 0 : i32
    return %c0_i32, %c0_i32_0 : i32, i32
  }
  func.func @transform_1(%arg0: i32) -> (i32, i32) {
    %c0_i32 = arith.constant 0 : i32
    %c0_i32_0 = arith.constant 0 : i32
    %c0_i32_1 = arith.constant 0 : i32
    return %c0_i32, %c0_i32_0 : i32, i32
  }
  func.func @transform_2(%arg0: i32) -> (i32, i32, i32, i32) {
    %c0_i32 = arith.constant 0 : i32
    %c0_i32_0 = arith.constant 0 : i32
    %c0_i32_1 = arith.constant 0 : i32
    %c0_i32_2 = arith.constant 0 : i32
    return %arg0, %c0_i32, %c0_i32_0, %c0_i32_1 : i32, i32, i32, i32
  }
  func.func @transform_3(%arg0: i32) -> (i32, i32, i32, i32) {
    %c0_i32 = arith.constant 0 : i32
    %c0_i32_0 = arith.constant 0 : i32
    %c0_i32_1 = arith.constant 0 : i32
    %c0_i32_2 = arith.constant 0 : i32
    return %arg0, %c0_i32, %c0_i32_0, %c0_i32_1 : i32, i32, i32, i32
  }
  func.func @transform_4(%arg0: i32) -> (i32, i32, i32) {
    %c0_i32 = arith.constant 0 : i32
    %c0_i32_0 = arith.constant 0 : i32
    %c0_i32_1 = arith.constant 0 : i32
    return %arg0, %c0_i32, %c0_i32_0 : i32, i32, i32
  }
  func.func @transform_5(%arg0: i32) -> (i32, i32, i32) {
    %c0_i32 = arith.constant 0 : i32
    %c0_i32_0 = arith.constant 0 : i32
    %c0_i32_1 = arith.constant 0 : i32
    return %arg0, %c0_i32, %c0_i32_0 : i32, i32, i32
  }
  func.func @transform_6(%arg0: i32) -> (i32, i32, i32) {
    %c0_i32 = arith.constant 0 : i32
    %c0_i32_0 = arith.constant 0 : i32
    %c0_i32_1 = arith.constant 0 : i32
    return %arg0, %c0_i32, %c0_i32_0 : i32, i32, i32
  }
  func.func @transform_7(%arg0: i32) -> (i32, i32, i32) {
    %c0_i32 = arith.constant 0 : i32
    %c0_i32_0 = arith.constant 0 : i32
    %c0_i32_1 = arith.constant 0 : i32
    return %arg0, %c0_i32, %c0_i32_0 : i32, i32, i32
  }
  func.func @transform_8(%arg0: i32) -> (i32, i32) {
    %c0_i32 = arith.constant 0 : i32
    %c0_i32_0 = arith.constant 0 : i32
    %c0_i32_1 = arith.constant 0 : i32
    return %c0_i32, %c0_i32_0 : i32, i32
  }
  func.func @transform_9(%arg0: i32) -> (i32, i32) {
    %c0_i32 = arith.constant 0 : i32
    %c0_i32_0 = arith.constant 0 : i32
    %c0_i32_1 = arith.constant 0 : i32
    return %c0_i32, %c0_i32_0 : i32, i32
  }
  func.func @transform_10(%arg0: i32) -> (i32, i32) {
    %c0_i32 = arith.constant 0 : i32
    %c0_i32_0 = arith.constant 0 : i32
    %c0_i32_1 = arith.constant 0 : i32
    return %c0_i32, %c0_i32_0 : i32, i32
  }
}

</mosaic_0001>

<llo_original>
// kernel: decoder_forward.1
$region0: #{decoder_forward.1}
  #allocation0 [shape = 'u32[]', space=smem, size = 0x4, offset = 0x4, fixed_abs, tag = 'smem constant byte address 0x4 - core index']
  #allocation1 [shape = 'u32[144,128]{1,0:T(1,128)}', space=vmem, size = 0x12000, scoped, tag = 'internal scratch']
  #allocation2 [shape = 'f32[16,32]{1,0:T(8,128)}', space=vmem, size = 0x2000, scoped, tag = 'scratch operand']
  %s0 = inlined_call_operand.vmem [shape: f32[16,32], index: 0, kind: input, shape index: {}]
  %s1 = inlined_call_operand.vmem [shape: f32[16,32], index: 1, kind: input, shape index: {}]
  %s2 = inlined_call_operand.vmem [shape: f32[2,4,32,32], index: 2, kind: input, shape index: {}]
  %s3 = inlined_call_operand.vmem [shape: f32[2,4,32,32], index: 3, kind: input, shape index: {}]
  %s4 = inlined_call_operand.hbm [shape: f32[2,32,64], index: 4, kind: input, shape index: {}]
  %s5 = inlined_call_operand.vmem [shape: f32[2,1,64], index: 5, kind: input, shape index: {}]
  %s6 = inlined_call_operand.vmem [shape: f32[2,64,32], index: 6, kind: input, shape index: {}]
  %s7 = inlined_call_operand.vmem [shape: f32[2,9,32], index: 7, kind: input, shape index: {}]
  %s8 = inlined_call_operand.hbm [shape: f32[32,128], index: 8, kind: input, shape index: {}]
  %s9 = inlined_call_operand.vmem [shape: f32[1,128], index: 9, kind: input, shape index: {}]
  %s10 = inlined_call_operand.hbm [shape: f32[16,128], index: 10, kind: output, shape index: {}]
  %s11 = sld [smem:[#allocation0]]
  $region85: #{decoder_forward.1} parent=0
    _
  %s13 = ssub.s32 1, %s11
  %s14 = scalar_select 0, %s13, %s11
  $region1: #{decoder_forward.1} parent=0
    #allocation3 [shape = 'u8[32768]{0}', space=vmem, size = 0x8000, scoped, tag = 'input window, operand 4']
    #allocation4 [shape = 's32[2]{0}', space=sflag, size = 0x8, scoped, tag = 'scoped memory for decoder_forward.1']
    #allocation5 [shape = 's32[2]{0}', space=sflag, size = 0x8, scoped, tag = 'scoped memory for decoder_forward.1']
    #allocation6 [shape = 'u8[16384]{0}', space=vmem, size = 0x4000, scoped, tag = 'input window, operand 8, single buffered']
    #allocation7 [shape = 's32[1]{0}', space=sflag, size = 0x4, scoped, tag = 'scoped memory for decoder_forward.1']
    #allocation8 [shape = 'u8[8192]{0}', space=vmem, size = 0x2000, scoped, tag = 'output window, operand 0, single buffered']
    %15 = vsyncpa [#allocation4], 0
    %s16 = scalar_lea.sflag [#allocation4], 1
    %17 = vsyncpa %s16, 0
    %18 = vsyncpa [#allocation7], 0
    %19 = vsyncpa [#allocation5], 0
    loop: start=0, step=1, limit=4
    $region2: #{decoder_forward.1} parent=1 // loop_pre_header
      _
    $region3: #{decoder_forward.1} parent=1 // loop_header
      %s21 = sphi 0, %s25
      %p22 = scmp.ge.s32.totalorder %s21, 4
      %s29 = sphi 0, %s29
      %s31 = sphi 0, %s29
      %s32 = sphi 0, %s31
      %s46 = sphi 0, %s32
      %s50 = sphi 0, %s50
      %s52 = sphi 0, %s50
      %s53 = sphi 0, %s52
      %s67 = sphi 0, %s53
      %s73 = sphi 0, %s75
      %s76 = sphi 0, %s73
      %s77 = sphi 0, %s76
      %s93 = sphi 0, %s77
      %s99 = sphi 0, %s101
      %s102 = sphi 0, %s99
      %s103 = sphi 0, %s102
      %s119 = sphi 0, %s103
      %s125 = sphi 0, %s127
      %s128 = sphi 0, %s125
      %s129 = sphi 0, %s128
      %s145 = sphi 0, %s129
      %s151 = sphi 0, %s153
      %s154 = sphi 0, %s151
      %s155 = sphi 0, %s154
      %s171 = sphi 0, %s155
      %s177 = sphi 0, %s179
      %s180 = sphi 0, %s177
      %s181 = sphi 0, %s180
      %s197 = sphi 0, %s181
      %s203 = sphi 0, %s205
      %s206 = sphi 0, %s203
      %s207 = sphi 0, %s206
      %s223 = sphi 0, %s207
      %s227 = sphi 0, %s227
      %s229 = sphi 0, %s227
      %s230 = sphi 0, %s229
      %s244 = sphi 0, %s230
      %s248 = sphi 0, %s248
      %s250 = sphi 0, %s248
      %s251 = sphi 0, %s250
      %s265 = sphi 0, %s251
      %s269 = sphi 0, %s269
      %s271 = sphi 0, %s269
      %s272 = sphi 0, %s271
      %s286 = sphi 0, %s272
    $region4: #{decoder_forward.1} parent=1 // loop_header_branch
      %24 = sbr.rel (%p22) target = $region8
    $region5: #{decoder_forward.1} parent=1 // loop_body
      %s26 = ssub.s32 %s21, 1
      %s27 = ssub.s32 %s21, 2
      %s28 = sadd.s32 %s21, 1
      %s30 = sadd.s32 %s29, 1
      %p33 = scmp.eq.s32.totalorder %s21, 1
      %p34 = scmp.ne.s32.totalorder %s29, %s31
      %p35 = scmp.eq.s32.totalorder %s21, 0
      %p36 = por %p34, %p35
      %p37 = scmp.ne.s32.totalorder %s29, %s31
      %p38 = scmp.eq.s32.totalorder %s26, 1
      %p39 = por %p37, %p38
      %p40 = scmp.ne.s32.totalorder %s31, %s32
      %p41 = scmp.eq.s32.totalorder %s26, 0
      %p42 = por %p40, %p41
      %p43 = scmp.ne.s32.totalorder %s31, %s32
      %p44 = scmp.eq.s32.totalorder %s27, 1
      %p45 = por %p43, %p44
      %p47 = scmp.ne.s32.totalorder %s32, %s46
      %p48 = scmp.eq.s32.totalorder %s27, 0
      %p49 = por %p47, %p48
      %s51 = sadd.s32 %s50, 1
      %p54 = scmp.eq.s32.totalorder %s21, 1
      %p55 = scmp.ne.s32.totalorder %s50, %s52
      %p56 = scmp.eq.s32.totalorder %s21, 0
      %p57 = por %p55, %p56
      %p58 = scmp.ne.s32.totalorder %s50, %s52
      %p59 = scmp.eq.s32.totalorder %s26, 1
      %p60 = por %p58, %p59
      %p61 = scmp.ne.s32.totalorder %s52, %s53
      %p62 = scmp.eq.s32.totalorder %s26, 0
      %p63 = por %p61, %p62
      %p64 = scmp.ne.s32.totalorder %s52, %s53
      %p65 = scmp.eq.s32.totalorder %s27, 1
      %p66 = por %p64, %p65
      %p68 = scmp.ne.s32.totalorder %s53, %s67
      %p69 = scmp.eq.s32.totalorder %s27, 0
      %p70 = por %p68, %p69
      %s71 = ssub.s32 %s21, %s28
      %p72 = scmp.eq.s32.totalorder %s71, 0
      %s74 = sadd.s32 %s73, 1
      %s75 = scalar_select %p72, %s73, %s74
      %p78 = pneg %p72
      %p79 = scmp.eq.s32.totalorder %s21, 1
      %p80 = por %p78, %p79
      %p81 = scmp.ne.s32.totalorder %s73, %s76
      %p82 = scmp.eq.s32.totalorder %s21, 0
      %p83 = por %p81, %p82
      %p84 = scmp.ne.s32.totalorder %s73, %s76
      %p85 = scmp.eq.s32.totalorder %s26, 1
      %p86 = por %p84, %p85
      %p87 = scmp.ne.s32.totalorder %s76, %s77
      %p88 = scmp.eq.s32.totalorder %s26, 0
      %p89 = por %p87, %p88
      %p90 = scmp.ne.s32.totalorder %s76, %s77
      %p91 = scmp.eq.s32.totalorder %s27, 1
      %p92 = por %p90, %p91
      %p94 = scmp.ne.s32.totalorder %s77, %s93
      %p95 = scmp.eq.s32.totalorder %s27, 0
      %p96 = por %p94, %p95
      %s97 = ssub.s32 %s21, %s28
      %p98 = scmp.eq.s32.totalorder %s97, 0
      %s100 = sadd.s32 %s99, 1
      %s101 = scalar_select %p98, %s99, %s100
      %p104 = pneg %p98
      %p105 = scmp.eq.s32.totalorder %s21, 1
      %p106 = por %p104, %p105
      %p107 = scmp.ne.s32.totalorder %s99, %s102
      %p108 = scmp.eq.s32.totalorder %s21, 0
      %p109 = por %p107, %p108
      %p110 = scmp.ne.s32.totalorder %s99, %s102
      %p111 = scmp.eq.s32.totalorder %s26, 1
      %p112 = por %p110, %p111
      %p113 = scmp.ne.s32.totalorder %s102, %s103
      %p114 = scmp.eq.s32.totalorder %s26, 0
      %p115 = por %p113, %p114
      %p116 = scmp.ne.s32.totalorder %s102, %s103
      %p117 = scmp.eq.s32.totalorder %s27, 1
      %p118 = por %p116, %p117
      %p120 = scmp.ne.s32.totalorder %s103, %s119
      %p121 = scmp.eq.s32.totalorder %s27, 0
      %p122 = por %p120, %p121
      %s123 = ssub.s32 %s21, %s28
      %p124 = scmp.eq.s32.totalorder %s123, 0
      %s126 = sadd.s32 %s125, 1
      %s127 = scalar_select %p124, %s125, %s126
      %p130 = pneg %p124
      %p131 = scmp.eq.s32.totalorder %s21, 1
      %p132 = por %p130, %p131
      %p133 = scmp.ne.s32.totalorder %s125, %s128
      %p134 = scmp.eq.s32.totalorder %s21, 0
      %p135 = por %p133, %p134
      %p136 = scmp.ne.s32.totalorder %s125, %s128
      %p137 = scmp.eq.s32.totalorder %s26, 1
      %p138 = por %p136, %p137
      %p139 = scmp.ne.s32.totalorder %s128, %s129
      %p140 = scmp.eq.s32.totalorder %s26, 0
      %p141 = por %p139, %p140
      %p142 = scmp.ne.s32.totalorder %s128, %s129
      %p143 = scmp.eq.s32.totalorder %s27, 1
      %p144 = por %p142, %p143
      %p146 = scmp.ne.s32.totalorder %s129, %s145
      %p147 = scmp.eq.s32.totalorder %s27, 0
      %p148 = por %p146, %p147
      %s149 = ssub.s32 %s21, %s28
      %p150 = scmp.eq.s32.totalorder %s149, 0
      %s152 = sadd.s32 %s151, 1
      %s153 = scalar_select %p150, %s151, %s152
      %p156 = pneg %p150
      %p157 = scmp.eq.s32.totalorder %s21, 1
      %p158 = por %p156, %p157
      %p159 = scmp.ne.s32.totalorder %s151, %s154
      %p160 = scmp.eq.s32.totalorder %s21, 0
      %p161 = por %p159, %p160
      %p162 = scmp.ne.s32.totalorder %s151, %s154
      %p163 = scmp.eq.s32.totalorder %s26, 1
      %p164 = por %p162, %p163
      %p165 = scmp.ne.s32.totalorder %s154, %s155
      %p166 = scmp.eq.s32.totalorder %s26, 0
      %p167 = por %p165, %p166
      %p168 = scmp.ne.s32.totalorder %s154, %s155
      %p169 = scmp.eq.s32.totalorder %s27, 1
      %p170 = por %p168, %p169
      %p172 = scmp.ne.s32.totalorder %s155, %s171
      %p173 = scmp.eq.s32.totalorder %s27, 0
      %p174 = por %p172, %p173
      %s175 = ssub.s32 %s21, %s28
      %p176 = scmp.eq.s32.totalorder %s175, 0
      %s178 = sadd.s32 %s177, 1
      %s179 = scalar_select %p176, %s177, %s178
      %p182 = pneg %p176
      %p183 = scmp.eq.s32.totalorder %s21, 1
      %p184 = por %p182, %p183
      %p185 = scmp.ne.s32.totalorder %s177, %s180
      %p186 = scmp.eq.s32.totalorder %s21, 0
      %p187 = por %p185, %p186
      %p188 = scmp.ne.s32.totalorder %s177, %s180
      %p189 = scmp.eq.s32.totalorder %s26, 1
      %p190 = por %p188, %p189
      %p191 = scmp.ne.s32.totalorder %s180, %s181
      %p192 = scmp.eq.s32.totalorder %s26, 0
      %p193 = por %p191, %p192
      %p194 = scmp.ne.s32.totalorder %s180, %s181
      %p195 = scmp.eq.s32.totalorder %s27, 1
      %p196 = por %p194, %p195
      %p198 = scmp.ne.s32.totalorder %s181, %s197
      %p199 = scmp.eq.s32.totalorder %s27, 0
      %p200 = por %p198, %p199
      %s201 = ssub.s32 %s21, %s28
      %p202 = scmp.eq.s32.totalorder %s201, 0
      %s204 = sadd.s32 %s203, 1
      %s205 = scalar_select %p202, %s203, %s204
      %p208 = pneg %p202
      %p209 = scmp.eq.s32.totalorder %s21, 1
      %p210 = por %p208, %p209
      %p211 = scmp.ne.s32.totalorder %s203, %s206
      %p212 = scmp.eq.s32.totalorder %s21, 0
      %p213 = por %p211, %p212
      %p214 = scmp.ne.s32.totalorder %s203, %s206
      %p215 = scmp.eq.s32.totalorder %s26, 1
      %p216 = por %p214, %p215
      %p217 = scmp.ne.s32.totalorder %s206, %s207
      %p218 = scmp.eq.s32.totalorder %s26, 0
      %p219 = por %p217, %p218
      %p220 = scmp.ne.s32.totalorder %s206, %s207
      %p221 = scmp.eq.s32.totalorder %s27, 1
      %p222 = por %p220, %p221
      %p224 = scmp.ne.s32.totalorder %s207, %s223
      %p225 = scmp.eq.s32.totalorder %s27, 0
      %p226 = por %p224, %p225
      %s228 = sadd.s32 %s227, 1
      %p231 = scmp.eq.s32.totalorder %s21, 1
      %p232 = scmp.ne.s32.totalorder %s227, %s229
      %p233 = scmp.eq.s32.totalorder %s21, 0
      %p234 = por %p232, %p233
      %p235 = scmp.ne.s32.totalorder %s227, %s229
      %p236 = scmp.eq.s32.totalorder %s26, 1
      %p237 = por %p235, %p236
      %p238 = scmp.ne.s32.totalorder %s229, %s230
      %p239 = scmp.eq.s32.totalorder %s26, 0
      %p240 = por %p238, %p239
      %p241 = scmp.ne.s32.totalorder %s229, %s230
      %p242 = scmp.eq.s32.totalorder %s27, 1
      %p243 = por %p241, %p242
      %p245 = scmp.ne.s32.totalorder %s230, %s244
      %p246 = scmp.eq.s32.totalorder %s27, 0
      %p247 = por %p245, %p246
      %s249 = sadd.s32 %s248, 1
      %p252 = scmp.eq.s32.totalorder %s21, 1
      %p253 = scmp.ne.s32.totalorder %s248, %s250
      %p254 = scmp.eq.s32.totalorder %s21, 0
      %p255 = por %p253, %p254
      %p256 = scmp.ne.s32.totalorder %s248, %s250
      %p257 = scmp.eq.s32.totalorder %s26, 1
      %p258 = por %p256, %p257
      %p259 = scmp.ne.s32.totalorder %s250, %s251
      %p260 = scmp.eq.s32.totalorder %s26, 0
      %p261 = por %p259, %p260
      %p262 = scmp.ne.s32.totalorder %s250, %s251
      %p263 = scmp.eq.s32.totalorder %s27, 1
      %p264 = por %p262, %p263
      %p266 = scmp.ne.s32.totalorder %s251, %s265
      %p267 = scmp.eq.s32.totalorder %s27, 0
      %p268 = por %p266, %p267
      %s270 = sadd.s32 %s269, 1
      %p273 = scmp.eq.s32.totalorder %s21, 1
      %p274 = scmp.ne.s32.totalorder %s269, %s271
      %p275 = scmp.eq.s32.totalorder %s21, 0
      %p276 = por %p274, %p275
      %p277 = scmp.ne.s32.totalorder %s269, %s271
      %p278 = scmp.eq.s32.totalorder %s26, 1
      %p279 = por %p277, %p278
      %p280 = scmp.ne.s32.totalorder %s271, %s272
      %p281 = scmp.eq.s32.totalorder %s26, 0
      %p282 = por %p280, %p281
      %p283 = scmp.ne.s32.totalorder %s271, %s272
      %p284 = scmp.eq.s32.totalorder %s27, 1
      %p285 = por %p283, %p284
      %p287 = scmp.ne.s32.totalorder %s272, %s286
      %p288 = scmp.eq.s32.totalorder %s27, 0
      %p289 = por %p287, %p288
      %p290 = scmp.le.s32.totalorder 1, %s21
      %p291 = scmp.lt.s32.totalorder %s21, 3
      %p292 = pnand %p290, %p291
      %p293 = pneg %p292
      // Predicated region
      $region9: #{decoder_forward.1} parent=5 // pred_check
        _
      $region10: #{decoder_forward.1} parent=5 // pred_check_branch
        %295 = sbr.rel (%p292) target = $region12
      $region11: #{decoder_forward.1} parent=5 // pred_region
        %s296 = ssub.s32 %s21, 1
        // Predicated region
        $region13: #{decoder_forward.1} parent=11 // pred_check
          %p297 = pneg %p42
        $region14: #{decoder_forward.1} parent=11 // pred_check_branch
          %299 = sbr.rel (%p297) target = $region16
        $region15: #{decoder_forward.1} parent=11 // pred_region
          _
        $region16: #{decoder_forward.1} parent=11 // pred_fallthru
          _
        // Predicated region
        $region17: #{decoder_forward.1} parent=11 // pred_check
          %p300 = pneg %p63
        $region18: #{decoder_forward.1} parent=11 // pred_check_branch
          %302 = sbr.rel (%p300) target = $region20
        $region19: #{decoder_forward.1} parent=11 // pred_region
          _
        $region20: #{decoder_forward.1} parent=11 // pred_fallthru
          _
        // Predicated region
        $region21: #{decoder_forward.1} parent=11 // pred_check
          %p303 = pneg %p240
        $region22: #{decoder_forward.1} parent=11 // pred_check_branch
          %305 = sbr.rel (%p303) target = $region24
        $region23: #{decoder_forward.1} parent=11 // pred_region
          %s307 = ssub.s32 512, 512
          %308 = vsyncadd [#allocation7], %s307
          %s309 = sshll.u32 [#allocation6], 4
          %s310 = int_to_ptr.vmem [resolvable:$true] %s309
          %315 = dma.hbm_to_vmem [thread:$0]  %s8, 512, %s310, [#allocation7], 128, 128, 8
        $region24: #{decoder_forward.1} parent=11 // pred_fallthru
          _
        // Predicated region
        $region25: #{decoder_forward.1} parent=11 // pred_check
          %p316 = pneg %p261
        $region26: #{decoder_forward.1} parent=11 // pred_check_branch
          %318 = sbr.rel (%p316) target = $region28
        $region27: #{decoder_forward.1} parent=11 // pred_region
          _
        $region28: #{decoder_forward.1} parent=11 // pred_fallthru
          _
      $region12: #{decoder_forward.1} parent=5 // pred_fallthru
        _
      %p319 = scmp.lt.s32.totalorder %s21, 2
      // Predicated region
      $region29: #{decoder_forward.1} parent=5 // pred_check
        %p320 = pneg %p319
      $region30: #{decoder_forward.1} parent=5 // pred_check_branch
        %322 = sbr.rel (%p320) target = $region32
      $region31: #{decoder_forward.1} parent=5 // pred_region
        // Predicated region
        $region33: #{decoder_forward.1} parent=31 // pred_check
          %p323 = pneg %p83
        $region34: #{decoder_forward.1} parent=31 // pred_check_branch
          %325 = sbr.rel (%p323) target = $region36
        $region35: #{decoder_forward.1} parent=31 // pred_region
          %p326 = scmp.lt.s32.totalorder %s21, 1
          %s327 = scalar_select %p326, %s21, 1
          %s328 = smul.addr %s327, 16
          %s329 = smul.addr %s328, 8
          %s330 = scalar_lea.vmem %s2, %s329
        $region36: #{decoder_forward.1} parent=31 // pred_fallthru
          _
        // Predicated region
        $region37: #{decoder_forward.1} parent=31 // pred_check
          %p331 = pneg %p109
        $region38: #{decoder_forward.1} parent=31 // pred_check_branch
          %333 = sbr.rel (%p331) target = $region40
        $region39: #{decoder_forward.1} parent=31 // pred_region
          %p334 = scmp.lt.s32.totalorder %s21, 1
          %s335 = scalar_select %p334, %s21, 1
          %s336 = smul.addr %s335, 16
          %s337 = smul.addr %s336, 8
          %s338 = scalar_lea.vmem %s3, %s337
        $region40: #{decoder_forward.1} parent=31 // pred_fallthru
          _
        // Predicated region
        $region41: #{decoder_forward.1} parent=31 // pred_check
          %p339 = pneg %p135
        $region42: #{decoder_forward.1} parent=31 // pred_check_branch
          %341 = sbr.rel (%p339) target = $region44
        $region43: #{decoder_forward.1} parent=31 // pred_region
          %s342 = sand.u32 %s125, 1
          %s343 = scalar_lea.sflag [#allocation4], %s342
          %s344 = sand.u32 %s125, 1
          %s345 = smul.addr %s344, 32
          %s346 = scalar_lea.vmem [#allocation3], %s345
          %s348 = ssub.s32 512, 512
          %349 = vsyncadd %s343, %s348
          %s350 = smul.addr %s21, 4
          %s351 = smul.addr %s350, 128
          %s352 = scalar_lea.hbm %s4, %s351
          %s353 = sshll.u32 %s346, 4
          %s354 = int_to_ptr.vmem [resolvable:$true] %s353
          %359 = dma.hbm_to_vmem [thread:$0]  %s352, 512, %s354, %s343, 128, 128, 8
        $region44: #{decoder_forward.1} parent=31 // pred_fallthru
          _
        // Predicated region
        $region45: #{decoder_forward.1} parent=31 // pred_check
          %p360 = pneg %p161
        $region46: #{decoder_forward.1} parent=31 // pred_check_branch
          %362 = sbr.rel (%p360) target = $region48
        $region47: #{decoder_forward.1} parent=31 // pred_region
          %p363 = scmp.lt.s32.totalorder %s21, 1
          %s364 = scalar_select %p363, %s21, 1
          %s365 = scalar_lea.vmem %s5, %s364
        $region48: #{decoder_forward.1} parent=31 // pred_fallthru
          _
        // Predicated region
        $region49: #{decoder_forward.1} parent=31 // pred_check
          %p366 = pneg %p187
        $region50: #{decoder_forward.1} parent=31 // pred_check_branch
          %368 = sbr.rel (%p366) target = $region52
        $region51: #{decoder_forward.1} parent=31 // pred_region
          %p369 = scmp.lt.s32.totalorder %s21, 1
          %s370 = scalar_select %p369, %s21, 1
          %s371 = smul.addr %s370, 8
          %s372 = smul.addr %s371, 8
          %s373 = scalar_lea.vmem %s6, %s372
        $region52: #{decoder_forward.1} parent=31 // pred_fallthru
          _
        // Predicated region
        $region53: #{decoder_forward.1} parent=31 // pred_check
          %p374 = pneg %p213
        $region54: #{decoder_forward.1} parent=31 // pred_check_branch
          %376 = sbr.rel (%p374) target = $region56
        $region55: #{decoder_forward.1} parent=31 // pred_region
          %p377 = scmp.lt.s32.totalorder %s21, 1
          %s378 = scalar_select %p377, %s21, 1
          %s379 = smul.addr %s378, 2
          %s380 = smul.addr %s379, 8
          %s381 = scalar_lea.vmem %s7, %s380
        $region56: #{decoder_forward.1} parent=31 // pred_fallthru
          _
      $region32: #{decoder_forward.1} parent=5 // pred_fallthru
        _
      %p382 = scmp.le.s32.totalorder 1, %s21
      %p383 = scmp.lt.s32.totalorder %s21, 3
      %p384 = pnand %p382, %p383
      %p385 = pneg %p384
      // Predicated region
      $region57: #{decoder_forward.1} parent=5 // pred_check
        _
      $region58: #{decoder_forward.1} parent=5 // pred_check_branch
        %387 = sbr.rel (%p384) target = $region60
      $region59: #{decoder_forward.1} parent=5 // pred_region
        %s388 = ssub.s32 %s21, 1
        %s389 = sand.u32 %s128, 1
        %s390 = scalar_lea.sflag [#allocation4], %s389
        %s391 = sand.u32 %s128, 1
        %s392 = smul.addr %s391, 32
        %s393 = scalar_lea.vmem [#allocation3], %s392
        // Predicated region
        $region61: #{decoder_forward.1} parent=59 // pred_check
          %p394 = pneg %p141
        $region62: #{decoder_forward.1} parent=59 // pred_check_branch
          %396 = sbr.rel (%p394) target = $region64
        $region63: #{decoder_forward.1} parent=59 // pred_region
          %397 = dma.done %s390, 512
        $region64: #{decoder_forward.1} parent=59 // pred_fallthru
          _
        // Predicated region
        $region65: #{decoder_forward.1} parent=59 // pred_check
          %p398 = pneg %p240
        $region66: #{decoder_forward.1} parent=59 // pred_check_branch
          %400 = sbr.rel (%p398) target = $region68
        $region67: #{decoder_forward.1} parent=59 // pred_region
          %401 = dma.done [#allocation7], 512
        $region68: #{decoder_forward.1} parent=59 // pred_fallthru
          _
        %p402 = pneg %p42
        %p403 = pneg %p39
        %p404 = pneg %p63
        %p405 = pneg %p60
        %p406 = scmp.lt.s32.totalorder %s26, 1
        %s407 = scalar_select %p406, %s26, 1
        %s408 = smul.addr %s407, 16
        %s409 = smul.addr %s408, 8
        %s410 = scalar_lea.vmem %s2, %s409
        %p411 = pneg %p89
        %p412 = pneg %p86
        %p413 = scmp.lt.s32.totalorder %s26, 1
        %s414 = scalar_select %p413, %s26, 1
        %s415 = smul.addr %s414, 16
        %s416 = smul.addr %s415, 8
        %s417 = scalar_lea.vmem %s3, %s416
        %p418 = pneg %p115
        %p419 = pneg %p112
        %s420 = sand.u32 %s128, 1
        %s421 = scalar_lea.sflag [#allocation4], %s420
        %s422 = sand.u32 %s128, 1
        %s423 = smul.addr %s422, 32
        %s424 = scalar_lea.vmem [#allocation3], %s423
        %p425 = pneg %p141
        %p426 = pneg %p138
        %p427 = scmp.lt.s32.totalorder %s26, 1
        %s428 = scalar_select %p427, %s26, 1
        %s429 = scalar_lea.vmem %s5, %s428
        %p430 = pneg %p167
        %p431 = pneg %p164
        %p432 = scmp.lt.s32.totalorder %s26, 1
        %s433 = scalar_select %p432, %s26, 1
        %s434 = smul.addr %s433, 8
        %s435 = smul.addr %s434, 8
        %s436 = scalar_lea.vmem %s6, %s435
        %p437 = pneg %p193
        %p438 = pneg %p190
        %p439 = scmp.lt.s32.totalorder %s26, 1
        %s440 = scalar_select %p439, %s26, 1
        %s441 = smul.addr %s440, 2
        %s442 = smul.addr %s441, 8
        %s443 = scalar_lea.vmem %s7, %s442
        %p444 = pneg %p219
        %p445 = pneg %p216
        %p446 = pneg %p240
        %p447 = pneg %p237
        %p448 = pneg %p261
        %p449 = pneg %p258
        %p450 = pneg %p282
        %p451 = pneg %p279
        %p452 = scmp.lt.s32.totalorder %s26, 1
        %s453 = scalar_select %p452, %s26, 1
        %s454 = smul.addr %s453, 16
        %s455 = smul.addr %s454, 8
        %s456 = scalar_lea.vmem %s2, %s455
        %p457 = scmp.lt.s32.totalorder %s26, 1
        %s458 = scalar_select %p457, %s26, 1
        %s459 = smul.addr %s458, 16
        %s460 = smul.addr %s459, 8
        %s461 = scalar_lea.vmem %s3, %s460
        %p462 = scmp.lt.s32.totalorder %s26, 1
        %s463 = scalar_select %p462, %s26, 1
        %s464 = scalar_lea.vmem %s5, %s463
        %p465 = scmp.lt.s32.totalorder %s26, 1
        %s466 = scalar_select %p465, %s26, 1
        %s467 = smul.addr %s466, 8
        %s468 = smul.addr %s467, 8
        %s469 = scalar_lea.vmem %s6, %s468
        %p470 = scmp.lt.s32.totalorder %s26, 1
        %s471 = scalar_select %p470, %s26, 1
        %s472 = smul.addr %s471, 2
        %s473 = smul.addr %s472, 8
        %s474 = scalar_lea.vmem %s7, %s473
        %p475 = scmp.eq.s32.totalorder %s26, 0
        // Predicated region
        $region69: #{decoder_forward.1} parent=59 // pred_check
          %p476 = pneg %p475
        $region70: #{decoder_forward.1} parent=59 // pred_check_branch
          %478 = sbr.rel (%p476) target = $region72
        $region71: #{decoder_forward.1} parent=59 // pred_region
          %v479 = vld [vmem:[%s0] sm:$0xff]
          %v480 = vld [vmem:[%s0 + $0x8] sm:$0xff]
          %vm481 = vcmask 261120
          %482 = vst.msk [vmem:[#allocation2] sm:$0xff] %vm481, %v479
          %483 = vst.msk [vmem:[#allocation2 + $0x8] sm:$0xff] %vm481, %v480
        $region72: #{decoder_forward.1} parent=59 // pred_fallthru
          _
        %v484 = vld [vmem:[#allocation2] sm:$0xff]
        %v485 = vld [vmem:[#allocation2 + $0x8] sm:$0xff]
        %v486 = vld [vmem:[%s1] sm:$0xff]
        %v487 = vld [vmem:[%s1 + $0x8] sm:$0xff]
        %v488 = vld [vmem:[%s474] sm:$0xff]
        %v489 = vld [vmem:[%s474 + $0x8] sm:$0x1]
        %v490 = vlaneseq
        %v491 = vshrl.u32 %v490, 7
        %v492 = vlaneseq
        %v493 = vand.u32 %v492, 127
        %vm494 = vcmp.le.s32.totalorder %v493, %v491
        %v495 = vld [vmem:[%s456] sm:$0xff]
        %v496 = vld [vmem:[%s456 + $0x8] sm:$0xff]
        %v497 = vld [vmem:[%s456 + $0x10] sm:$0xff]
        %v498 = vld [vmem:[%s456 + $0x18] sm:$0xff]
        %s499 = scalar_lea.vmem %s456, 32
        %v500 = vld [vmem:[%s499] sm:$0xff]
        %v501 = vld [vmem:[%s499 + $0x8] sm:$0xff]
        %v502 = vld [vmem:[%s499 + $0x10] sm:$0xff]
        %v503 = vld [vmem:[%s499 + $0x18] sm:$0xff]
        %s504 = scalar_lea.vmem %s456, 64
        %v505 = vld [vmem:[%s504] sm:$0xff]
        %v506 = vld [vmem:[%s504 + $0x8] sm:$0xff]
        %v507 = vld [vmem:[%s504 + $0x10] sm:$0xff]
        %v508 = vld [vmem:[%s504 + $0x18] sm:$0xff]
        %s509 = scalar_lea.vmem %s456, 96
        %v510 = vld [vmem:[%s509] sm:$0xff]
        %v511 = vld [vmem:[%s509 + $0x8] sm:$0xff]
        %v512 = vld [vmem:[%s509 + $0x10] sm:$0xff]
        %v513 = vld [vmem:[%s509 + $0x18] sm:$0xff]
        %vm514 = vcmask 261120
        %v516 = vsel %vm514, %v484, 0
        %v519 = vsel %vm514, %v485, 0
        %521 = vmatprep.subr.mxu0 0.0
        %522 = vmatpush1.msra.mxu0 %v495
        %523 = vmatprep.subr.mxu0 0.0
        %524 = vmatpush1.msra.mxu0 %v496
        %525 = vmatprep.subr.mxu0 0.0
        %526 = vmatpush1.msra.mxu0 %v497
        %527 = vmatprep.subr.mxu0 0.0
        %528 = vmatpush1.msra.mxu0 %v498
        %529 = vmatprep.subr.mxu0 0.0
        %530 = vmatpush1.msra.mxu0 0.0
        %531 = vmatprep.subr.mxu0 0.0
        %532 = vmatpush1.msra.mxu0 0.0
        %533 = vmatprep.subr.mxu0 0.0
        %534 = vmatpush1.msra.mxu0 0.0
        %535 = vmatprep.subr.mxu0 0.0
        %536 = vmatpush1.msra.mxu0 0.0
        %537 = vmatprep.subr.mxu0 0.0
        %538 = vmatpush1.msra.mxu0 0.0
        %539 = vmatprep.subr.mxu0 0.0
        %540 = vmatpush1.msra.mxu0 0.0
        %541 = vmatprep.subr.mxu0 0.0
        %542 = vmatpush1.msra.mxu0 0.0
        %543 = vmatprep.subr.mxu0 0.0
        %544 = vmatpush1.msra.mxu0 0.0
        %545 = vmatprep.subr.mxu0 0.0
        %546 = vmatpush1.msra.mxu0 0.0
        %547 = vmatprep.subr.mxu0 0.0
        %548 = vmatpush1.msra.mxu0 0.0
        %549 = vmatprep.subr.mxu0 0.0
        %550 = vmatpush1.msra.mxu0 0.0
        %551 = vmatprep.subr.mxu0 0.0
        %552 = vmatpush1.msra.mxu0 0.0
        %553 = vmatprep.subr.mxu0 0.0
        %554 = vmatpush1.msra.mxu0 0.0
        %555 = vmatprep.subr.mxu0 0.0
        %556 = vmatpush1.msra.mxu0 0.0
        %557 = vmatprep.subr.mxu0 0.0
        %558 = vmatpush1.msra.mxu0 0.0
        %559 = vmatprep.subr.mxu0 0.0
        %560 = vmatpush1.msra.mxu0 0.0
        %561 = vmatprep.subr.mxu0 0.0
        %562 = vmatpush1.msra.mxu0 0.0
        %563 = vmatprep.subr.mxu0 0.0
        %564 = vmatpush1.msra.mxu0 0.0
        %565 = vmatprep.subr.mxu0 0.0
        %566 = vmatpush1.msra.mxu0 0.0
        %567 = vmatprep.subr.mxu0 0.0
        %568 = vmatpush1.msra.mxu0 0.0
        %569 = vmatprep.subr.mxu0 0.0
        %570 = vmatpush1.msra.mxu0 0.0
        %571 = vmatprep.subr.mxu0 0.0
        %572 = vmatpush1.msra.mxu0 0.0
        %573 = vmatprep.subr.mxu0 0.0
        %574 = vmatpush1.msra.mxu0 0.0
        %575 = vmatprep.subr.mxu0 0.0
        %576 = vmatpush1.msra.mxu0 0.0
        %577 = vmatprep.subr.mxu0 0.0
        %578 = vmatpush1.msra.mxu0 0.0
        %579 = vmatprep.subr.mxu0 0.0
        %580 = vmatpush1.msra.mxu0 0.0
        %581 = vmatprep.subr.mxu0 0.0
        %582 = vmatpush1.msra.mxu0 0.0
        %583 = vmatprep.subr.mxu0 0.0
        %584 = vmatpush1.msra.mxu0 0.0
        %585 = vmatprep.mubr.f32.mxu0 0.0
        %586 = vmatmul.mubr.f32.gmra.mrb[0].mxu0 %v516
        %v587 = vpop.f32.mrb[0].mxu0
        %v588 = vadd.f32 0.0, %v587
        %v589 = vpop.f32.mrb[0].mxu0
        %590 = vmatprep.mubr.f32.mxu0 0.0
        %591 = vmatmul.mubr.f32.gmra.mrb[0].mxu0 %v519
        %v592 = vpop.f32.mrb[0].mxu0
        %v593 = vadd.f32 0.0, %v592
        %v594 = vpop.f32.mrb[0].mxu0
        %595 = vdwg.mxu0
        %596 = vmatprep.subr.mxu0 0.0
        %597 = vmatpush1.msra.mxu0 %v500
        %598 = vmatprep.subr.mxu0 0.0
        %599 = vmatpush1.msra.mxu0 %v501
        %600 = vmatprep.subr.mxu0 0.0
        %601 = vmatpush1.msra.mxu0 %v502
        %602 = vmatprep.subr.mxu0 0.0
        %603 = vmatpush1.msra.mxu0 %v503
        %604 = vmatprep.subr.mxu0 0.0
        %605 = vmatpush1.msra.mxu0 0.0
        %606 = vmatprep.subr.mxu0 0.0
        %607 = vmatpush1.msra.mxu0 0.0
        %608 = vmatprep.subr.mxu0 0.0
        %609 = vmatpush1.msra.mxu0 0.0
        %610 = vmatprep.subr.mxu0 0.0
        %611 = vmatpush1.msra.mxu0 0.0
        %612 = vmatprep.subr.mxu0 0.0
        %613 = vmatpush1.msra.mxu0 0.0
        %614 = vmatprep.subr.mxu0 0.0
        %615 = vmatpush1.msra.mxu0 0.0
        %616 = vmatprep.subr.mxu0 0.0
        %617 = vmatpush1.msra.mxu0 0.0
        %618 = vmatprep.subr.mxu0 0.0
        %619 = vmatpush1.msra.mxu0 0.0
        %620 = vmatprep.subr.mxu0 0.0
        %621 = vmatpush1.msra.mxu0 0.0
        %622 = vmatprep.subr.mxu0 0.0
        %623 = vmatpush1.msra.mxu0 0.0
        %624 = vmatprep.subr.mxu0 0.0
        %625 = vmatpush1.msra.mxu0 0.0
        %626 = vmatprep.subr.mxu0 0.0
        %627 = vmatpush1.msra.mxu0 0.0
        %628 = vmatprep.subr.mxu0 0.0
        %629 = vmatpush1.msra.mxu0 0.0
        %630 = vmatprep.subr.mxu0 0.0
        %631 = vmatpush1.msra.mxu0 0.0
        %632 = vmatprep.subr.mxu0 0.0
        %633 = vmatpush1.msra.mxu0 0.0
        %634 = vmatprep.subr.mxu0 0.0
        %635 = vmatpush1.msra.mxu0 0.0
        %636 = vmatprep.subr.mxu0 0.0
        %637 = vmatpush1.msra.mxu0 0.0
        %638 = vmatprep.subr.mxu0 0.0
        %639 = vmatpush1.msra.mxu0 0.0
        %640 = vmatprep.subr.mxu0 0.0
        %641 = vmatpush1.msra.mxu0 0.0
        %642 = vmatprep.subr.mxu0 0.0
        %643 = vmatpush1.msra.mxu0 0.0
        %644 = vmatprep.subr.mxu0 0.0
        %645 = vmatpush1.msra.mxu0 0.0
        %646 = vmatprep.subr.mxu0 0.0
        %647 = vmatpush1.msra.mxu0 0.0
        %648 = vmatprep.subr.mxu0 0.0
        %649 = vmatpush1.msra.mxu0 0.0
        %650 = vmatprep.subr.mxu0 0.0
        %651 = vmatpush1.msra.mxu0 0.0
        %652 = vmatprep.subr.mxu0 0.0
        %653 = vmatpush1.msra.mxu0 0.0
        %654 = vmatprep.subr.mxu0 0.0
        %655 = vmatpush1.msra.mxu0 0.0
        %656 = vmatprep.subr.mxu0 0.0
        %657 = vmatpush1.msra.mxu0 0.0
        %658 = vmatprep.subr.mxu0 0.0
        %659 = vmatpush1.msra.mxu0 0.0
        %660 = vmatprep.mubr.f32.mxu0 0.0
        %661 = vmatmul.mubr.f32.gmra.mrb[0].mxu0 %v516
        %v662 = vpop.f32.mrb[0].mxu0
        %v663 = vadd.f32 0.0, %v662
        %v664 = vpop.f32.mrb[0].mxu0
        %665 = vmatprep.mubr.f32.mxu0 0.0
        %666 = vmatmul.mubr.f32.gmra.mrb[0].mxu0 %v519
        %v667 = vpop.f32.mrb[0].mxu0
        %v668 = vadd.f32 0.0, %v667
        %v669 = vpop.f32.mrb[0].mxu0
        %670 = vdwg.mxu0
        %671 = vmatprep.subr.mxu0 0.0
        %672 = vmatpush1.msra.mxu0 %v505
        %673 = vmatprep.subr.mxu0 0.0
        %674 = vmatpush1.msra.mxu0 %v506
        %675 = vmatprep.subr.mxu0 0.0
        %676 = vmatpush1.msra.mxu0 %v507
        %677 = vmatprep.subr.mxu0 0.0
        %678 = vmatpush1.msra.mxu0 %v508
        %679 = vmatprep.subr.mxu0 0.0
        %680 = vmatpush1.msra.mxu0 0.0
        %681 = vmatprep.subr.mxu0 0.0
        %682 = vmatpush1.msra.mxu0 0.0
        %683 = vmatprep.subr.mxu0 0.0
        %684 = vmatpush1.msra.mxu0 0.0
        %685 = vmatprep.subr.mxu0 0.0
        %686 = vmatpush1.msra.mxu0 0.0
        %687 = vmatprep.subr.mxu0 0.0
        %688 = vmatpush1.msra.mxu0 0.0
        %689 = vmatprep.subr.mxu0 0.0
        %690 = vmatpush1.msra.mxu0 0.0
        %691 = vmatprep.subr.mxu0 0.0
        %692 = vmatpush1.msra.mxu0 0.0
        %693 = vmatprep.subr.mxu0 0.0
        %694 = vmatpush1.msra.mxu0 0.0
        %695 = vmatprep.subr.mxu0 0.0
        %696 = vmatpush1.msra.mxu0 0.0
        %697 = vmatprep.subr.mxu0 0.0
        %698 = vmatpush1.msra.mxu0 0.0
        %699 = vmatprep.subr.mxu0 0.0
        %700 = vmatpush1.msra.mxu0 0.0
        %701 = vmatprep.subr.mxu0 0.0
        %702 = vmatpush1.msra.mxu0 0.0
        %703 = vmatprep.subr.mxu0 0.0
        %704 = vmatpush1.msra.mxu0 0.0
        %705 = vmatprep.subr.mxu0 0.0
        %706 = vmatpush1.msra.mxu0 0.0
        %707 = vmatprep.subr.mxu0 0.0
        %708 = vmatpush1.msra.mxu0 0.0
        %709 = vmatprep.subr.mxu0 0.0
        %710 = vmatpush1.msra.mxu0 0.0
        %711 = vmatprep.subr.mxu0 0.0
        %712 = vmatpush1.msra.mxu0 0.0
        %713 = vmatprep.subr.mxu0 0.0
        %714 = vmatpush1.msra.mxu0 0.0
        %715 = vmatprep.subr.mxu0 0.0
        %716 = vmatpush1.msra.mxu0 0.0
        %717 = vmatprep.subr.mxu0 0.0
        %718 = vmatpush1.msra.mxu0 0.0
        %719 = vmatprep.subr.mxu0 0.0
        %720 = vmatpush1.msra.mxu0 0.0
        %721 = vmatprep.subr.mxu0 0.0
        %722 = vmatpush1.msra.mxu0 0.0
        %723 = vmatprep.subr.mxu0 0.0
        %724 = vmatpush1.msra.mxu0 0.0
        %725 = vmatprep.subr.mxu0 0.0
        %726 = vmatpush1.msra.mxu0 0.0
        %727 = vmatprep.subr.mxu0 0.0
        %728 = vmatpush1.msra.mxu0 0.0
        %729 = vmatprep.subr.mxu0 0.0
        %730 = vmatpush1.msra.mxu0 0.0
        %731 = vmatprep.subr.mxu0 0.0
        %732 = vmatpush1.msra.mxu0 0.0
        %733 = vmatprep.subr.mxu0 0.0
        %734 = vmatpush1.msra.mxu0 0.0
        %735 = vmatprep.mubr.f32.mxu0 0.0
        %736 = vmatmul.mubr.f32.gmra.mrb[0].mxu0 %v516
        %v737 = vpop.f32.mrb[0].mxu0
        %v738 = vadd.f32 0.0, %v737
        %v739 = vpop.f32.mrb[0].mxu0
        %740 = vmatprep.mubr.f32.mxu0 0.0
        %741 = vmatmul.mubr.f32.gmra.mrb[0].mxu0 %v519
        %v742 = vpop.f32.mrb[0].mxu0
        %v743 = vadd.f32 0.0, %v742
        %v744 = vpop.f32.mrb[0].mxu0
        %745 = vdwg.mxu0
        %vm746 = vcmask 64512
        %v748 = vsel %vm746, %v588, 0
        %v751 = vsel %vm746, %v663, 0
        %753 = vmatprep.subr.mxu0 0.0
        %754 = vmatpush1.xpose.msra.mxu0 %v751
        %755 = vmatprep.subr.mxu0 0.0
        %756 = vmatpush1.xpose.msra.mxu0 0.0
        %757 = vmatprep.subr.mxu0 0.0
        %758 = vmatpush1.xpose.msra.mxu0 0.0
        %759 = vmatprep.subr.mxu0 0.0
        %760 = vmatpush1.xpose.msra.mxu0 0.0
        %761 = vmatprep.subr.mxu0 0.0
        %762 = vmatpush1.xpose.msra.mxu0 0.0
        %763 = vmatprep.subr.mxu0 0.0
        %764 = vmatpush1.xpose.msra.mxu0 0.0
        %765 = vmatprep.subr.mxu0 0.0
        %766 = vmatpush1.xpose.msra.mxu0 0.0
        %767 = vmatprep.subr.mxu0 0.0
        %768 = vmatpush1.xpose.msra.mxu0 0.0
        %769 = vmatprep.subr.mxu0 0.0
        %770 = vmatpush1.xpose.msra.mxu0 0.0
        %771 = vmatprep.subr.mxu0 0.0
        %772 = vmatpush1.xpose.msra.mxu0 0.0
        %773 = vmatprep.subr.mxu0 0.0
        %774 = vmatpush1.xpose.msra.mxu0 0.0
        %775 = vmatprep.subr.mxu0 0.0
        %776 = vmatpush1.xpose.msra.mxu0 0.0
        %777 = vmatprep.subr.mxu0 0.0
        %778 = vmatpush1.xpose.msra.mxu0 0.0
        %779 = vmatprep.subr.mxu0 0.0
        %780 = vmatpush1.xpose.msra.mxu0 0.0
        %781 = vmatprep.subr.mxu0 0.0
        %782 = vmatpush1.xpose.msra.mxu0 0.0
        %783 = vmatprep.subr.mxu0 0.0
        %784 = vmatpush1.xpose.msra.mxu0 0.0
        %785 = vmatprep.subr.mxu0 0.0
        %786 = vmatpush1.xpose.msra.mxu0 0.0
        %787 = vmatprep.subr.mxu0 0.0
        %788 = vmatpush1.xpose.msra.mxu0 0.0
        %789 = vmatprep.subr.mxu0 0.0
        %790 = vmatpush1.xpose.msra.mxu0 0.0
        %791 = vmatprep.subr.mxu0 0.0
        %792 = vmatpush1.xpose.msra.mxu0 0.0
        %793 = vmatprep.subr.mxu0 0.0
        %794 = vmatpush1.xpose.msra.mxu0 0.0
        %795 = vmatprep.subr.mxu0 0.0
        %796 = vmatpush1.xpose.msra.mxu0 0.0
        %797 = vmatprep.subr.mxu0 0.0
        %798 = vmatpush1.xpose.msra.mxu0 0.0
        %799 = vmatprep.subr.mxu0 0.0
        %800 = vmatpush1.xpose.msra.mxu0 0.0
        %801 = vmatprep.subr.mxu0 0.0
        %802 = vmatpush1.xpose.msra.mxu0 0.0
        %803 = vmatprep.subr.mxu0 0.0
        %804 = vmatpush1.xpose.msra.mxu0 0.0
        %805 = vmatprep.subr.mxu0 0.0
        %806 = vmatpush1.xpose.msra.mxu0 0.0
        %807 = vmatprep.subr.mxu0 0.0
        %808 = vmatpush1.xpose.msra.mxu0 0.0
        %809 = vmatprep.subr.mxu0 0.0
        %810 = vmatpush1.xpose.msra.mxu0 0.0
        %811 = vmatprep.subr.mxu0 0.0
        %812 = vmatpush1.xpose.msra.mxu0 0.0
        %813 = vmatprep.subr.mxu0 0.0
        %814 = vmatpush1.xpose.msra.mxu0 0.0
        %815 = vmatprep.subr.mxu0 0.0
        %816 = vmatpush1.xpose.msra.mxu0 0.0
        %817 = vmatprep.mubr.f32.mxu0 0.0
        %818 = vmatmul.mubr.f32.gmra.mrb[0].mxu0 %v748
        %v819 = vpop.f32.mrb[0].mxu0
        %v820 = vadd.f32 0.0, %v819
        %v821 = vpop.f32.mrb[0].mxu0
        %822 = vdwg.mxu0
        %v823 = vsel %vm494, %v820, -1e+20
        %v824 = vsel %vm746, %v823, -inf
        %825 = vmax.xlane.f32.xlu0 %v824
        %v826 = vpop.xlane.xlu0 %825
        %v827 = vsub.f32 %v823, %v826
        %v828 = vmul.f32 %v827, 1.442695
        %v829 = vpow.pop %v828
        %v830 = vsel %vm746, %v829, 0.0
        %831 = vadd.xlane.f32.xlu0 %v830
        %v832 = vpop.xlane.xlu0 %831
        %v833 = vrcp.pop %v832
        %v834 = vmul.f32 %v829, %v833
        %v836 = vsel %vm746, %v834, 0
        %838 = vmatprep.subr.mxu0 0.0
        %839 = vmatpush1.msra.mxu0 %v738
        %840 = vmatprep.subr.mxu0 0.0
        %841 = vmatpush1.msra.mxu0 0.0
        %842 = vmatprep.subr.mxu0 0.0
        %843 = vmatpush1.msra.mxu0 0.0
        %844 = vmatprep.subr.mxu0 0.0
        %845 = vmatpush1.msra.mxu0 0.0
        %846 = vmatprep.subr.mxu0 0.0
        %847 = vmatpush1.msra.mxu0 0.0
        %848 = vmatprep.subr.mxu0 0.0
        %849 = vmatpush1.msra.mxu0 0.0
        %850 = vmatprep.subr.mxu0 0.0
        %851 = vmatpush1.msra.mxu0 0.0
        %852 = vmatprep.subr.mxu0 0.0
        %853 = vmatpush1.msra.mxu0 0.0
        %854 = vmatprep.subr.mxu0 0.0
        %855 = vmatpush1.msra.mxu0 0.0
        %856 = vmatprep.subr.mxu0 0.0
        %857 = vmatpush1.msra.mxu0 0.0
        %858 = vmatprep.subr.mxu0 0.0
        %859 = vmatpush1.msra.mxu0 0.0
        %860 = vmatprep.subr.mxu0 0.0
        %861 = vmatpush1.msra.mxu0 0.0
        %862 = vmatprep.subr.mxu0 0.0
        %863 = vmatpush1.msra.mxu0 0.0
        %864 = vmatprep.subr.mxu0 0.0
        %865 = vmatpush1.msra.mxu0 0.0
        %866 = vmatprep.subr.mxu0 0.0
        %867 = vmatpush1.msra.mxu0 0.0
        %868 = vmatprep.subr.mxu0 0.0
        %869 = vmatpush1.msra.mxu0 0.0
        %870 = vmatprep.subr.mxu0 0.0
        %871 = vmatpush1.msra.mxu0 0.0
        %872 = vmatprep.subr.mxu0 0.0
        %873 = vmatpush1.msra.mxu0 0.0
        %874 = vmatprep.subr.mxu0 0.0
        %875 = vmatpush1.msra.mxu0 0.0
        %876 = vmatprep.subr.mxu0 0.0
        %877 = vmatpush1.msra.mxu0 0.0
        %878 = vmatprep.subr.mxu0 0.0
        %879 = vmatpush1.msra.mxu0 0.0
        %880 = vmatprep.subr.mxu0 0.0
        %881 = vmatpush1.msra.mxu0 0.0
        %882 = vmatprep.subr.mxu0 0.0
        %883 = vmatpush1.msra.mxu0 0.0
        %884 = vmatprep.subr.mxu0 0.0
        %885 = vmatpush1.msra.mxu0 0.0
        %886 = vmatprep.subr.mxu0 0.0
        %887 = vmatpush1.msra.mxu0 0.0
        %888 = vmatprep.subr.mxu0 0.0
        %889 = vmatpush1.msra.mxu0 0.0
        %890 = vmatprep.subr.mxu0 0.0
        %891 = vmatpush1.msra.mxu0 0.0
        %892 = vmatprep.subr.mxu0 0.0
        %893 = vmatpush1.msra.mxu0 0.0
        %894 = vmatprep.subr.mxu0 0.0
        %895 = vmatpush1.msra.mxu0 0.0
        %896 = vmatprep.subr.mxu0 0.0
        %897 = vmatpush1.msra.mxu0 0.0
        %898 = vmatprep.subr.mxu0 0.0
        %899 = vmatpush1.msra.mxu0 0.0
        %900 = vmatprep.subr.mxu0 0.0
        %901 = vmatpush1.msra.mxu0 0.0
        %902 = vmatprep.mubr.f32.mxu0 0.0
        %903 = vmatmul.mubr.f32.gmra.mrb[0].mxu0 %v836
        %v904 = vpop.f32.mrb[0].mxu0
        %v905 = vadd.f32 0.0, %v904
        %v906 = vpop.f32.mrb[0].mxu0
        %907 = vdwg.mxu0
        %908 = vrot.lane.b32.xlu0 %v588, 120
        %v909 = vpop.permute.xlu0 %908
        %910 = vrot.lane.b32.xlu0 %v663, 120
        %v911 = vpop.permute.xlu0 %910
        %v912 = vsel %vm746, %v909, 0
        %v914 = vsel %vm746, %v911, 0
        %916 = vmatprep.subr.mxu0 0.0
        %917 = vmatpush1.xpose.msra.mxu0 %v914
        %918 = vmatprep.subr.mxu0 0.0
        %919 = vmatpush1.xpose.msra.mxu0 0.0
        %920 = vmatprep.subr.mxu0 0.0
        %921 = vmatpush1.xpose.msra.mxu0 0.0
        %922 = vmatprep.subr.mxu0 0.0
        %923 = vmatpush1.xpose.msra.mxu0 0.0
        %924 = vmatprep.subr.mxu0 0.0
        %925 = vmatpush1.xpose.msra.mxu0 0.0
        %926 = vmatprep.subr.mxu0 0.0
        %927 = vmatpush1.xpose.msra.mxu0 0.0
        %928 = vmatprep.subr.mxu0 0.0
        %929 = vmatpush1.xpose.msra.mxu0 0.0
        %930 = vmatprep.subr.mxu0 0.0
        %931 = vmatpush1.xpose.msra.mxu0 0.0
        %932 = vmatprep.subr.mxu0 0.0
        %933 = vmatpush1.xpose.msra.mxu0 0.0
        %934 = vmatprep.subr.mxu0 0.0
        %935 = vmatpush1.xpose.msra.mxu0 0.0
        %936 = vmatprep.subr.mxu0 0.0
        %937 = vmatpush1.xpose.msra.mxu0 0.0
        %938 = vmatprep.subr.mxu0 0.0
        %939 = vmatpush1.xpose.msra.mxu0 0.0
        %940 = vmatprep.subr.mxu0 0.0
        %941 = vmatpush1.xpose.msra.mxu0 0.0
        %942 = vmatprep.subr.mxu0 0.0
        %943 = vmatpush1.xpose.msra.mxu0 0.0
        %944 = vmatprep.subr.mxu0 0.0
        %945 = vmatpush1.xpose.msra.mxu0 0.0
        %946 = vmatprep.subr.mxu0 0.0
        %947 = vmatpush1.xpose.msra.mxu0 0.0
        %948 = vmatprep.subr.mxu0 0.0
        %949 = vmatpush1.xpose.msra.mxu0 0.0
        %950 = vmatprep.subr.mxu0 0.0
        %951 = vmatpush1.xpose.msra.mxu0 0.0
        %952 = vmatprep.subr.mxu0 0.0
        %953 = vmatpush1.xpose.msra.mxu0 0.0
        %954 = vmatprep.subr.mxu0 0.0
        %955 = vmatpush1.xpose.msra.mxu0 0.0
        %956 = vmatprep.subr.mxu0 0.0
        %957 = vmatpush1.xpose.msra.mxu0 0.0
        %958 = vmatprep.subr.mxu0 0.0
        %959 = vmatpush1.xpose.msra.mxu0 0.0
        %960 = vmatprep.subr.mxu0 0.0
        %961 = vmatpush1.xpose.msra.mxu0 0.0
        %962 = vmatprep.subr.mxu0 0.0
        %963 = vmatpush1.xpose.msra.mxu0 0.0
        %964 = vmatprep.subr.mxu0 0.0
        %965 = vmatpush1.xpose.msra.mxu0 0.0
        %966 = vmatprep.subr.mxu0 0.0
        %967 = vmatpush1.xpose.msra.mxu0 0.0
        %968 = vmatprep.subr.mxu0 0.0
        %969 = vmatpush1.xpose.msra.mxu0 0.0
        %970 = vmatprep.subr.mxu0 0.0
        %971 = vmatpush1.xpose.msra.mxu0 0.0
        %972 = vmatprep.subr.mxu0 0.0
        %973 = vmatpush1.xpose.msra.mxu0 0.0
        %974 = vmatprep.subr.mxu0 0.0
        %975 = vmatpush1.xpose.msra.mxu0 0.0
        %976 = vmatprep.subr.mxu0 0.0
        %977 = vmatpush1.xpose.msra.mxu0 0.0
        %978 = vmatprep.subr.mxu0 0.0
        %979 = vmatpush1.xpose.msra.mxu0 0.0
        %980 = vmatprep.mubr.f32.mxu0 0.0
        %981 = vmatmul.mubr.f32.gmra.mrb[0].mxu0 %v912
        %v982 = vpop.f32.mrb[0].mxu0
        %v983 = vadd.f32 0.0, %v982
        %v984 = vpop.f32.mrb[0].mxu0
        %985 = vdwg.mxu0
        %v986 = vsel %vm494, %v983, -1e+20
        %v987 = vsel %vm746, %v986, -inf
        %988 = vmax.xlane.f32.xlu0 %v987
        %v989 = vpop.xlane.xlu0 %988
        %v990 = vsub.f32 %v986, %v989
        %v991 = vmul.f32 %v990, 1.442695
        %v992 = vpow.pop %v991
        %v993 = vsel %vm746, %v992, 0.0
        %994 = vadd.xlane.f32.xlu0 %v993
        %v995 = vpop.xlane.xlu0 %994
        %v996 = vrcp.pop %v995
        %v997 = vmul.f32 %v992, %v996
        %999 = vrot.lane.b32.xlu0 %v738, 120
        %v1000 = vpop.permute.xlu0 %999
        %v1003 = vsel %vm746, %v997, 0
        %1005 = vmatprep.subr.mxu0 0.0
        %1006 = vmatpush1.msra.mxu0 %v1000
        %1007 = vmatprep.subr.mxu0 0.0
        %1008 = vmatpush1.msra.mxu0 0.0
        %1009 = vmatprep.subr.mxu0 0.0
        %1010 = vmatpush1.msra.mxu0 0.0
        %1011 = vmatprep.subr.mxu0 0.0
        %1012 = vmatpush1.msra.mxu0 0.0
        %1013 = vmatprep.subr.mxu0 0.0
        %1014 = vmatpush1.msra.mxu0 0.0
        %1015 = vmatprep.subr.mxu0 0.0
        %1016 = vmatpush1.msra.mxu0 0.0
        %1017 = vmatprep.subr.mxu0 0.0
        %1018 = vmatpush1.msra.mxu0 0.0
        %1019 = vmatprep.subr.mxu0 0.0
        %1020 = vmatpush1.msra.mxu0 0.0
        %1021 = vmatprep.subr.mxu0 0.0
        %1022 = vmatpush1.msra.mxu0 0.0
        %1023 = vmatprep.subr.mxu0 0.0
        %1024 = vmatpush1.msra.mxu0 0.0
        %1025 = vmatprep.subr.mxu0 0.0
        %1026 = vmatpush1.msra.mxu0 0.0
        %1027 = vmatprep.subr.mxu0 0.0
        %1028 = vmatpush1.msra.mxu0 0.0
        %1029 = vmatprep.subr.mxu0 0.0
        %1030 = vmatpush1.msra.mxu0 0.0
        %1031 = vmatprep.subr.mxu0 0.0
        %1032 = vmatpush1.msra.mxu0 0.0
        %1033 = vmatprep.subr.mxu0 0.0
        %1034 = vmatpush1.msra.mxu0 0.0
        %1035 = vmatprep.subr.mxu0 0.0
        %1036 = vmatpush1.msra.mxu0 0.0
        %1037 = vmatprep.subr.mxu0 0.0
        %1038 = vmatpush1.msra.mxu0 0.0
        %1039 = vmatprep.subr.mxu0 0.0
        %1040 = vmatpush1.msra.mxu0 0.0
        %1041 = vmatprep.subr.mxu0 0.0
        %1042 = vmatpush1.msra.mxu0 0.0
        %1043 = vmatprep.subr.mxu0 0.0
        %1044 = vmatpush1.msra.mxu0 0.0
        %1045 = vmatprep.subr.mxu0 0.0
        %1046 = vmatpush1.msra.mxu0 0.0
        %1047 = vmatprep.subr.mxu0 0.0
        %1048 = vmatpush1.msra.mxu0 0.0
        %1049 = vmatprep.subr.mxu0 0.0
        %1050 = vmatpush1.msra.mxu0 0.0
        %1051 = vmatprep.subr.mxu0 0.0
        %1052 = vmatpush1.msra.mxu0 0.0
        %1053 = vmatprep.subr.mxu0 0.0
        %1054 = vmatpush1.msra.mxu0 0.0
        %1055 = vmatprep.subr.mxu0 0.0
        %1056 = vmatpush1.msra.mxu0 0.0
        %1057 = vmatprep.subr.mxu0 0.0
        %1058 = vmatpush1.msra.mxu0 0.0
        %1059 = vmatprep.subr.mxu0 0.0
        %1060 = vmatpush1.msra.mxu0 0.0
        %1061 = vmatprep.subr.mxu0 0.0
        %1062 = vmatpush1.msra.mxu0 0.0
        %1063 = vmatprep.subr.mxu0 0.0
        %1064 = vmatpush1.msra.mxu0 0.0
        %1065 = vmatprep.subr.mxu0 0.0
        %1066 = vmatpush1.msra.mxu0 0.0
        %1067 = vmatprep.subr.mxu0 0.0
        %1068 = vmatpush1.msra.mxu0 0.0
        %1069 = vmatprep.mubr.f32.mxu0 0.0
        %1070 = vmatmul.mubr.f32.gmra.mrb[0].mxu0 %v1003
        %v1071 = vpop.f32.mrb[0].mxu0
        %v1072 = vadd.f32 0.0, %v1071
        %v1073 = vpop.f32.mrb[0].mxu0
        %1074 = vdwg.mxu0
        %1075 = vrot.lane.b32.xlu0 %v588, 112
        %v1076 = vpop.permute.xlu0 %1075
        %1077 = vrot.lane.b32.xlu0 %v663, 112
        %v1078 = vpop.permute.xlu0 %1077
        %v1079 = vsel %vm746, %v1076, 0
        %v1081 = vsel %vm746, %v1078, 0
        %1083 = vmatprep.subr.mxu0 0.0
        %1084 = vmatpush1.xpose.msra.mxu0 %v1081
        %1085 = vmatprep.subr.mxu0 0.0
        %1086 = vmatpush1.xpose.msra.mxu0 0.0
        %1087 = vmatprep.subr.mxu0 0.0
        %1088 = vmatpush1.xpose.msra.mxu0 0.0
        %1089 = vmatprep.subr.mxu0 0.0
        %1090 = vmatpush1.xpose.msra.mxu0 0.0
        %1091 = vmatprep.subr.mxu0 0.0
        %1092 = vmatpush1.xpose.msra.mxu0 0.0
        %1093 = vmatprep.subr.mxu0 0.0
        %1094 = vmatpush1.xpose.msra.mxu0 0.0
        %1095 = vmatprep.subr.mxu0 0.0
        %1096 = vmatpush1.xpose.msra.mxu0 0.0
        %1097 = vmatprep.subr.mxu0 0.0
        %1098 = vmatpush1.xpose.msra.mxu0 0.0
        %1099 = vmatprep.subr.mxu0 0.0
        %1100 = vmatpush1.xpose.msra.mxu0 0.0
        %1101 = vmatprep.subr.mxu0 0.0
        %1102 = vmatpush1.xpose.msra.mxu0 0.0
        %1103 = vmatprep.subr.mxu0 0.0
        %1104 = vmatpush1.xpose.msra.mxu0 0.0
        %1105 = vmatprep.subr.mxu0 0.0
        %1106 = vmatpush1.xpose.msra.mxu0 0.0
        %1107 = vmatprep.subr.mxu0 0.0
        %1108 = vmatpush1.xpose.msra.mxu0 0.0
        %1109 = vmatprep.subr.mxu0 0.0
        %1110 = vmatpush1.xpose.msra.mxu0 0.0
        %1111 = vmatprep.subr.mxu0 0.0
        %1112 = vmatpush1.xpose.msra.mxu0 0.0
        %1113 = vmatprep.subr.mxu0 0.0
        %1114 = vmatpush1.xpose.msra.mxu0 0.0
        %1115 = vmatprep.subr.mxu0 0.0
        %1116 = vmatpush1.xpose.msra.mxu0 0.0
        %1117 = vmatprep.subr.mxu0 0.0
        %1118 = vmatpush1.xpose.msra.mxu0 0.0
        %1119 = vmatprep.subr.mxu0 0.0
        %1120 = vmatpush1.xpose.msra.mxu0 0.0
        %1121 = vmatprep.subr.mxu0 0.0
        %1122 = vmatpush1.xpose.msra.mxu0 0.0
        %1123 = vmatprep.subr.mxu0 0.0
        %1124 = vmatpush1.xpose.msra.mxu0 0.0
        %1125 = vmatprep.subr.mxu0 0.0
        %1126 = vmatpush1.xpose.msra.mxu0 0.0
        %1127 = vmatprep.subr.mxu0 0.0
        %1128 = vmatpush1.xpose.msra.mxu0 0.0
        %1129 = vmatprep.subr.mxu0 0.0
        %1130 = vmatpush1.xpose.msra.mxu0 0.0
        %1131 = vmatprep.subr.mxu0 0.0
        %1132 = vmatpush1.xpose.msra.mxu0 0.0
        %1133 = vmatprep.subr.mxu0 0.0
        %1134 = vmatpush1.xpose.msra.mxu0 0.0
        %1135 = vmatprep.subr.mxu0 0.0
        %1136 = vmatpush1.xpose.msra.mxu0 0.0
        %1137 = vmatprep.subr.mxu0 0.0
        %1138 = vmatpush1.xpose.msra.mxu0 0.0
        %1139 = vmatprep.subr.mxu0 0.0
        %1140 = vmatpush1.xpose.msra.mxu0 0.0
        %1141 = vmatprep.subr.mxu0 0.0
        %1142 = vmatpush1.xpose.msra.mxu0 0.0
        %1143 = vmatprep.subr.mxu0 0.0
        %1144 = vmatpush1.xpose.msra.mxu0 0.0
        %1145 = vmatprep.subr.mxu0 0.0
        %1146 = vmatpush1.xpose.msra.mxu0 0.0
        %1147 = vmatprep.mubr.f32.mxu0 0.0
        %1148 = vmatmul.mubr.f32.gmra.mrb[0].mxu0 %v1079
        %v1149 = vpop.f32.mrb[0].mxu0
        %v1150 = vadd.f32 0.0, %v1149
        %v1151 = vpop.f32.mrb[0].mxu0
        %1152 = vdwg.mxu0
        %v1153 = vsel %vm494, %v1150, -1e+20
        %v1154 = vsel %vm746, %v1153, -inf
        %1155 = vmax.xlane.f32.xlu0 %v1154
        %v1156 = vpop.xlane.xlu0 %1155
        %v1157 = vsub.f32 %v1153, %v1156
        %v1158 = vmul.f32 %v1157, 1.442695
        %v1159 = vpow.pop %v1158
        %v1160 = vsel %vm746, %v1159, 0.0
        %1161 = vadd.xlane.f32.xlu0 %v1160
        %v1162 = vpop.xlane.xlu0 %1161
        %v1163 = vrcp.pop %v1162
        %v1164 = vmul.f32 %v1159, %v1163
        %1165 = vrot.lane.b32.xlu0 %v738, 112
        %v1166 = vpop.permute.xlu0 %1165
        %v1169 = vsel %vm746, %v1164, 0
        %1171 = vmatprep.subr.mxu0 0.0
        %1172 = vmatpush1.msra.mxu0 %v1166
        %1173 = vmatprep.subr.mxu0 0.0
        %1174 = vmatpush1.msra.mxu0 0.0
        %1175 = vmatprep.subr.mxu0 0.0
        %1176 = vmatpush1.msra.mxu0 0.0
        %1177 = vmatprep.subr.mxu0 0.0
        %1178 = vmatpush1.msra.mxu0 0.0
        %1179 = vmatprep.subr.mxu0 0.0
        %1180 = vmatpush1.msra.mxu0 0.0
        %1181 = vmatprep.subr.mxu0 0.0
        %1182 = vmatpush1.msra.mxu0 0.0
        %1183 = vmatprep.subr.mxu0 0.0
        %1184 = vmatpush1.msra.mxu0 0.0
        %1185 = vmatprep.subr.mxu0 0.0
        %1186 = vmatpush1.msra.mxu0 0.0
        %1187 = vmatprep.subr.mxu0 0.0
        %1188 = vmatpush1.msra.mxu0 0.0
        %1189 = vmatprep.subr.mxu0 0.0
        %1190 = vmatpush1.msra.mxu0 0.0
        %1191 = vmatprep.subr.mxu0 0.0
        %1192 = vmatpush1.msra.mxu0 0.0
        %1193 = vmatprep.subr.mxu0 0.0
        %1194 = vmatpush1.msra.mxu0 0.0
        %1195 = vmatprep.subr.mxu0 0.0
        %1196 = vmatpush1.msra.mxu0 0.0
        %1197 = vmatprep.subr.mxu0 0.0
        %1198 = vmatpush1.msra.mxu0 0.0
        %1199 = vmatprep.subr.mxu0 0.0
        %1200 = vmatpush1.msra.mxu0 0.0
        %1201 = vmatprep.subr.mxu0 0.0
        %1202 = vmatpush1.msra.mxu0 0.0
        %1203 = vmatprep.subr.mxu0 0.0
        %1204 = vmatpush1.msra.mxu0 0.0
        %1205 = vmatprep.subr.mxu0 0.0
        %1206 = vmatpush1.msra.mxu0 0.0
        %1207 = vmatprep.subr.mxu0 0.0
        %1208 = vmatpush1.msra.mxu0 0.0
        %1209 = vmatprep.subr.mxu0 0.0
        %1210 = vmatpush1.msra.mxu0 0.0
        %1211 = vmatprep.subr.mxu0 0.0
        %1212 = vmatpush1.msra.mxu0 0.0
        %1213 = vmatprep.subr.mxu0 0.0
        %1214 = vmatpush1.msra.mxu0 0.0
        %1215 = vmatprep.subr.mxu0 0.0
        %1216 = vmatpush1.msra.mxu0 0.0
        %1217 = vmatprep.subr.mxu0 0.0
        %1218 = vmatpush1.msra.mxu0 0.0
        %1219 = vmatprep.subr.mxu0 0.0
        %1220 = vmatpush1.msra.mxu0 0.0
        %1221 = vmatprep.subr.mxu0 0.0
        %1222 = vmatpush1.msra.mxu0 0.0
        %1223 = vmatprep.subr.mxu0 0.0
        %1224 = vmatpush1.msra.mxu0 0.0
        %1225 = vmatprep.subr.mxu0 0.0
        %1226 = vmatpush1.msra.mxu0 0.0
        %1227 = vmatprep.subr.mxu0 0.0
        %1228 = vmatpush1.msra.mxu0 0.0
        %1229 = vmatprep.subr.mxu0 0.0
        %1230 = vmatpush1.msra.mxu0 0.0
        %1231 = vmatprep.subr.mxu0 0.0
        %1232 = vmatpush1.msra.mxu0 0.0
        %1233 = vmatprep.subr.mxu0 0.0
        %1234 = vmatpush1.msra.mxu0 0.0
        %1235 = vmatprep.mubr.f32.mxu0 0.0
        %1236 = vmatmul.mubr.f32.gmra.mrb[0].mxu0 %v1169
        %v1237 = vpop.f32.mrb[0].mxu0
        %v1238 = vadd.f32 0.0, %v1237
        %v1239 = vpop.f32.mrb[0].mxu0
        %1240 = vdwg.mxu0
        %1241 = vrot.lane.b32.xlu0 %v588, 104
        %v1242 = vpop.permute.xlu0 %1241
        %1243 = vrot.lane.b32.xlu0 %v663, 104
        %v1244 = vpop.permute.xlu0 %1243
        %v1245 = vsel %vm746, %v1242, 0
        %v1247 = vsel %vm746, %v1244, 0
        %1249 = vmatprep.subr.mxu0 0.0
        %1250 = vmatpush1.xpose.msra.mxu0 %v1247
        %1251 = vmatprep.subr.mxu0 0.0
        %1252 = vmatpush1.xpose.msra.mxu0 0.0
        %1253 = vmatprep.subr.mxu0 0.0
        %1254 = vmatpush1.xpose.msra.mxu0 0.0
        %1255 = vmatprep.subr.mxu0 0.0
        %1256 = vmatpush1.xpose.msra.mxu0 0.0
        %1257 = vmatprep.subr.mxu0 0.0
        %1258 = vmatpush1.xpose.msra.mxu0 0.0
        %1259 = vmatprep.subr.mxu0 0.0
        %1260 = vmatpush1.xpose.msra.mxu0 0.0
        %1261 = vmatprep.subr.mxu0 0.0
        %1262 = vmatpush1.xpose.msra.mxu0 0.0
        %1263 = vmatprep.subr.mxu0 0.0
        %1264 = vmatpush1.xpose.msra.mxu0 0.0
        %1265 = vmatprep.subr.mxu0 0.0
        %1266 = vmatpush1.xpose.msra.mxu0 0.0
        %1267 = vmatprep.subr.mxu0 0.0
        %1268 = vmatpush1.xpose.msra.mxu0 0.0
        %1269 = vmatprep.subr.mxu0 0.0
        %1270 = vmatpush1.xpose.msra.mxu0 0.0
        %1271 = vmatprep.subr.mxu0 0.0
        %1272 = vmatpush1.xpose.msra.mxu0 0.0
        %1273 = vmatprep.subr.mxu0 0.0
        %1274 = vmatpush1.xpose.msra.mxu0 0.0
        %1275 = vmatprep.subr.mxu0 0.0
        %1276 = vmatpush1.xpose.msra.mxu0 0.0
        %1277 = vmatprep.subr.mxu0 0.0
        %1278 = vmatpush1.xpose.msra.mxu0 0.0
        %1279 = vmatprep.subr.mxu0 0.0
        %1280 = vmatpush1.xpose.msra.mxu0 0.0
        %1281 = vmatprep.subr.mxu0 0.0
        %1282 = vmatpush1.xpose.msra.mxu0 0.0
        %1283 = vmatprep.subr.mxu0 0.0
        %1284 = vmatpush1.xpose.msra.mxu0 0.0
        %1285 = vmatprep.subr.mxu0 0.0
        %1286 = vmatpush1.xpose.msra.mxu0 0.0
        %1287 = vmatprep.subr.mxu0 0.0
        %1288 = vmatpush1.xpose.msra.mxu0 0.0
        %1289 = vmatprep.subr.mxu0 0.0
        %1290 = vmatpush1.xpose.msra.mxu0 0.0
        %1291 = vmatprep.subr.mxu0 0.0
        %1292 = vmatpush1.xpose.msra.mxu0 0.0
        %1293 = vmatprep.subr.mxu0 0.0
        %1294 = vmatpush1.xpose.msra.mxu0 0.0
        %1295 = vmatprep.subr.mxu0 0.0
        %1296 = vmatpush1.xpose.msra.mxu0 0.0
        %1297 = vmatprep.subr.mxu0 0.0
        %1298 = vmatpush1.xpose.msra.mxu0 0.0
        %1299 = vmatprep.subr.mxu0 0.0
        %1300 = vmatpush1.xpose.msra.mxu0 0.0
        %1301 = vmatprep.subr.mxu0 0.0
        %1302 = vmatpush1.xpose.msra.mxu0 0.0
        %1303 = vmatprep.subr.mxu0 0.0
        %1304 = vmatpush1.xpose.msra.mxu0 0.0
        %1305 = vmatprep.subr.mxu0 0.0
        %1306 = vmatpush1.xpose.msra.mxu0 0.0
        %1307 = vmatprep.subr.mxu0 0.0
        %1308 = vmatpush1.xpose.msra.mxu0 0.0
        %1309 = vmatprep.subr.mxu0 0.0
        %1310 = vmatpush1.xpose.msra.mxu0 0.0
        %1311 = vmatprep.subr.mxu0 0.0
        %1312 = vmatpush1.xpose.msra.mxu0 0.0
        %1313 = vmatprep.mubr.f32.mxu0 0.0
        %1314 = vmatmul.mubr.f32.gmra.mrb[0].mxu0 %v1245
        %v1315 = vpop.f32.mrb[0].mxu0
        %v1316 = vadd.f32 0.0, %v1315
        %v1317 = vpop.f32.mrb[0].mxu0
        %1318 = vdwg.mxu0
        %v1319 = vsel %vm494, %v1316, -1e+20
        %v1320 = vsel %vm746, %v1319, -inf
        %1321 = vmax.xlane.f32.xlu0 %v1320
        %v1322 = vpop.xlane.xlu0 %1321
        %v1323 = vsub.f32 %v1319, %v1322
        %v1324 = vmul.f32 %v1323, 1.442695
        %v1325 = vpow.pop %v1324
        %v1326 = vsel %vm746, %v1325, 0.0
        %1327 = vadd.xlane.f32.xlu0 %v1326
        %v1328 = vpop.xlane.xlu0 %1327
        %v1329 = vrcp.pop %v1328
        %v1330 = vmul.f32 %v1325, %v1329
        %1331 = vrot.lane.b32.xlu0 %v738, 104
        %v1332 = vpop.permute.xlu0 %1331
        %v1335 = vsel %vm746, %v1330, 0
        %1337 = vmatprep.subr.mxu0 0.0
        %1338 = vmatpush1.msra.mxu0 %v1332
        %1339 = vmatprep.subr.mxu0 0.0
        %1340 = vmatpush1.msra.mxu0 0.0
        %1341 = vmatprep.subr.mxu0 0.0
        %1342 = vmatpush1.msra.mxu0 0.0
        %1343 = vmatprep.subr.mxu0 0.0
        %1344 = vmatpush1.msra.mxu0 0.0
        %1345 = vmatprep.subr.mxu0 0.0
        %1346 = vmatpush1.msra.mxu0 0.0
        %1347 = vmatprep.subr.mxu0 0.0
        %1348 = vmatpush1.msra.mxu0 0.0
        %1349 = vmatprep.subr.mxu0 0.0
        %1350 = vmatpush1.msra.mxu0 0.0
        %1351 = vmatprep.subr.mxu0 0.0
        %1352 = vmatpush1.msra.mxu0 0.0
        %1353 = vmatprep.subr.mxu0 0.0
        %1354 = vmatpush1.msra.mxu0 0.0
        %1355 = vmatprep.subr.mxu0 0.0
        %1356 = vmatpush1.msra.mxu0 0.0
        %1357 = vmatprep.subr.mxu0 0.0
        %1358 = vmatpush1.msra.mxu0 0.0
        %1359 = vmatprep.subr.mxu0 0.0
        %1360 = vmatpush1.msra.mxu0 0.0
        %1361 = vmatprep.subr.mxu0 0.0
        %1362 = vmatpush1.msra.mxu0 0.0
        %1363 = vmatprep.subr.mxu0 0.0
        %1364 = vmatpush1.msra.mxu0 0.0
        %1365 = vmatprep.subr.mxu0 0.0
        %1366 = vmatpush1.msra.mxu0 0.0
        %1367 = vmatprep.subr.mxu0 0.0
        %1368 = vmatpush1.msra.mxu0 0.0
        %1369 = vmatprep.subr.mxu0 0.0
        %1370 = vmatpush1.msra.mxu0 0.0
        %1371 = vmatprep.subr.mxu0 0.0
        %1372 = vmatpush1.msra.mxu0 0.0
        %1373 = vmatprep.subr.mxu0 0.0
        %1374 = vmatpush1.msra.mxu0 0.0
        %1375 = vmatprep.subr.mxu0 0.0
        %1376 = vmatpush1.msra.mxu0 0.0
        %1377 = vmatprep.subr.mxu0 0.0
        %1378 = vmatpush1.msra.mxu0 0.0
        %1379 = vmatprep.subr.mxu0 0.0
        %1380 = vmatpush1.msra.mxu0 0.0
        %1381 = vmatprep.subr.mxu0 0.0
        %1382 = vmatpush1.msra.mxu0 0.0
        %1383 = vmatprep.subr.mxu0 0.0
        %1384 = vmatpush1.msra.mxu0 0.0
        %1385 = vmatprep.subr.mxu0 0.0
        %1386 = vmatpush1.msra.mxu0 0.0
        %1387 = vmatprep.subr.mxu0 0.0
        %1388 = vmatpush1.msra.mxu0 0.0
        %1389 = vmatprep.subr.mxu0 0.0
        %1390 = vmatpush1.msra.mxu0 0.0
        %1391 = vmatprep.subr.mxu0 0.0
        %1392 = vmatpush1.msra.mxu0 0.0
        %1393 = vmatprep.subr.mxu0 0.0
        %1394 = vmatpush1.msra.mxu0 0.0
        %1395 = vmatprep.subr.mxu0 0.0
        %1396 = vmatpush1.msra.mxu0 0.0
        %1397 = vmatprep.subr.mxu0 0.0
        %1398 = vmatpush1.msra.mxu0 0.0
        %1399 = vmatprep.subr.mxu0 0.0
        %1400 = vmatpush1.msra.mxu0 0.0
        %1401 = vmatprep.mubr.f32.mxu0 0.0
        %1402 = vmatmul.mubr.f32.gmra.mrb[0].mxu0 %v1335
        %v1403 = vpop.f32.mrb[0].mxu0
        %v1404 = vadd.f32 0.0, %v1403
        %v1405 = vpop.f32.mrb[0].mxu0
        %1406 = vdwg.mxu0
        %1408 = vrot.lane.b32.xlu0 %v1072, 8
        %v1409 = vpop.permute.xlu0 %1408
        %1412 = vrot.lane.b32.xlu0 %v1238, 16
        %v1413 = vpop.permute.xlu0 %1412
        %1416 = vrot.lane.b32.xlu0 %v1404, 24
        %v1417 = vpop.permute.xlu0 %1416
        %v1419 = vsel %vm746, %v905, %v1409
        %vm1420 = vcmask 130048
        %v1421 = vsel %vm1420, %v1419, %v1413
        %vm1422 = vcmask 195584
        %v1423 = vsel %vm1422, %v1421, %v1417
        %v1425 = vsel %vm746, %v593, 0
        %v1428 = vsel %vm746, %v668, 0
        %1430 = vmatprep.subr.mxu0 0.0
        %1431 = vmatpush1.xpose.msra.mxu0 %v1428
        %1432 = vmatprep.subr.mxu0 0.0
        %1433 = vmatpush1.xpose.msra.mxu0 0.0
        %1434 = vmatprep.subr.mxu0 0.0
        %1435 = vmatpush1.xpose.msra.mxu0 0.0
        %1436 = vmatprep.subr.mxu0 0.0
        %1437 = vmatpush1.xpose.msra.mxu0 0.0
        %1438 = vmatprep.subr.mxu0 0.0
        %1439 = vmatpush1.xpose.msra.mxu0 0.0
        %1440 = vmatprep.subr.mxu0 0.0
        %1441 = vmatpush1.xpose.msra.mxu0 0.0
        %1442 = vmatprep.subr.mxu0 0.0
        %1443 = vmatpush1.xpose.msra.mxu0 0.0
        %1444 = vmatprep.subr.mxu0 0.0
        %1445 = vmatpush1.xpose.msra.mxu0 0.0
        %1446 = vmatprep.subr.mxu0 0.0
        %1447 = vmatpush1.xpose.msra.mxu0 0.0
        %1448 = vmatprep.subr.mxu0 0.0
        %1449 = vmatpush1.xpose.msra.mxu0 0.0
        %1450 = vmatprep.subr.mxu0 0.0
        %1451 = vmatpush1.xpose.msra.mxu0 0.0
        %1452 = vmatprep.subr.mxu0 0.0
        %1453 = vmatpush1.xpose.msra.mxu0 0.0
        %1454 = vmatprep.subr.mxu0 0.0
        %1455 = vmatpush1.xpose.msra.mxu0 0.0
        %1456 = vmatprep.subr.mxu0 0.0
        %1457 = vmatpush1.xpose.msra.mxu0 0.0
        %1458 = vmatprep.subr.mxu0 0.0
        %1459 = vmatpush1.xpose.msra.mxu0 0.0
        %1460 = vmatprep.subr.mxu0 0.0
        %1461 = vmatpush1.xpose.msra.mxu0 0.0
        %1462 = vmatprep.subr.mxu0 0.0
        %1463 = vmatpush1.xpose.msra.mxu0 0.0
        %1464 = vmatprep.subr.mxu0 0.0
        %1465 = vmatpush1.xpose.msra.mxu0 0.0
        %1466 = vmatprep.subr.mxu0 0.0
        %1467 = vmatpush1.xpose.msra.mxu0 0.0
        %1468 = vmatprep.subr.mxu0 0.0
        %1469 = vmatpush1.xpose.msra.mxu0 0.0
        %1470 = vmatprep.subr.mxu0 0.0
        %1471 = vmatpush1.xpose.msra.mxu0 0.0
        %1472 = vmatprep.subr.mxu0 0.0
        %1473 = vmatpush1.xpose.msra.mxu0 0.0
        %1474 = vmatprep.subr.mxu0 0.0
        %1475 = vmatpush1.xpose.msra.mxu0 0.0
        %1476 = vmatprep.subr.mxu0 0.0
        %1477 = vmatpush1.xpose.msra.mxu0 0.0
        %1478 = vmatprep.subr.mxu0 0.0
        %1479 = vmatpush1.xpose.msra.mxu0 0.0
        %1480 = vmatprep.subr.mxu0 0.0
        %1481 = vmatpush1.xpose.msra.mxu0 0.0
        %1482 = vmatprep.subr.mxu0 0.0
        %1483 = vmatpush1.xpose.msra.mxu0 0.0
        %1484 = vmatprep.subr.mxu0 0.0
        %1485 = vmatpush1.xpose.msra.mxu0 0.0
        %1486 = vmatprep.subr.mxu0 0.0
        %1487 = vmatpush1.xpose.msra.mxu0 0.0
        %1488 = vmatprep.subr.mxu0 0.0
        %1489 = vmatpush1.xpose.msra.mxu0 0.0
        %1490 = vmatprep.subr.mxu0 0.0
        %1491 = vmatpush1.xpose.msra.mxu0 0.0
        %1492 = vmatprep.subr.mxu0 0.0
        %1493 = vmatpush1.xpose.msra.mxu0 0.0
        %1494 = vmatprep.mubr.f32.mxu0 0.0
        %1495 = vmatmul.mubr.f32.gmra.mrb[0].mxu0 %v1425
        %v1496 = vpop.f32.mrb[0].mxu0
        %v1497 = vadd.f32 0.0, %v1496
        %v1498 = vpop.f32.mrb[0].mxu0
        %1499 = vdwg.mxu0
        %v1500 = vsel %vm494, %v1497, -1e+20
        %v1501 = vsel %vm746, %v1500, -inf
        %1502 = vmax.xlane.f32.xlu0 %v1501
        %v1503 = vpop.xlane.xlu0 %1502
        %v1504 = vsub.f32 %v1500, %v1503
        %v1505 = vmul.f32 %v1504, 1.442695
        %v1506 = vpow.pop %v1505
        %v1507 = vsel %vm746, %v1506, 0.0
        %1508 = vadd.xlane.f32.xlu0 %v1507
        %v1509 = vpop.xlane.xlu0 %1508
        %v1510 = vrcp.pop %v1509
        %v1511 = vmul.f32 %v1506, %v1510
        %v1513 = vsel %vm746, %v1511, 0
        %1515 = vmatprep.subr.mxu0 0.0
        %1516 = vmatpush1.msra.mxu0 %v743
        %1517 = vmatprep.subr.mxu0 0.0
        %1518 = vmatpush1.msra.mxu0 0.0
        %1519 = vmatprep.subr.mxu0 0.0
        %1520 = vmatpush1.msra.mxu0 0.0
        %1521 = vmatprep.subr.mxu0 0.0
        %1522 = vmatpush1.msra.mxu0 0.0
        %1523 = vmatprep.subr.mxu0 0.0
        %1524 = vmatpush1.msra.mxu0 0.0
        %1525 = vmatprep.subr.mxu0 0.0
        %1526 = vmatpush1.msra.mxu0 0.0
        %1527 = vmatprep.subr.mxu0 0.0
        %1528 = vmatpush1.msra.mxu0 0.0
        %1529 = vmatprep.subr.mxu0 0.0
        %1530 = vmatpush1.msra.mxu0 0.0
        %1531 = vmatprep.subr.mxu0 0.0
        %1532 = vmatpush1.msra.mxu0 0.0
        %1533 = vmatprep.subr.mxu0 0.0
        %1534 = vmatpush1.msra.mxu0 0.0
        %1535 = vmatprep.subr.mxu0 0.0
        %1536 = vmatpush1.msra.mxu0 0.0
        %1537 = vmatprep.subr.mxu0 0.0
        %1538 = vmatpush1.msra.mxu0 0.0
        %1539 = vmatprep.subr.mxu0 0.0
        %1540 = vmatpush1.msra.mxu0 0.0
        %1541 = vmatprep.subr.mxu0 0.0
        %1542 = vmatpush1.msra.mxu0 0.0
        %1543 = vmatprep.subr.mxu0 0.0
        %1544 = vmatpush1.msra.mxu0 0.0
        %1545 = vmatprep.subr.mxu0 0.0
        %1546 = vmatpush1.msra.mxu0 0.0
        %1547 = vmatprep.subr.mxu0 0.0
        %1548 = vmatpush1.msra.mxu0 0.0
        %1549 = vmatprep.subr.mxu0 0.0
        %1550 = vmatpush1.msra.mxu0 0.0
        %1551 = vmatprep.subr.mxu0 0.0
        %1552 = vmatpush1.msra.mxu0 0.0
        %1553 = vmatprep.subr.mxu0 0.0
        %1554 = vmatpush1.msra.mxu0 0.0
        %1555 = vmatprep.subr.mxu0 0.0
        %1556 = vmatpush1.msra.mxu0 0.0
        %1557 = vmatprep.subr.mxu0 0.0
        %1558 = vmatpush1.msra.mxu0 0.0
        %1559 = vmatprep.subr.mxu0 0.0
        %1560 = vmatpush1.msra.mxu0 0.0
        %1561 = vmatprep.subr.mxu0 0.0
        %1562 = vmatpush1.msra.mxu0 0.0
        %1563 = vmatprep.subr.mxu0 0.0
        %1564 = vmatpush1.msra.mxu0 0.0
        %1565 = vmatprep.subr.mxu0 0.0
        %1566 = vmatpush1.msra.mxu0 0.0
        %1567 = vmatprep.subr.mxu0 0.0
        %1568 = vmatpush1.msra.mxu0 0.0
        %1569 = vmatprep.subr.mxu0 0.0
        %1570 = vmatpush1.msra.mxu0 0.0
        %1571 = vmatprep.subr.mxu0 0.0
        %1572 = vmatpush1.msra.mxu0 0.0
        %1573 = vmatprep.subr.mxu0 0.0
        %1574 = vmatpush1.msra.mxu0 0.0
        %1575 = vmatprep.subr.mxu0 0.0
        %1576 = vmatpush1.msra.mxu0 0.0
        %1577 = vmatprep.subr.mxu0 0.0
        %1578 = vmatpush1.msra.mxu0 0.0
        %1579 = vmatprep.mubr.f32.mxu0 0.0
        %1580 = vmatmul.mubr.f32.gmra.mrb[0].mxu0 %v1513
        %v1581 = vpop.f32.mrb[0].mxu0
        %v1582 = vadd.f32 0.0, %v1581
        %v1583 = vpop.f32.mrb[0].mxu0
        %1584 = vdwg.mxu0
        %1585 = vrot.lane.b32.xlu0 %v593, 120
        %v1586 = vpop.permute.xlu0 %1585
        %1587 = vrot.lane.b32.xlu0 %v668, 120
        %v1588 = vpop.permute.xlu0 %1587
        %v1589 = vsel %vm746, %v1586, 0
        %v1591 = vsel %vm746, %v1588, 0
        %1593 = vmatprep.subr.mxu0 0.0
        %1594 = vmatpush1.xpose.msra.mxu0 %v1591
        %1595 = vmatprep.subr.mxu0 0.0
        %1596 = vmatpush1.xpose.msra.mxu0 0.0
        %1597 = vmatprep.subr.mxu0 0.0
        %1598 = vmatpush1.xpose.msra.mxu0 0.0
        %1599 = vmatprep.subr.mxu0 0.0
        %1600 = vmatpush1.xpose.msra.mxu0 0.0
        %1601 = vmatprep.subr.mxu0 0.0
        %1602 = vmatpush1.xpose.msra.mxu0 0.0
        %1603 = vmatprep.subr.mxu0 0.0
        %1604 = vmatpush1.xpose.msra.mxu0 0.0
        %1605 = vmatprep.subr.mxu0 0.0
        %1606 = vmatpush1.xpose.msra.mxu0 0.0
        %1607 = vmatprep.subr.mxu0 0.0
        %1608 = vmatpush1.xpose.msra.mxu0 0.0
        %1609 = vmatprep.subr.mxu0 0.0
        %1610 = vmatpush1.xpose.msra.mxu0 0.0
        %1611 = vmatprep.subr.mxu0 0.0
        %1612 = vmatpush1.xpose.msra.mxu0 0.0
        %1613 = vmatprep.subr.mxu0 0.0
        %1614 = vmatpush1.xpose.msra.mxu0 0.0
        %1615 = vmatprep.subr.mxu0 0.0
        %1616 = vmatpush1.xpose.msra.mxu0 0.0
        %1617 = vmatprep.subr.mxu0 0.0
        %1618 = vmatpush1.xpose.msra.mxu0 0.0
        %1619 = vmatprep.subr.mxu0 0.0
        %1620 = vmatpush1.xpose.msra.mxu0 0.0
        %1621 = vmatprep.subr.mxu0 0.0
        %1622 = vmatpush1.xpose.msra.mxu0 0.0
        %1623 = vmatprep.subr.mxu0 0.0
        %1624 = vmatpush1.xpose.msra.mxu0 0.0
        %1625 = vmatprep.subr.mxu0 0.0
        %1626 = vmatpush1.xpose.msra.mxu0 0.0
        %1627 = vmatprep.subr.mxu0 0.0
        %1628 = vmatpush1.xpose.msra.mxu0 0.0
        %1629 = vmatprep.subr.mxu0 0.0
        %1630 = vmatpush1.xpose.msra.mxu0 0.0
        %1631 = vmatprep.subr.mxu0 0.0
        %1632 = vmatpush1.xpose.msra.mxu0 0.0
        %1633 = vmatprep.subr.mxu0 0.0
        %1634 = vmatpush1.xpose.msra.mxu0 0.0
        %1635 = vmatprep.subr.mxu0 0.0
        %1636 = vmatpush1.xpose.msra.mxu0 0.0
        %1637 = vmatprep.subr.mxu0 0.0
        %1638 = vmatpush1.xpose.msra.mxu0 0.0
        %1639 = vmatprep.subr.mxu0 0.0
        %1640 = vmatpush1.xpose.msra.mxu0 0.0
        %1641 = vmatprep.subr.mxu0 0.0
        %1642 = vmatpush1.xpose.msra.mxu0 0.0
        %1643 = vmatprep.subr.mxu0 0.0
        %1644 = vmatpush1.xpose.msra.mxu0 0.0
        %1645 = vmatprep.subr.mxu0 0.0
        %1646 = vmatpush1.xpose.msra.mxu0 0.0
        %1647 = vmatprep.subr.mxu0 0.0
        %1648 = vmatpush1.xpose.msra.mxu0 0.0
        %1649 = vmatprep.subr.mxu0 0.0
        %1650 = vmatpush1.xpose.msra.mxu0 0.0
        %1651 = vmatprep.subr.mxu0 0.0
        %1652 = vmatpush1.xpose.msra.mxu0 0.0
        %1653 = vmatprep.subr.mxu0 0.0
        %1654 = vmatpush1.xpose.msra.mxu0 0.0
        %1655 = vmatprep.subr.mxu0 0.0
        %1656 = vmatpush1.xpose.msra.mxu0 0.0
        %1657 = vmatprep.mubr.f32.mxu0 0.0
        %1658 = vmatmul.mubr.f32.gmra.mrb[0].mxu0 %v1589
        %v1659 = vpop.f32.mrb[0].mxu0
        %v1660 = vadd.f32 0.0, %v1659
        %v1661 = vpop.f32.mrb[0].mxu0
        %1662 = vdwg.mxu0
        %v1663 = vsel %vm494, %v1660, -1e+20
        %v1664 = vsel %vm746, %v1663, -inf
        %1665 = vmax.xlane.f32.xlu0 %v1664
        %v1666 = vpop.xlane.xlu0 %1665
        %v1667 = vsub.f32 %v1663, %v1666
        %v1668 = vmul.f32 %v1667, 1.442695
        %v1669 = vpow.pop %v1668
        %v1670 = vsel %vm746, %v1669, 0.0
        %1671 = vadd.xlane.f32.xlu0 %v1670
        %v1672 = vpop.xlane.xlu0 %1671
        %v1673 = vrcp.pop %v1672
        %v1674 = vmul.f32 %v1669, %v1673
        %1676 = vrot.lane.b32.xlu0 %v743, 120
        %v1677 = vpop.permute.xlu0 %1676
        %v1680 = vsel %vm746, %v1674, 0
        %1682 = vmatprep.subr.mxu0 0.0
        %1683 = vmatpush1.msra.mxu0 %v1677
        %1684 = vmatprep.subr.mxu0 0.0
        %1685 = vmatpush1.msra.mxu0 0.0
        %1686 = vmatprep.subr.mxu0 0.0
        %1687 = vmatpush1.msra.mxu0 0.0
        %1688 = vmatprep.subr.mxu0 0.0
        %1689 = vmatpush1.msra.mxu0 0.0
        %1690 = vmatprep.subr.mxu0 0.0
        %1691 = vmatpush1.msra.mxu0 0.0
        %1692 = vmatprep.subr.mxu0 0.0
        %1693 = vmatpush1.msra.mxu0 0.0
        %1694 = vmatprep.subr.mxu0 0.0
        %1695 = vmatpush1.msra.mxu0 0.0
        %1696 = vmatprep.subr.mxu0 0.0
        %1697 = vmatpush1.msra.mxu0 0.0
        %1698 = vmatprep.subr.mxu0 0.0
        %1699 = vmatpush1.msra.mxu0 0.0
        %1700 = vmatprep.subr.mxu0 0.0
        %1701 = vmatpush1.msra.mxu0 0.0
        %1702 = vmatprep.subr.mxu0 0.0
        %1703 = vmatpush1.msra.mxu0 0.0
        %1704 = vmatprep.subr.mxu0 0.0
        %1705 = vmatpush1.msra.mxu0 0.0
        %1706 = vmatprep.subr.mxu0 0.0
        %1707 = vmatpush1.msra.mxu0 0.0
        %1708 = vmatprep.subr.mxu0 0.0
        %1709 = vmatpush1.msra.mxu0 0.0
        %1710 = vmatprep.subr.mxu0 0.0
        %1711 = vmatpush1.msra.mxu0 0.0
        %1712 = vmatprep.subr.mxu0 0.0
        %1713 = vmatpush1.msra.mxu0 0.0
        %1714 = vmatprep.subr.mxu0 0.0
        %1715 = vmatpush1.msra.mxu0 0.0
        %1716 = vmatprep.subr.mxu0 0.0
        %1717 = vmatpush1.msra.mxu0 0.0
        %1718 = vmatprep.subr.mxu0 0.0
        %1719 = vmatpush1.msra.mxu0 0.0
        %1720 = vmatprep.subr.mxu0 0.0
        %1721 = vmatpush1.msra.mxu0 0.0
        %1722 = vmatprep.subr.mxu0 0.0
        %1723 = vmatpush1.msra.mxu0 0.0
        %1724 = vmatprep.subr.mxu0 0.0
        %1725 = vmatpush1.msra.mxu0 0.0
        %1726 = vmatprep.subr.mxu0 0.0
        %1727 = vmatpush1.msra.mxu0 0.0
        %1728 = vmatprep.subr.mxu0 0.0
        %1729 = vmatpush1.msra.mxu0 0.0
        %1730 = vmatprep.subr.mxu0 0.0
        %1731 = vmatpush1.msra.mxu0 0.0
        %1732 = vmatprep.subr.mxu0 0.0
        %1733 = vmatpush1.msra.mxu0 0.0
        %1734 = vmatprep.subr.mxu0 0.0
        %1735 = vmatpush1.msra.mxu0 0.0
        %1736 = vmatprep.subr.mxu0 0.0
        %1737 = vmatpush1.msra.mxu0 0.0
        %1738 = vmatprep.subr.mxu0 0.0
        %1739 = vmatpush1.msra.mxu0 0.0
        %1740 = vmatprep.subr.mxu0 0.0
        %1741 = vmatpush1.msra.mxu0 0.0
        %1742 = vmatprep.subr.mxu0 0.0
        %1743 = vmatpush1.msra.mxu0 0.0
        %1744 = vmatprep.subr.mxu0 0.0
        %1745 = vmatpush1.msra.mxu0 0.0
        %1746 = vmatprep.mubr.f32.mxu0 0.0
        %1747 = vmatmul.mubr.f32.gmra.mrb[0].mxu0 %v1680
        %v1748 = vpop.f32.mrb[0].mxu0
        %v1749 = vadd.f32 0.0, %v1748
        %v1750 = vpop.f32.mrb[0].mxu0
        %1751 = vdwg.mxu0
        %1752 = vrot.lane.b32.xlu0 %v593, 112
        %v1753 = vpop.permute.xlu0 %1752
        %1754 = vrot.lane.b32.xlu0 %v668, 112
        %v1755 = vpop.permute.xlu0 %1754
        %v1756 = vsel %vm746, %v1753, 0
        %v1758 = vsel %vm746, %v1755, 0
        %1760 = vmatprep.subr.mxu0 0.0
        %1761 = vmatpush1.xpose.msra.mxu0 %v1758
        %1762 = vmatprep.subr.mxu0 0.0
        %1763 = vmatpush1.xpose.msra.mxu0 0.0
        %1764 = vmatprep.subr.mxu0 0.0
        %1765 = vmatpush1.xpose.msra.mxu0 0.0
        %1766 = vmatprep.subr.mxu0 0.0
        %1767 = vmatpush1.xpose.msra.mxu0 0.0
        %1768 = vmatprep.subr.mxu0 0.0
        %1769 = vmatpush1.xpose.msra.mxu0 0.0
        %1770 = vmatprep.subr.mxu0 0.0
        %1771 = vmatpush1.xpose.msra.mxu0 0.0
        %1772 = vmatprep.subr.mxu0 0.0
        %1773 = vmatpush1.xpose.msra.mxu0 0.0
        %1774 = vmatprep.subr.mxu0 0.0
        %1775 = vmatpush1.xpose.msra.mxu0 0.0
        %1776 = vmatprep.subr.mxu0 0.0
        %1777 = vmatpush1.xpose.msra.mxu0 0.0
        %1778 = vmatprep.subr.mxu0 0.0
        %1779 = vmatpush1.xpose.msra.mxu0 0.0
        %1780 = vmatprep.subr.mxu0 0.0
        %1781 = vmatpush1.xpose.msra.mxu0 0.0
        %1782 = vmatprep.subr.mxu0 0.0
        %1783 = vmatpush1.xpose.msra.mxu0 0.0
        %1784 = vmatprep.subr.mxu0 0.0
        %1785 = vmatpush1.xpose.msra.mxu0 0.0
        %1786 = vmatprep.subr.mxu0 0.0
        %1787 = vmatpush1.xpose.msra.mxu0 0.0
        %1788 = vmatprep.subr.mxu0 0.0
        %1789 = vmatpush1.xpose.msra.mxu0 0.0
        %1790 = vmatprep.subr.mxu0 0.0
        %1791 = vmatpush1.xpose.msra.mxu0 0.0
        %1792 = vmatprep.subr.mxu0 0.0
        %1793 = vmatpush1.xpose.msra.mxu0 0.0
        %1794 = vmatprep.subr.mxu0 0.0
        %1795 = vmatpush1.xpose.msra.mxu0 0.0
        %1796 = vmatprep.subr.mxu0 0.0
        %1797 = vmatpush1.xpose.msra.mxu0 0.0
        %1798 = vmatprep.subr.mxu0 0.0
        %1799 = vmatpush1.xpose.msra.mxu0 0.0
        %1800 = vmatprep.subr.mxu0 0.0
        %1801 = vmatpush1.xpose.msra.mxu0 0.0
        %1802 = vmatprep.subr.mxu0 0.0
        %1803 = vmatpush1.xpose.msra.mxu0 0.0
        %1804 = vmatprep.subr.mxu0 0.0
        %1805 = vmatpush1.xpose.msra.mxu0 0.0
        %1806 = vmatprep.subr.mxu0 0.0
        %1807 = vmatpush1.xpose.msra.mxu0 0.0
        %1808 = vmatprep.subr.mxu0 0.0
        %1809 = vmatpush1.xpose.msra.mxu0 0.0
        %1810 = vmatprep.subr.mxu0 0.0
        %1811 = vmatpush1.xpose.msra.mxu0 0.0
        %1812 = vmatprep.subr.mxu0 0.0
        %1813 = vmatpush1.xpose.msra.mxu0 0.0
        %1814 = vmatprep.subr.mxu0 0.0
        %1815 = vmatpush1.xpose.msra.mxu0 0.0
        %1816 = vmatprep.subr.mxu0 0.0
        %1817 = vmatpush1.xpose.msra.mxu0 0.0
        %1818 = vmatprep.subr.mxu0 0.0
        %1819 = vmatpush1.xpose.msra.mxu0 0.0
        %1820 = vmatprep.subr.mxu0 0.0
        %1821 = vmatpush1.xpose.msra.mxu0 0.0
        %1822 = vmatprep.subr.mxu0 0.0
        %1823 = vmatpush1.xpose.msra.mxu0 0.0
        %1824 = vmatprep.mubr.f32.mxu0 0.0
        %1825 = vmatmul.mubr.f32.gmra.mrb[0].mxu0 %v1756
        %v1826 = vpop.f32.mrb[0].mxu0
        %v1827 = vadd.f32 0.0, %v1826
        %v1828 = vpop.f32.mrb[0].mxu0
        %1829 = vdwg.mxu0
        %v1830 = vsel %vm494, %v1827, -1e+20
        %v1831 = vsel %vm746, %v1830, -inf
        %1832 = vmax.xlane.f32.xlu0 %v1831
        %v1833 = vpop.xlane.xlu0 %1832
        %v1834 = vsub.f32 %v1830, %v1833
        %v1835 = vmul.f32 %v1834, 1.442695
        %v1836 = vpow.pop %v1835
        %v1837 = vsel %vm746, %v1836, 0.0
        %1838 = vadd.xlane.f32.xlu0 %v1837
        %v1839 = vpop.xlane.xlu0 %1838
        %v1840 = vrcp.pop %v1839
        %v1841 = vmul.f32 %v1836, %v1840
        %1842 = vrot.lane.b32.xlu0 %v743, 112
        %v1843 = vpop.permute.xlu0 %1842
        %v1846 = vsel %vm746, %v1841, 0
        %1848 = vmatprep.subr.mxu0 0.0
        %1849 = vmatpush1.msra.mxu0 %v1843
        %1850 = vmatprep.subr.mxu0 0.0
        %1851 = vmatpush1.msra.mxu0 0.0
        %1852 = vmatprep.subr.mxu0 0.0
        %1853 = vmatpush1.msra.mxu0 0.0
        %1854 = vmatprep.subr.mxu0 0.0
        %1855 = vmatpush1.msra.mxu0 0.0
        %1856 = vmatprep.subr.mxu0 0.0
        %1857 = vmatpush1.msra.mxu0 0.0
        %1858 = vmatprep.subr.mxu0 0.0
        %1859 = vmatpush1.msra.mxu0 0.0
        %1860 = vmatprep.subr.mxu0 0.0
        %1861 = vmatpush1.msra.mxu0 0.0
        %1862 = vmatprep.subr.mxu0 0.0
        %1863 = vmatpush1.msra.mxu0 0.0
        %1864 = vmatprep.subr.mxu0 0.0
        %1865 = vmatpush1.msra.mxu0 0.0
        %1866 = vmatprep.subr.mxu0 0.0
        %1867 = vmatpush1.msra.mxu0 0.0
        %1868 = vmatprep.subr.mxu0 0.0
        %1869 = vmatpush1.msra.mxu0 0.0
        %1870 = vmatprep.subr.mxu0 0.0
        %1871 = vmatpush1.msra.mxu0 0.0
        %1872 = vmatprep.subr.mxu0 0.0
        %1873 = vmatpush1.msra.mxu0 0.0
        %1874 = vmatprep.subr.mxu0 0.0
        %1875 = vmatpush1.msra.mxu0 0.0
        %1876 = vmatprep.subr.mxu0 0.0
        %1877 = vmatpush1.msra.mxu0 0.0
        %1878 = vmatprep.subr.mxu0 0.0
        %1879 = vmatpush1.msra.mxu0 0.0
        %1880 = vmatprep.subr.mxu0 0.0
        %1881 = vmatpush1.msra.mxu0 0.0
        %1882 = vmatprep.subr.mxu0 0.0
        %1883 = vmatpush1.msra.mxu0 0.0
        %1884 = vmatprep.subr.mxu0 0.0
        %1885 = vmatpush1.msra.mxu0 0.0
        %1886 = vmatprep.subr.mxu0 0.0
        %1887 = vmatpush1.msra.mxu0 0.0
        %1888 = vmatprep.subr.mxu0 0.0
        %1889 = vmatpush1.msra.mxu0 0.0
        %1890 = vmatprep.subr.mxu0 0.0
        %1891 = vmatpush1.msra.mxu0 0.0
        %1892 = vmatprep.subr.mxu0 0.0
        %1893 = vmatpush1.msra.mxu0 0.0
        %1894 = vmatprep.subr.mxu0 0.0
        %1895 = vmatpush1.msra.mxu0 0.0
        %1896 = vmatprep.subr.mxu0 0.0
        %1897 = vmatpush1.msra.mxu0 0.0
        %1898 = vmatprep.subr.mxu0 0.0
        %1899 = vmatpush1.msra.mxu0 0.0
        %1900 = vmatprep.subr.mxu0 0.0
        %1901 = vmatpush1.msra.mxu0 0.0
        %1902 = vmatprep.subr.mxu0 0.0
        %1903 = vmatpush1.msra.mxu0 0.0
        %1904 = vmatprep.subr.mxu0 0.0
        %1905 = vmatpush1.msra.mxu0 0.0
        %1906 = vmatprep.subr.mxu0 0.0
        %1907 = vmatpush1.msra.mxu0 0.0
        %1908 = vmatprep.subr.mxu0 0.0
        %1909 = vmatpush1.msra.mxu0 0.0
        %1910 = vmatprep.subr.mxu0 0.0
        %1911 = vmatpush1.msra.mxu0 0.0
        %1912 = vmatprep.mubr.f32.mxu0 0.0
        %1913 = vmatmul.mubr.f32.gmra.mrb[0].mxu0 %v1846
        %v1914 = vpop.f32.mrb[0].mxu0
        %v1915 = vadd.f32 0.0, %v1914
        %v1916 = vpop.f32.mrb[0].mxu0
        %1917 = vdwg.mxu0
        %1918 = vrot.lane.b32.xlu0 %v593, 104
        %v1919 = vpop.permute.xlu0 %1918
        %1920 = vrot.lane.b32.xlu0 %v668, 104
        %v1921 = vpop.permute.xlu0 %1920
        %v1922 = vsel %vm746, %v1919, 0
        %v1924 = vsel %vm746, %v1921, 0
        %1926 = vmatprep.subr.mxu0 0.0
        %1927 = vmatpush1.xpose.msra.mxu0 %v1924
        %1928 = vmatprep.subr.mxu0 0.0
        %1929 = vmatpush1.xpose.msra.mxu0 0.0
        %1930 = vmatprep.subr.mxu0 0.0
        %1931 = vmatpush1.xpose.msra.mxu0 0.0
        %1932 = vmatprep.subr.mxu0 0.0
        %1933 = vmatpush1.xpose.msra.mxu0 0.0
        %1934 = vmatprep.subr.mxu0 0.0
        %1935 = vmatpush1.xpose.msra.mxu0 0.0
        %1936 = vmatprep.subr.mxu0 0.0
        %1937 = vmatpush1.xpose.msra.mxu0 0.0
        %1938 = vmatprep.subr.mxu0 0.0
        %1939 = vmatpush1.xpose.msra.mxu0 0.0
        %1940 = vmatprep.subr.mxu0 0.0
        %1941 = vmatpush1.xpose.msra.mxu0 0.0
        %1942 = vmatprep.subr.mxu0 0.0
        %1943 = vmatpush1.xpose.msra.mxu0 0.0
        %1944 = vmatprep.subr.mxu0 0.0
        %1945 = vmatpush1.xpose.msra.mxu0 0.0
        %1946 = vmatprep.subr.mxu0 0.0
        %1947 = vmatpush1.xpose.msra.mxu0 0.0
        %1948 = vmatprep.subr.mxu0 0.0
        %1949 = vmatpush1.xpose.msra.mxu0 0.0
        %1950 = vmatprep.subr.mxu0 0.0
        %1951 = vmatpush1.xpose.msra.mxu0 0.0
        %1952 = vmatprep.subr.mxu0 0.0
        %1953 = vmatpush1.xpose.msra.mxu0 0.0
        %1954 = vmatprep.subr.mxu0 0.0
        %1955 = vmatpush1.xpose.msra.mxu0 0.0
        %1956 = vmatprep.subr.mxu0 0.0
        %1957 = vmatpush1.xpose.msra.mxu0 0.0
        %1958 = vmatprep.subr.mxu0 0.0
        %1959 = vmatpush1.xpose.msra.mxu0 0.0
        %1960 = vmatprep.subr.mxu0 0.0
        %1961 = vmatpush1.xpose.msra.mxu0 0.0
        %1962 = vmatprep.subr.mxu0 0.0
        %1963 = vmatpush1.xpose.msra.mxu0 0.0
        %1964 = vmatprep.subr.mxu0 0.0
        %1965 = vmatpush1.xpose.msra.mxu0 0.0
        %1966 = vmatprep.subr.mxu0 0.0
        %1967 = vmatpush1.xpose.msra.mxu0 0.0
        %1968 = vmatprep.subr.mxu0 0.0
        %1969 = vmatpush1.xpose.msra.mxu0 0.0
        %1970 = vmatprep.subr.mxu0 0.0
        %1971 = vmatpush1.xpose.msra.mxu0 0.0
        %1972 = vmatprep.subr.mxu0 0.0
        %1973 = vmatpush1.xpose.msra.mxu0 0.0
        %1974 = vmatprep.subr.mxu0 0.0
        %1975 = vmatpush1.xpose.msra.mxu0 0.0
        %1976 = vmatprep.subr.mxu0 0.0
        %1977 = vmatpush1.xpose.msra.mxu0 0.0
        %1978 = vmatprep.subr.mxu0 0.0
        %1979 = vmatpush1.xpose.msra.mxu0 0.0
        %1980 = vmatprep.subr.mxu0 0.0
        %1981 = vmatpush1.xpose.msra.mxu0 0.0
        %1982 = vmatprep.subr.mxu0 0.0
        %1983 = vmatpush1.xpose.msra.mxu0 0.0
        %1984 = vmatprep.subr.mxu0 0.0
        %1985 = vmatpush1.xpose.msra.mxu0 0.0
        %1986 = vmatprep.subr.mxu0 0.0
        %1987 = vmatpush1.xpose.msra.mxu0 0.0
        %1988 = vmatprep.subr.mxu0 0.0
        %1989 = vmatpush1.xpose.msra.mxu0 0.0
        %1990 = vmatprep.mubr.f32.mxu0 0.0
        %1991 = vmatmul.mubr.f32.gmra.mrb[0].mxu0 %v1922
        %v1992 = vpop.f32.mrb[0].mxu0
        %v1993 = vadd.f32 0.0, %v1992
        %v1994 = vpop.f32.mrb[0].mxu0
        %1995 = vdwg.mxu0
        %v1996 = vsel %vm494, %v1993, -1e+20
        %v1997 = vsel %vm746, %v1996, -inf
        %1998 = vmax.xlane.f32.xlu0 %v1997
        %v1999 = vpop.xlane.xlu0 %1998
        %v2000 = vsub.f32 %v1996, %v1999
        %v2001 = vmul.f32 %v2000, 1.442695
        %v2002 = vpow.pop %v2001
        %v2003 = vsel %vm746, %v2002, 0.0
        %2004 = vadd.xlane.f32.xlu0 %v2003
        %v2005 = vpop.xlane.xlu0 %2004
        %v2006 = vrcp.pop %v2005
        %v2007 = vmul.f32 %v2002, %v2006
        %2008 = vrot.lane.b32.xlu0 %v743, 104
        %v2009 = vpop.permute.xlu0 %2008
        %v2012 = vsel %vm746, %v2007, 0
        %2014 = vmatprep.subr.mxu0 0.0
        %2015 = vmatpush1.msra.mxu0 %v2009
        %2016 = vmatprep.subr.mxu0 0.0
        %2017 = vmatpush1.msra.mxu0 0.0
        %2018 = vmatprep.subr.mxu0 0.0
        %2019 = vmatpush1.msra.mxu0 0.0
        %2020 = vmatprep.subr.mxu0 0.0
        %2021 = vmatpush1.msra.mxu0 0.0
        %2022 = vmatprep.subr.mxu0 0.0
        %2023 = vmatpush1.msra.mxu0 0.0
        %2024 = vmatprep.subr.mxu0 0.0
        %2025 = vmatpush1.msra.mxu0 0.0
        %2026 = vmatprep.subr.mxu0 0.0
        %2027 = vmatpush1.msra.mxu0 0.0
        %2028 = vmatprep.subr.mxu0 0.0
        %2029 = vmatpush1.msra.mxu0 0.0
        %2030 = vmatprep.subr.mxu0 0.0
        %2031 = vmatpush1.msra.mxu0 0.0
        %2032 = vmatprep.subr.mxu0 0.0
        %2033 = vmatpush1.msra.mxu0 0.0
        %2034 = vmatprep.subr.mxu0 0.0
        %2035 = vmatpush1.msra.mxu0 0.0
        %2036 = vmatprep.subr.mxu0 0.0
        %2037 = vmatpush1.msra.mxu0 0.0
        %2038 = vmatprep.subr.mxu0 0.0
        %2039 = vmatpush1.msra.mxu0 0.0
        %2040 = vmatprep.subr.mxu0 0.0
        %2041 = vmatpush1.msra.mxu0 0.0
        %2042 = vmatprep.subr.mxu0 0.0
        %2043 = vmatpush1.msra.mxu0 0.0
        %2044 = vmatprep.subr.mxu0 0.0
        %2045 = vmatpush1.msra.mxu0 0.0
        %2046 = vmatprep.subr.mxu0 0.0
        %2047 = vmatpush1.msra.mxu0 0.0
        %2048 = vmatprep.subr.mxu0 0.0
        %2049 = vmatpush1.msra.mxu0 0.0
        %2050 = vmatprep.subr.mxu0 0.0
        %2051 = vmatpush1.msra.mxu0 0.0
        %2052 = vmatprep.subr.mxu0 0.0
        %2053 = vmatpush1.msra.mxu0 0.0
        %2054 = vmatprep.subr.mxu0 0.0
        %2055 = vmatpush1.msra.mxu0 0.0
        %2056 = vmatprep.subr.mxu0 0.0
        %2057 = vmatpush1.msra.mxu0 0.0
        %2058 = vmatprep.subr.mxu0 0.0
        %2059 = vmatpush1.msra.mxu0 0.0
        %2060 = vmatprep.subr.mxu0 0.0
        %2061 = vmatpush1.msra.mxu0 0.0
        %2062 = vmatprep.subr.mxu0 0.0
        %2063 = vmatpush1.msra.mxu0 0.0
        %2064 = vmatprep.subr.mxu0 0.0
        %2065 = vmatpush1.msra.mxu0 0.0
        %2066 = vmatprep.subr.mxu0 0.0
        %2067 = vmatpush1.msra.mxu0 0.0
        %2068 = vmatprep.subr.mxu0 0.0
        %2069 = vmatpush1.msra.mxu0 0.0
        %2070 = vmatprep.subr.mxu0 0.0
        %2071 = vmatpush1.msra.mxu0 0.0
        %2072 = vmatprep.subr.mxu0 0.0
        %2073 = vmatpush1.msra.mxu0 0.0
        %2074 = vmatprep.subr.mxu0 0.0
        %2075 = vmatpush1.msra.mxu0 0.0
        %2076 = vmatprep.subr.mxu0 0.0
        %2077 = vmatpush1.msra.mxu0 0.0
        %2078 = vmatprep.mubr.f32.mxu0 0.0
        %2079 = vmatmul.mubr.f32.gmra.mrb[0].mxu0 %v2012
        %v2080 = vpop.f32.mrb[0].mxu0
        %v2081 = vadd.f32 0.0, %v2080
        %v2082 = vpop.f32.mrb[0].mxu0
        %2083 = vdwg.mxu0
        %2085 = vrot.lane.b32.xlu0 %v1749, 8
        %v2086 = vpop.permute.xlu0 %2085
        %2089 = vrot.lane.b32.xlu0 %v1915, 16
        %v2090 = vpop.permute.xlu0 %2089
        %2093 = vrot.lane.b32.xlu0 %v2081, 24
        %v2094 = vpop.permute.xlu0 %2093
        %v2096 = vsel %vm746, %v1582, %v2086
        %v2097 = vsel %vm1420, %v2096, %v2090
        %v2098 = vsel %vm1422, %v2097, %v2094
        %v2099 = vlaneseq
        %v2100 = vshrl.u32 %v2099, 7
        %v2101 = vsub.s32 0, %v2100
        %v2102 = vrot.slane %v488, %v2101
        %v2104 = vsel %vm514, %v1423, 0
        %v2107 = vsel %vm514, %v2098, 0
        %2109 = vmatprep.subr.mxu0 0.0
        %2110 = vmatpush1.msra.mxu0 %v510
        %2111 = vmatprep.subr.mxu0 0.0
        %2112 = vmatpush1.msra.mxu0 %v511
        %2113 = vmatprep.subr.mxu0 0.0
        %2114 = vmatpush1.msra.mxu0 %v512
        %2115 = vmatprep.subr.mxu0 0.0
        %2116 = vmatpush1.msra.mxu0 %v513
        %2117 = vmatprep.subr.mxu0 0.0
        %2118 = vmatpush1.msra.mxu0 0.0
        %2119 = vmatprep.subr.mxu0 0.0
        %2120 = vmatpush1.msra.mxu0 0.0
        %2121 = vmatprep.subr.mxu0 0.0
        %2122 = vmatpush1.msra.mxu0 0.0
        %2123 = vmatprep.subr.mxu0 0.0
        %2124 = vmatpush1.msra.mxu0 0.0
        %2125 = vmatprep.subr.mxu0 0.0
        %2126 = vmatpush1.msra.mxu0 0.0
        %2127 = vmatprep.subr.mxu0 0.0
        %2128 = vmatpush1.msra.mxu0 0.0
        %2129 = vmatprep.subr.mxu0 0.0
        %2130 = vmatpush1.msra.mxu0 0.0
        %2131 = vmatprep.subr.mxu0 0.0
        %2132 = vmatpush1.msra.mxu0 0.0
        %2133 = vmatprep.subr.mxu0 0.0
        %2134 = vmatpush1.msra.mxu0 0.0
        %2135 = vmatprep.subr.mxu0 0.0
        %2136 = vmatpush1.msra.mxu0 0.0
        %2137 = vmatprep.subr.mxu0 0.0
        %2138 = vmatpush1.msra.mxu0 0.0
        %2139 = vmatprep.subr.mxu0 0.0
        %2140 = vmatpush1.msra.mxu0 0.0
        %2141 = vmatprep.subr.mxu0 0.0
        %2142 = vmatpush1.msra.mxu0 0.0
        %2143 = vmatprep.subr.mxu0 0.0
        %2144 = vmatpush1.msra.mxu0 0.0
        %2145 = vmatprep.subr.mxu0 0.0
        %2146 = vmatpush1.msra.mxu0 0.0
        %2147 = vmatprep.subr.mxu0 0.0
        %2148 = vmatpush1.msra.mxu0 0.0
        %2149 = vmatprep.subr.mxu0 0.0
        %2150 = vmatpush1.msra.mxu0 0.0
        %2151 = vmatprep.subr.mxu0 0.0
        %2152 = vmatpush1.msra.mxu0 0.0
        %2153 = vmatprep.subr.mxu0 0.0
        %2154 = vmatpush1.msra.mxu0 0.0
        %2155 = vmatprep.subr.mxu0 0.0
        %2156 = vmatpush1.msra.mxu0 0.0
        %2157 = vmatprep.subr.mxu0 0.0
        %2158 = vmatpush1.msra.mxu0 0.0
        %2159 = vmatprep.subr.mxu0 0.0
        %2160 = vmatpush1.msra.mxu0 0.0
        %2161 = vmatprep.subr.mxu0 0.0
        %2162 = vmatpush1.msra.mxu0 0.0
        %2163 = vmatprep.subr.mxu0 0.0
        %2164 = vmatpush1.msra.mxu0 0.0
        %2165 = vmatprep.subr.mxu0 0.0
        %2166 = vmatpush1.msra.mxu0 0.0
        %2167 = vmatprep.subr.mxu0 0.0
        %2168 = vmatpush1.msra.mxu0 0.0
        %2169 = vmatprep.subr.mxu0 0.0
        %2170 = vmatpush1.msra.mxu0 0.0
        %2171 = vmatprep.subr.mxu0 0.0
        %2172 = vmatpush1.msra.mxu0 0.0
        %2173 = vmatprep.mubr.f32.mxu0 0.0
        %2174 = vmatmul.mubr.f32.gmra.mrb[0].mxu0 %v2104
        %v2175 = vpop.f32.mrb[0].mxu0
        %v2176 = vadd.f32 %v2102, %v2175
        %v2177 = vpop.f32.mrb[0].mxu0
        %2178 = vmatprep.mubr.f32.mxu0 0.0
        %2179 = vmatmul.mubr.f32.gmra.mrb[0].mxu0 %v2107
        %v2180 = vpop.f32.mrb[0].mxu0
        %v2181 = vadd.f32 %v2102, %v2180
        %v2182 = vpop.f32.mrb[0].mxu0
        %2183 = vdwg.mxu0
        %v2184 = vadd.f32 %v484, %v2176
        %v2185 = vadd.f32 %v485, %v2181
        %v2186 = vsel %vm514, %v2184, 0.0
        %2187 = vadd.xlane.f32.xlu0 %v2186
        %v2188 = vpop.xlane.xlu0 %2187
        %v2189 = vsel %vm514, %v2185, 0.0
        %2190 = vadd.xlane.f32.xlu0 %v2189
        %v2191 = vpop.xlane.xlu0 %2190
        %v2192 = vrcp.pop 32.0
        %v2193 = vmul.f32 %v2188, %v2192
        %v2194 = vmul.f32 %v2191, %v2192
        %v2195 = vsub.f32 %v2184, %v2193
        %v2196 = vsub.f32 %v2185, %v2194
        %v2197 = vmul.f32 %v2195, %v2195
        %v2198 = vmul.f32 %v2196, %v2196
        %v2199 = vsel %vm514, %v2197, 0.0
        %2200 = vadd.xlane.f32.xlu0 %v2199
        %v2201 = vpop.xlane.xlu0 %2200
        %v2202 = vsel %vm514, %v2198, 0.0
        %2203 = vadd.xlane.f32.xlu0 %v2202
        %v2204 = vpop.xlane.xlu0 %2203
        %v2205 = vmul.f32 %v2201, %v2192
        %v2206 = vmul.f32 %v2204, %v2192
        %v2207 = vadd.f32 %v2205, 1e-05
        %v2208 = vadd.f32 %v2206, 1e-05
        %v2209 = vrsqrt.pop %v2207
        %v2210 = vrsqrt.pop %v2208
        %v2211 = vmul.f32 %v2195, %v2209
        %v2212 = vmul.f32 %v2196, %v2210
        %v2213 = vlaneseq
        %v2214 = vshrl.u32 %v2213, 7
        %v2215 = vsub.s32 1, %v2214
        %v2216 = vrot.slane %v488, %v2215
        %v2217 = vmul.f32 %v2211, %v2216
        %v2218 = vmul.f32 %v2212, %v2216
        %v2219 = vlaneseq
        %v2220 = vshrl.u32 %v2219, 7
        %v2221 = vsub.s32 2, %v2220
        %v2222 = vrot.slane %v488, %v2221
        %v2223 = vadd.f32 %v2217, %v2222
        %v2224 = vadd.f32 %v2218, %v2222
        %v2225 = vld [vmem:[%s461] sm:$0xff]
        %v2226 = vld [vmem:[%s461 + $0x8] sm:$0xff]
        %v2227 = vld [vmem:[%s461 + $0x10] sm:$0xff]
        %v2228 = vld [vmem:[%s461 + $0x18] sm:$0xff]
        %s2229 = scalar_lea.vmem %s461, 32
        %v2230 = vld [vmem:[%s2229] sm:$0xff]
        %v2231 = vld [vmem:[%s2229 + $0x8] sm:$0xff]
        %v2232 = vld [vmem:[%s2229 + $0x10] sm:$0xff]
        %v2233 = vld [vmem:[%s2229 + $0x18] sm:$0xff]
        %s2234 = scalar_lea.vmem %s461, 64
        %v2235 = vld [vmem:[%s2234] sm:$0xff]
        %v2236 = vld [vmem:[%s2234 + $0x8] sm:$0xff]
        %v2237 = vld [vmem:[%s2234 + $0x10] sm:$0xff]
        %v2238 = vld [vmem:[%s2234 + $0x18] sm:$0xff]
        %s2239 = scalar_lea.vmem %s461, 96
        %v2240 = vld [vmem:[%s2239] sm:$0xff]
        %v2241 = vld [vmem:[%s2239 + $0x8] sm:$0xff]
        %v2242 = vld [vmem:[%s2239 + $0x10] sm:$0xff]
        %v2243 = vld [vmem:[%s2239 + $0x18] sm:$0xff]
        %v2245 = vsel %vm514, %v2223, 0
        %v2248 = vsel %vm514, %v2224, 0
        %2250 = vmatprep.subr.mxu0 0.0
        %2251 = vmatpush1.msra.mxu0 %v2225
        %2252 = vmatprep.subr.mxu0 0.0
        %2253 = vmatpush1.msra.mxu0 %v2226
        %2254 = vmatprep.subr.mxu0 0.0
        %2255 = vmatpush1.msra.mxu0 %v2227
        %2256 = vmatprep.subr.mxu0 0.0
        %2257 = vmatpush1.msra.mxu0 %v2228
        %2258 = vmatprep.subr.mxu0 0.0
        %2259 = vmatpush1.msra.mxu0 0.0
        %2260 = vmatprep.subr.mxu0 0.0
        %2261 = vmatpush1.msra.mxu0 0.0
        %2262 = vmatprep.subr.mxu0 0.0
        %2263 = vmatpush1.msra.mxu0 0.0
        %2264 = vmatprep.subr.mxu0 0.0
        %2265 = vmatpush1.msra.mxu0 0.0
        %2266 = vmatprep.subr.mxu0 0.0
        %2267 = vmatpush1.msra.mxu0 0.0
        %2268 = vmatprep.subr.mxu0 0.0
        %2269 = vmatpush1.msra.mxu0 0.0
        %2270 = vmatprep.subr.mxu0 0.0
        %2271 = vmatpush1.msra.mxu0 0.0
        %2272 = vmatprep.subr.mxu0 0.0
        %2273 = vmatpush1.msra.mxu0 0.0
        %2274 = vmatprep.subr.mxu0 0.0
        %2275 = vmatpush1.msra.mxu0 0.0
        %2276 = vmatprep.subr.mxu0 0.0
        %2277 = vmatpush1.msra.mxu0 0.0
        %2278 = vmatprep.subr.mxu0 0.0
        %2279 = vmatpush1.msra.mxu0 0.0
        %2280 = vmatprep.subr.mxu0 0.0
        %2281 = vmatpush1.msra.mxu0 0.0
        %2282 = vmatprep.subr.mxu0 0.0
        %2283 = vmatpush1.msra.mxu0 0.0
        %2284 = vmatprep.subr.mxu0 0.0
        %2285 = vmatpush1.msra.mxu0 0.0
        %2286 = vmatprep.subr.mxu0 0.0
        %2287 = vmatpush1.msra.mxu0 0.0
        %2288 = vmatprep.subr.mxu0 0.0
        %2289 = vmatpush1.msra.mxu0 0.0
        %2290 = vmatprep.subr.mxu0 0.0
        %2291 = vmatpush1.msra.mxu0 0.0
        %2292 = vmatprep.subr.mxu0 0.0
        %2293 = vmatpush1.msra.mxu0 0.0
        %2294 = vmatprep.subr.mxu0 0.0
        %2295 = vmatpush1.msra.mxu0 0.0
        %2296 = vmatprep.subr.mxu0 0.0
        %2297 = vmatpush1.msra.mxu0 0.0
        %2298 = vmatprep.subr.mxu0 0.0
        %2299 = vmatpush1.msra.mxu0 0.0
        %2300 = vmatprep.subr.mxu0 0.0
        %2301 = vmatpush1.msra.mxu0 0.0
        %2302 = vmatprep.subr.mxu0 0.0
        %2303 = vmatpush1.msra.mxu0 0.0
        %2304 = vmatprep.subr.mxu0 0.0
        %2305 = vmatpush1.msra.mxu0 0.0
        %2306 = vmatprep.subr.mxu0 0.0
        %2307 = vmatpush1.msra.mxu0 0.0
        %2308 = vmatprep.subr.mxu0 0.0
        %2309 = vmatpush1.msra.mxu0 0.0
        %2310 = vmatprep.subr.mxu0 0.0
        %2311 = vmatpush1.msra.mxu0 0.0
        %2312 = vmatprep.subr.mxu0 0.0
        %2313 = vmatpush1.msra.mxu0 0.0
        %2314 = vmatprep.mubr.f32.mxu0 0.0
        %2315 = vmatmul.mubr.f32.gmra.mrb[0].mxu0 %v2245
        %v2316 = vpop.f32.mrb[0].mxu0
        %v2317 = vadd.f32 0.0, %v2316
        %v2318 = vpop.f32.mrb[0].mxu0
        %2319 = vmatprep.mubr.f32.mxu0 0.0
        %2320 = vmatmul.mubr.f32.gmra.mrb[0].mxu0 %v2248
        %v2321 = vpop.f32.mrb[0].mxu0
        %v2322 = vadd.f32 0.0, %v2321
        %v2323 = vpop.f32.mrb[0].mxu0
        %2324 = vdwg.mxu0
        %v2326 = vsel %vm514, %v486, 0
        %v2329 = vsel %vm514, %v487, 0
        %2331 = vmatprep.subr.mxu0 0.0
        %2332 = vmatpush1.msra.mxu0 %v2230
        %2333 = vmatprep.subr.mxu0 0.0
        %2334 = vmatpush1.msra.mxu0 %v2231
        %2335 = vmatprep.subr.mxu0 0.0
        %2336 = vmatpush1.msra.mxu0 %v2232
        %2337 = vmatprep.subr.mxu0 0.0
        %2338 = vmatpush1.msra.mxu0 %v2233
        %2339 = vmatprep.subr.mxu0 0.0
        %2340 = vmatpush1.msra.mxu0 0.0
        %2341 = vmatprep.subr.mxu0 0.0
        %2342 = vmatpush1.msra.mxu0 0.0
        %2343 = vmatprep.subr.mxu0 0.0
        %2344 = vmatpush1.msra.mxu0 0.0
        %2345 = vmatprep.subr.mxu0 0.0
        %2346 = vmatpush1.msra.mxu0 0.0
        %2347 = vmatprep.subr.mxu0 0.0
        %2348 = vmatpush1.msra.mxu0 0.0
        %2349 = vmatprep.subr.mxu0 0.0
        %2350 = vmatpush1.msra.mxu0 0.0
        %2351 = vmatprep.subr.mxu0 0.0
        %2352 = vmatpush1.msra.mxu0 0.0
        %2353 = vmatprep.subr.mxu0 0.0
        %2354 = vmatpush1.msra.mxu0 0.0
        %2355 = vmatprep.subr.mxu0 0.0
        %2356 = vmatpush1.msra.mxu0 0.0
        %2357 = vmatprep.subr.mxu0 0.0
        %2358 = vmatpush1.msra.mxu0 0.0
        %2359 = vmatprep.subr.mxu0 0.0
        %2360 = vmatpush1.msra.mxu0 0.0
        %2361 = vmatprep.subr.mxu0 0.0
        %2362 = vmatpush1.msra.mxu0 0.0
        %2363 = vmatprep.subr.mxu0 0.0
        %2364 = vmatpush1.msra.mxu0 0.0
        %2365 = vmatprep.subr.mxu0 0.0
        %2366 = vmatpush1.msra.mxu0 0.0
        %2367 = vmatprep.subr.mxu0 0.0
        %2368 = vmatpush1.msra.mxu0 0.0
        %2369 = vmatprep.subr.mxu0 0.0
        %2370 = vmatpush1.msra.mxu0 0.0
        %2371 = vmatprep.subr.mxu0 0.0
        %2372 = vmatpush1.msra.mxu0 0.0
        %2373 = vmatprep.subr.mxu0 0.0
        %2374 = vmatpush1.msra.mxu0 0.0
        %2375 = vmatprep.subr.mxu0 0.0
        %2376 = vmatpush1.msra.mxu0 0.0
        %2377 = vmatprep.subr.mxu0 0.0
        %2378 = vmatpush1.msra.mxu0 0.0
        %2379 = vmatprep.subr.mxu0 0.0
        %2380 = vmatpush1.msra.mxu0 0.0
        %2381 = vmatprep.subr.mxu0 0.0
        %2382 = vmatpush1.msra.mxu0 0.0
        %2383 = vmatprep.subr.mxu0 0.0
        %2384 = vmatpush1.msra.mxu0 0.0
        %2385 = vmatprep.subr.mxu0 0.0
        %2386 = vmatpush1.msra.mxu0 0.0
        %2387 = vmatprep.subr.mxu0 0.0
        %2388 = vmatpush1.msra.mxu0 0.0
        %2389 = vmatprep.subr.mxu0 0.0
        %2390 = vmatpush1.msra.mxu0 0.0
        %2391 = vmatprep.subr.mxu0 0.0
        %2392 = vmatpush1.msra.mxu0 0.0
        %2393 = vmatprep.subr.mxu0 0.0
        %2394 = vmatpush1.msra.mxu0 0.0
        %2395 = vmatprep.mubr.f32.mxu0 0.0
        %2396 = vmatmul.mubr.f32.gmra.mrb[0].mxu0 %v2326
        %v2397 = vpop.f32.mrb[0].mxu0
        %v2398 = vadd.f32 0.0, %v2397
        %v2399 = vpop.f32.mrb[0].mxu0
        %2400 = vmatprep.mubr.f32.mxu0 0.0
        %2401 = vmatmul.mubr.f32.gmra.mrb[0].mxu0 %v2329
        %v2402 = vpop.f32.mrb[0].mxu0
        %v2403 = vadd.f32 0.0, %v2402
        %v2404 = vpop.f32.mrb[0].mxu0
        %2405 = vdwg.mxu0
        %2406 = vmatprep.subr.mxu0 0.0
        %2407 = vmatpush1.msra.mxu0 %v2235
        %2408 = vmatprep.subr.mxu0 0.0
        %2409 = vmatpush1.msra.mxu0 %v2236
        %2410 = vmatprep.subr.mxu0 0.0
        %2411 = vmatpush1.msra.mxu0 %v2237
        %2412 = vmatprep.subr.mxu0 0.0
        %2413 = vmatpush1.msra.mxu0 %v2238
        %2414 = vmatprep.subr.mxu0 0.0
        %2415 = vmatpush1.msra.mxu0 0.0
        %2416 = vmatprep.subr.mxu0 0.0
        %2417 = vmatpush1.msra.mxu0 0.0
        %2418 = vmatprep.subr.mxu0 0.0
        %2419 = vmatpush1.msra.mxu0 0.0
        %2420 = vmatprep.subr.mxu0 0.0
        %2421 = vmatpush1.msra.mxu0 0.0
        %2422 = vmatprep.subr.mxu0 0.0
        %2423 = vmatpush1.msra.mxu0 0.0
        %2424 = vmatprep.subr.mxu0 0.0
        %2425 = vmatpush1.msra.mxu0 0.0
        %2426 = vmatprep.subr.mxu0 0.0
        %2427 = vmatpush1.msra.mxu0 0.0
        %2428 = vmatprep.subr.mxu0 0.0
        %2429 = vmatpush1.msra.mxu0 0.0
        %2430 = vmatprep.subr.mxu0 0.0
        %2431 = vmatpush1.msra.mxu0 0.0
        %2432 = vmatprep.subr.mxu0 0.0
        %2433 = vmatpush1.msra.mxu0 0.0
        %2434 = vmatprep.subr.mxu0 0.0
        %2435 = vmatpush1.msra.mxu0 0.0
        %2436 = vmatprep.subr.mxu0 0.0
        %2437 = vmatpush1.msra.mxu0 0.0
        %2438 = vmatprep.subr.mxu0 0.0
        %2439 = vmatpush1.msra.mxu0 0.0
        %2440 = vmatprep.subr.mxu0 0.0
        %2441 = vmatpush1.msra.mxu0 0.0
        %2442 = vmatprep.subr.mxu0 0.0
        %2443 = vmatpush1.msra.mxu0 0.0
        %2444 = vmatprep.subr.mxu0 0.0
        %2445 = vmatpush1.msra.mxu0 0.0
        %2446 = vmatprep.subr.mxu0 0.0
        %2447 = vmatpush1.msra.mxu0 0.0
        %2448 = vmatprep.subr.mxu0 0.0
        %2449 = vmatpush1.msra.mxu0 0.0
        %2450 = vmatprep.subr.mxu0 0.0
        %2451 = vmatpush1.msra.mxu0 0.0
        %2452 = vmatprep.subr.mxu0 0.0
        %2453 = vmatpush1.msra.mxu0 0.0
        %2454 = vmatprep.subr.mxu0 0.0
        %2455 = vmatpush1.msra.mxu0 0.0
        %2456 = vmatprep.subr.mxu0 0.0
        %2457 = vmatpush1.msra.mxu0 0.0
        %2458 = vmatprep.subr.mxu0 0.0
        %2459 = vmatpush1.msra.mxu0 0.0
        %2460 = vmatprep.subr.mxu0 0.0
        %2461 = vmatpush1.msra.mxu0 0.0
        %2462 = vmatprep.subr.mxu0 0.0
        %2463 = vmatpush1.msra.mxu0 0.0
        %2464 = vmatprep.subr.mxu0 0.0
        %2465 = vmatpush1.msra.mxu0 0.0
        %2466 = vmatprep.subr.mxu0 0.0
        %2467 = vmatpush1.msra.mxu0 0.0
        %2468 = vmatprep.subr.mxu0 0.0
        %2469 = vmatpush1.msra.mxu0 0.0
        %2470 = vmatprep.mubr.f32.mxu0 0.0
        %2471 = vmatmul.mubr.f32.gmra.mrb[0].mxu0 %v2326
        %v2472 = vpop.f32.mrb[0].mxu0
        %v2473 = vadd.f32 0.0, %v2472
        %v2474 = vpop.f32.mrb[0].mxu0
        %2475 = vmatprep.mubr.f32.mxu0 0.0
        %2476 = vmatmul.mubr.f32.gmra.mrb[0].mxu0 %v2329
        %v2477 = vpop.f32.mrb[0].mxu0
        %v2478 = vadd.f32 0.0, %v2477
        %v2479 = vpop.f32.mrb[0].mxu0
        %2480 = vdwg.mxu0
        %v2482 = vsel %vm746, %v2317, 0
        %v2485 = vsel %vm746, %v2398, 0
        %2487 = vmatprep.subr.mxu0 0.0
        %2488 = vmatpush1.xpose.msra.mxu0 %v2485
        %2489 = vmatprep.subr.mxu0 0.0
        %2490 = vmatpush1.xpose.msra.mxu0 0.0
        %2491 = vmatprep.subr.mxu0 0.0
        %2492 = vmatpush1.xpose.msra.mxu0 0.0
        %2493 = vmatprep.subr.mxu0 0.0
        %2494 = vmatpush1.xpose.msra.mxu0 0.0
        %2495 = vmatprep.subr.mxu0 0.0
        %2496 = vmatpush1.xpose.msra.mxu0 0.0
        %2497 = vmatprep.subr.mxu0 0.0
        %2498 = vmatpush1.xpose.msra.mxu0 0.0
        %2499 = vmatprep.subr.mxu0 0.0
        %2500 = vmatpush1.xpose.msra.mxu0 0.0
        %2501 = vmatprep.subr.mxu0 0.0
        %2502 = vmatpush1.xpose.msra.mxu0 0.0
        %2503 = vmatprep.subr.mxu0 0.0
        %2504 = vmatpush1.xpose.msra.mxu0 0.0
        %2505 = vmatprep.subr.mxu0 0.0
        %2506 = vmatpush1.xpose.msra.mxu0 0.0
        %2507 = vmatprep.subr.mxu0 0.0
        %2508 = vmatpush1.xpose.msra.mxu0 0.0
        %2509 = vmatprep.subr.mxu0 0.0
        %2510 = vmatpush1.xpose.msra.mxu0 0.0
        %2511 = vmatprep.subr.mxu0 0.0
        %2512 = vmatpush1.xpose.msra.mxu0 0.0
        %2513 = vmatprep.subr.mxu0 0.0
        %2514 = vmatpush1.xpose.msra.mxu0 0.0
        %2515 = vmatprep.subr.mxu0 0.0
        %2516 = vmatpush1.xpose.msra.mxu0 0.0
        %2517 = vmatprep.subr.mxu0 0.0
        %2518 = vmatpush1.xpose.msra.mxu0 0.0
        %2519 = vmatprep.subr.mxu0 0.0
        %2520 = vmatpush1.xpose.msra.mxu0 0.0
        %2521 = vmatprep.subr.mxu0 0.0
        %2522 = vmatpush1.xpose.msra.mxu0 0.0
        %2523 = vmatprep.subr.mxu0 0.0
        %2524 = vmatpush1.xpose.msra.mxu0 0.0
        %2525 = vmatprep.subr.mxu0 0.0
        %2526 = vmatpush1.xpose.msra.mxu0 0.0
        %2527 = vmatprep.subr.mxu0 0.0
        %2528 = vmatpush1.xpose.msra.mxu0 0.0
        %2529 = vmatprep.subr.mxu0 0.0
        %2530 = vmatpush1.xpose.msra.mxu0 0.0
        %2531 = vmatprep.subr.mxu0 0.0
        %2532 = vmatpush1.xpose.msra.mxu0 0.0
        %2533 = vmatprep.subr.mxu0 0.0
        %2534 = vmatpush1.xpose.msra.mxu0 0.0
        %2535 = vmatprep.subr.mxu0 0.0
        %2536 = vmatpush1.xpose.msra.mxu0 0.0
        %2537 = vmatprep.subr.mxu0 0.0
        %2538 = vmatpush1.xpose.msra.mxu0 0.0
        %2539 = vmatprep.subr.mxu0 0.0
        %2540 = vmatpush1.xpose.msra.mxu0 0.0
        %2541 = vmatprep.subr.mxu0 0.0
        %2542 = vmatpush1.xpose.msra.mxu0 0.0
        %2543 = vmatprep.subr.mxu0 0.0
        %2544 = vmatpush1.xpose.msra.mxu0 0.0
        %2545 = vmatprep.subr.mxu0 0.0
        %2546 = vmatpush1.xpose.msra.mxu0 0.0
        %2547 = vmatprep.subr.mxu0 0.0
        %2548 = vmatpush1.xpose.msra.mxu0 0.0
        %2549 = vmatprep.subr.mxu0 0.0
        %2550 = vmatpush1.xpose.msra.mxu0 0.0
        %2551 = vmatprep.mubr.f32.mxu0 0.0
        %2552 = vmatmul.mubr.f32.gmra.mrb[0].mxu0 %v2482
        %v2553 = vpop.f32.mrb[0].mxu0
        %v2554 = vadd.f32 0.0, %v2553
        %v2555 = vpop.f32.mrb[0].mxu0
        %2556 = vdwg.mxu0
        %v2557 = vsel %vm746, %v2554, -inf
        %2558 = vmax.xlane.f32.xlu0 %v2557
        %v2559 = vpop.xlane.xlu0 %2558
        %v2560 = vsub.f32 %v2554, %v2559
        %v2561 = vmul.f32 %v2560, 1.442695
        %v2562 = vpow.pop %v2561
        %v2563 = vsel %vm746, %v2562, 0.0
        %2564 = vadd.xlane.f32.xlu0 %v2563
        %v2565 = vpop.xlane.xlu0 %2564
        %v2566 = vrcp.pop %v2565
        %v2567 = vmul.f32 %v2562, %v2566
        %v2569 = vsel %vm746, %v2567, 0
        %2571 = vmatprep.subr.mxu0 0.0
        %2572 = vmatpush1.msra.mxu0 %v2473
        %2573 = vmatprep.subr.mxu0 0.0
        %2574 = vmatpush1.msra.mxu0 0.0
        %2575 = vmatprep.subr.mxu0 0.0
        %2576 = vmatpush1.msra.mxu0 0.0
        %2577 = vmatprep.subr.mxu0 0.0
        %2578 = vmatpush1.msra.mxu0 0.0
        %2579 = vmatprep.subr.mxu0 0.0
        %2580 = vmatpush1.msra.mxu0 0.0
        %2581 = vmatprep.subr.mxu0 0.0
        %2582 = vmatpush1.msra.mxu0 0.0
        %2583 = vmatprep.subr.mxu0 0.0
        %2584 = vmatpush1.msra.mxu0 0.0
        %2585 = vmatprep.subr.mxu0 0.0
        %2586 = vmatpush1.msra.mxu0 0.0
        %2587 = vmatprep.subr.mxu0 0.0
        %2588 = vmatpush1.msra.mxu0 0.0
        %2589 = vmatprep.subr.mxu0 0.0
        %2590 = vmatpush1.msra.mxu0 0.0
        %2591 = vmatprep.subr.mxu0 0.0
        %2592 = vmatpush1.msra.mxu0 0.0
        %2593 = vmatprep.subr.mxu0 0.0
        %2594 = vmatpush1.msra.mxu0 0.0
        %2595 = vmatprep.subr.mxu0 0.0
        %2596 = vmatpush1.msra.mxu0 0.0
        %2597 = vmatprep.subr.mxu0 0.0
        %2598 = vmatpush1.msra.mxu0 0.0
        %2599 = vmatprep.subr.mxu0 0.0
        %2600 = vmatpush1.msra.mxu0 0.0
        %2601 = vmatprep.subr.mxu0 0.0
        %2602 = vmatpush1.msra.mxu0 0.0
        %2603 = vmatprep.subr.mxu0 0.0
        %2604 = vmatpush1.msra.mxu0 0.0
        %2605 = vmatprep.subr.mxu0 0.0
        %2606 = vmatpush1.msra.mxu0 0.0
        %2607 = vmatprep.subr.mxu0 0.0
        %2608 = vmatpush1.msra.mxu0 0.0
        %2609 = vmatprep.subr.mxu0 0.0
        %2610 = vmatpush1.msra.mxu0 0.0
        %2611 = vmatprep.subr.mxu0 0.0
        %2612 = vmatpush1.msra.mxu0 0.0
        %2613 = vmatprep.subr.mxu0 0.0
        %2614 = vmatpush1.msra.mxu0 0.0
        %2615 = vmatprep.subr.mxu0 0.0
        %2616 = vmatpush1.msra.mxu0 0.0
        %2617 = vmatprep.subr.mxu0 0.0
        %2618 = vmatpush1.msra.mxu0 0.0
        %2619 = vmatprep.subr.mxu0 0.0
        %2620 = vmatpush1.msra.mxu0 0.0
        %2621 = vmatprep.subr.mxu0 0.0
        %2622 = vmatpush1.msra.mxu0 0.0
        %2623 = vmatprep.subr.mxu0 0.0
        %2624 = vmatpush1.msra.mxu0 0.0
        %2625 = vmatprep.subr.mxu0 0.0
        %2626 = vmatpush1.msra.mxu0 0.0
        %2627 = vmatprep.subr.mxu0 0.0
        %2628 = vmatpush1.msra.mxu0 0.0
        %2629 = vmatprep.subr.mxu0 0.0
        %2630 = vmatpush1.msra.mxu0 0.0
        %2631 = vmatprep.subr.mxu0 0.0
        %2632 = vmatpush1.msra.mxu0 0.0
        %2633 = vmatprep.subr.mxu0 0.0
        %2634 = vmatpush1.msra.mxu0 0.0
        %2635 = vmatprep.mubr.f32.mxu0 0.0
        %2636 = vmatmul.mubr.f32.gmra.mrb[0].mxu0 %v2569
        %v2637 = vpop.f32.mrb[0].mxu0
        %v2638 = vadd.f32 0.0, %v2637
        %v2639 = vpop.f32.mrb[0].mxu0
        %2640 = vdwg.mxu0
        %2641 = vrot.lane.b32.xlu0 %v2317, 120
        %v2642 = vpop.permute.xlu0 %2641
        %2643 = vrot.lane.b32.xlu0 %v2398, 120
        %v2644 = vpop.permute.xlu0 %2643
        %v2645 = vsel %vm746, %v2642, 0
        %v2647 = vsel %vm746, %v2644, 0
        %2649 = vmatprep.subr.mxu0 0.0
        %2650 = vmatpush1.xpose.msra.mxu0 %v2647
        %2651 = vmatprep.subr.mxu0 0.0
        %2652 = vmatpush1.xpose.msra.mxu0 0.0
        %2653 = vmatprep.subr.mxu0 0.0
        %2654 = vmatpush1.xpose.msra.mxu0 0.0
        %2655 = vmatprep.subr.mxu0 0.0
        %2656 = vmatpush1.xpose.msra.mxu0 0.0
        %2657 = vmatprep.subr.mxu0 0.0
        %2658 = vmatpush1.xpose.msra.mxu0 0.0
        %2659 = vmatprep.subr.mxu0 0.0
        %2660 = vmatpush1.xpose.msra.mxu0 0.0
        %2661 = vmatprep.subr.mxu0 0.0
        %2662 = vmatpush1.xpose.msra.mxu0 0.0
        %2663 = vmatprep.subr.mxu0 0.0
        %2664 = vmatpush1.xpose.msra.mxu0 0.0
        %2665 = vmatprep.subr.mxu0 0.0
        %2666 = vmatpush1.xpose.msra.mxu0 0.0
        %2667 = vmatprep.subr.mxu0 0.0
        %2668 = vmatpush1.xpose.msra.mxu0 0.0
        %2669 = vmatprep.subr.mxu0 0.0
        %2670 = vmatpush1.xpose.msra.mxu0 0.0
        %2671 = vmatprep.subr.mxu0 0.0
        %2672 = vmatpush1.xpose.msra.mxu0 0.0
        %2673 = vmatprep.subr.mxu0 0.0
        %2674 = vmatpush1.xpose.msra.mxu0 0.0
        %2675 = vmatprep.subr.mxu0 0.0
        %2676 = vmatpush1.xpose.msra.mxu0 0.0
        %2677 = vmatprep.subr.mxu0 0.0
        %2678 = vmatpush1.xpose.msra.mxu0 0.0
        %2679 = vmatprep.subr.mxu0 0.0
        %2680 = vmatpush1.xpose.msra.mxu0 0.0
        %2681 = vmatprep.subr.mxu0 0.0
        %2682 = vmatpush1.xpose.msra.mxu0 0.0
        %2683 = vmatprep.subr.mxu0 0.0
        %2684 = vmatpush1.xpose.msra.mxu0 0.0
        %2685 = vmatprep.subr.mxu0 0.0
        %2686 = vmatpush1.xpose.msra.mxu0 0.0
        %2687 = vmatprep.subr.mxu0 0.0
        %2688 = vmatpush1.xpose.msra.mxu0 0.0
        %2689 = vmatprep.subr.mxu0 0.0
        %2690 = vmatpush1.xpose.msra.mxu0 0.0
        %2691 = vmatprep.subr.mxu0 0.0
        %2692 = vmatpush1.xpose.msra.mxu0 0.0
        %2693 = vmatprep.subr.mxu0 0.0
        %2694 = vmatpush1.xpose.msra.mxu0 0.0
        %2695 = vmatprep.subr.mxu0 0.0
        %2696 = vmatpush1.xpose.msra.mxu0 0.0
        %2697 = vmatprep.subr.mxu0 0.0
        %2698 = vmatpush1.xpose.msra.mxu0 0.0
        %2699 = vmatprep.subr.mxu0 0.0
        %2700 = vmatpush1.xpose.msra.mxu0 0.0
        %2701 = vmatprep.subr.mxu0 0.0
        %2702 = vmatpush1.xpose.msra.mxu0 0.0
        %2703 = vmatprep.subr.mxu0 0.0
        %2704 = vmatpush1.xpose.msra.mxu0 0.0
        %2705 = vmatprep.subr.mxu0 0.0
        %2706 = vmatpush1.xpose.msra.mxu0 0.0
        %2707 = vmatprep.subr.mxu0 0.0
        %2708 = vmatpush1.xpose.msra.mxu0 0.0
        %2709 = vmatprep.subr.mxu0 0.0
        %2710 = vmatpush1.xpose.msra.mxu0 0.0
        %2711 = vmatprep.subr.mxu0 0.0
        %2712 = vmatpush1.xpose.msra.mxu0 0.0
        %2713 = vmatprep.mubr.f32.mxu0 0.0
        %2714 = vmatmul.mubr.f32.gmra.mrb[0].mxu0 %v2645
        %v2715 = vpop.f32.mrb[0].mxu0
        %v2716 = vadd.f32 0.0, %v2715
        %v2717 = vpop.f32.mrb[0].mxu0
        %2718 = vdwg.mxu0
        %v2719 = vsel %vm746, %v2716, -inf
        %2720 = vmax.xlane.f32.xlu0 %v2719
        %v2721 = vpop.xlane.xlu0 %2720
        %v2722 = vsub.f32 %v2716, %v2721
        %v2723 = vmul.f32 %v2722, 1.442695
        %v2724 = vpow.pop %v2723
        %v2725 = vsel %vm746, %v2724, 0.0
        %2726 = vadd.xlane.f32.xlu0 %v2725
        %v2727 = vpop.xlane.xlu0 %2726
        %v2728 = vrcp.pop %v2727
        %v2729 = vmul.f32 %v2724, %v2728
        %2731 = vrot.lane.b32.xlu0 %v2473, 120
        %v2732 = vpop.permute.xlu0 %2731
        %v2735 = vsel %vm746, %v2729, 0
        %2737 = vmatprep.subr.mxu0 0.0
        %2738 = vmatpush1.msra.mxu0 %v2732
        %2739 = vmatprep.subr.mxu0 0.0
        %2740 = vmatpush1.msra.mxu0 0.0
        %2741 = vmatprep.subr.mxu0 0.0
        %2742 = vmatpush1.msra.mxu0 0.0
        %2743 = vmatprep.subr.mxu0 0.0
        %2744 = vmatpush1.msra.mxu0 0.0
        %2745 = vmatprep.subr.mxu0 0.0
        %2746 = vmatpush1.msra.mxu0 0.0
        %2747 = vmatprep.subr.mxu0 0.0
        %2748 = vmatpush1.msra.mxu0 0.0
        %2749 = vmatprep.subr.mxu0 0.0
        %2750 = vmatpush1.msra.mxu0 0.0
        %2751 = vmatprep.subr.mxu0 0.0
        %2752 = vmatpush1.msra.mxu0 0.0
        %2753 = vmatprep.subr.mxu0 0.0
        %2754 = vmatpush1.msra.mxu0 0.0
        %2755 = vmatprep.subr.mxu0 0.0
        %2756 = vmatpush1.msra.mxu0 0.0
        %2757 = vmatprep.subr.mxu0 0.0
        %2758 = vmatpush1.msra.mxu0 0.0
        %2759 = vmatprep.subr.mxu0 0.0
        %2760 = vmatpush1.msra.mxu0 0.0
        %2761 = vmatprep.subr.mxu0 0.0
        %2762 = vmatpush1.msra.mxu0 0.0
        %2763 = vmatprep.subr.mxu0 0.0
        %2764 = vmatpush1.msra.mxu0 0.0
        %2765 = vmatprep.subr.mxu0 0.0
        %2766 = vmatpush1.msra.mxu0 0.0
        %2767 = vmatprep.subr.mxu0 0.0
        %2768 = vmatpush1.msra.mxu0 0.0
        %2769 = vmatprep.subr.mxu0 0.0
        %2770 = vmatpush1.msra.mxu0 0.0
        %2771 = vmatprep.subr.mxu0 0.0
        %2772 = vmatpush1.msra.mxu0 0.0
        %2773 = vmatprep.subr.mxu0 0.0
        %2774 = vmatpush1.msra.mxu0 0.0
        %2775 = vmatprep.subr.mxu0 0.0
        %2776 = vmatpush1.msra.mxu0 0.0
        %2777 = vmatprep.subr.mxu0 0.0
        %2778 = vmatpush1.msra.mxu0 0.0
        %2779 = vmatprep.subr.mxu0 0.0
        %2780 = vmatpush1.msra.mxu0 0.0
        %2781 = vmatprep.subr.mxu0 0.0
        %2782 = vmatpush1.msra.mxu0 0.0
        %2783 = vmatprep.subr.mxu0 0.0
        %2784 = vmatpush1.msra.mxu0 0.0
        %2785 = vmatprep.subr.mxu0 0.0
        %2786 = vmatpush1.msra.mxu0 0.0
        %2787 = vmatprep.subr.mxu0 0.0
        %2788 = vmatpush1.msra.mxu0 0.0
        %2789 = vmatprep.subr.mxu0 0.0
        %2790 = vmatpush1.msra.mxu0 0.0
        %2791 = vmatprep.subr.mxu0 0.0
        %2792 = vmatpush1.msra.mxu0 0.0
        %2793 = vmatprep.subr.mxu0 0.0
        %2794 = vmatpush1.msra.mxu0 0.0
        %2795 = vmatprep.subr.mxu0 0.0
        %2796 = vmatpush1.msra.mxu0 0.0
        %2797 = vmatprep.subr.mxu0 0.0
        %2798 = vmatpush1.msra.mxu0 0.0
        %2799 = vmatprep.subr.mxu0 0.0
        %2800 = vmatpush1.msra.mxu0 0.0
        %2801 = vmatprep.mubr.f32.mxu0 0.0
        %2802 = vmatmul.mubr.f32.gmra.mrb[0].mxu0 %v2735
        %v2803 = vpop.f32.mrb[0].mxu0
        %v2804 = vadd.f32 0.0, %v2803
        %v2805 = vpop.f32.mrb[0].mxu0
        %2806 = vdwg.mxu0
        %2807 = vrot.lane.b32.xlu0 %v2317, 112
        %v2808 = vpop.permute.xlu0 %2807
        %2809 = vrot.lane.b32.xlu0 %v2398, 112
        %v2810 = vpop.permute.xlu0 %2809
        %v2811 = vsel %vm746, %v2808, 0
        %v2813 = vsel %vm746, %v2810, 0
        %2815 = vmatprep.subr.mxu0 0.0
        %2816 = vmatpush1.xpose.msra.mxu0 %v2813
        %2817 = vmatprep.subr.mxu0 0.0
        %2818 = vmatpush1.xpose.msra.mxu0 0.0
        %2819 = vmatprep.subr.mxu0 0.0
        %2820 = vmatpush1.xpose.msra.mxu0 0.0
        %2821 = vmatprep.subr.mxu0 0.0
        %2822 = vmatpush1.xpose.msra.mxu0 0.0
        %2823 = vmatprep.subr.mxu0 0.0
        %2824 = vmatpush1.xpose.msra.mxu0 0.0
        %2825 = vmatprep.subr.mxu0 0.0
        %2826 = vmatpush1.xpose.msra.mxu0 0.0
        %2827 = vmatprep.subr.mxu0 0.0
        %2828 = vmatpush1.xpose.msra.mxu0 0.0
        %2829 = vmatprep.subr.mxu0 0.0
        %2830 = vmatpush1.xpose.msra.mxu0 0.0
        %2831 = vmatprep.subr.mxu0 0.0
        %2832 = vmatpush1.xpose.msra.mxu0 0.0
        %2833 = vmatprep.subr.mxu0 0.0
        %2834 = vmatpush1.xpose.msra.mxu0 0.0
        %2835 = vmatprep.subr.mxu0 0.0
        %2836 = vmatpush1.xpose.msra.mxu0 0.0
        %2837 = vmatprep.subr.mxu0 0.0
        %2838 = vmatpush1.xpose.msra.mxu0 0.0
        %2839 = vmatprep.subr.mxu0 0.0
        %2840 = vmatpush1.xpose.msra.mxu0 0.0
        %2841 = vmatprep.subr.mxu0 0.0
        %2842 = vmatpush1.xpose.msra.mxu0 0.0
        %2843 = vmatprep.subr.mxu0 0.0
        %2844 = vmatpush1.xpose.msra.mxu0 0.0
        %2845 = vmatprep.subr.mxu0 0.0
        %2846 = vmatpush1.xpose.msra.mxu0 0.0
        %2847 = vmatprep.subr.mxu0 0.0
        %2848 = vmatpush1.xpose.msra.mxu0 0.0
        %2849 = vmatprep.subr.mxu0 0.0
        %2850 = vmatpush1.xpose.msra.mxu0 0.0
        %2851 = vmatprep.subr.mxu0 0.0
        %2852 = vmatpush1.xpose.msra.mxu0 0.0
        %2853 = vmatprep.subr.mxu0 0.0
        %2854 = vmatpush1.xpose.msra.mxu0 0.0
        %2855 = vmatprep.subr.mxu0 0.0
        %2856 = vmatpush1.xpose.msra.mxu0 0.0
        %2857 = vmatprep.subr.mxu0 0.0
        %2858 = vmatpush1.xpose.msra.mxu0 0.0
        %2859 = vmatprep.subr.mxu0 0.0
        %2860 = vmatpush1.xpose.msra.mxu0 0.0
        %2861 = vmatprep.subr.mxu0 0.0
        %2862 = vmatpush1.xpose.msra.mxu0 0.0
        %2863 = vmatprep.subr.mxu0 0.0
        %2864 = vmatpush1.xpose.msra.mxu0 0.0
        %2865 = vmatprep.subr.mxu0 0.0
        %2866 = vmatpush1.xpose.msra.mxu0 0.0
        %2867 = vmatprep.subr.mxu0 0.0
        %2868 = vmatpush1.xpose.msra.mxu0 0.0
        %2869 = vmatprep.subr.mxu0 0.0
        %2870 = vmatpush1.xpose.msra.mxu0 0.0
        %2871 = vmatprep.subr.mxu0 0.0
        %2872 = vmatpush1.xpose.msra.mxu0 0.0
        %2873 = vmatprep.subr.mxu0 0.0
        %2874 = vmatpush1.xpose.msra.mxu0 0.0
        %2875 = vmatprep.subr.mxu0 0.0
        %2876 = vmatpush1.xpose.msra.mxu0 0.0
        %2877 = vmatprep.subr.mxu0 0.0
        %2878 = vmatpush1.xpose.msra.mxu0 0.0
        %2879 = vmatprep.mubr.f32.mxu0 0.0
        %2880 = vmatmul.mubr.f32.gmra.mrb[0].mxu0 %v2811
        %v2881 = vpop.f32.mrb[0].mxu0
        %v2882 = vadd.f32 0.0, %v2881
        %v2883 = vpop.f32.mrb[0].mxu0
        %2884 = vdwg.mxu0
        %v2885 = vsel %vm746, %v2882, -inf
        %2886 = vmax.xlane.f32.xlu0 %v2885
        %v2887 = vpop.xlane.xlu0 %2886
        %v2888 = vsub.f32 %v2882, %v2887
        %v2889 = vmul.f32 %v2888, 1.442695
        %v2890 = vpow.pop %v2889
        %v2891 = vsel %vm746, %v2890, 0.0
        %2892 = vadd.xlane.f32.xlu0 %v2891
        %v2893 = vpop.xlane.xlu0 %2892
        %v2894 = vrcp.pop %v2893
        %v2895 = vmul.f32 %v2890, %v2894
        %2896 = vrot.lane.b32.xlu0 %v2473, 112
        %v2897 = vpop.permute.xlu0 %2896
        %v2900 = vsel %vm746, %v2895, 0
        %2902 = vmatprep.subr.mxu0 0.0
        %2903 = vmatpush1.msra.mxu0 %v2897
        %2904 = vmatprep.subr.mxu0 0.0
        %2905 = vmatpush1.msra.mxu0 0.0
        %2906 = vmatprep.subr.mxu0 0.0
        %2907 = vmatpush1.msra.mxu0 0.0
        %2908 = vmatprep.subr.mxu0 0.0
        %2909 = vmatpush1.msra.mxu0 0.0
        %2910 = vmatprep.subr.mxu0 0.0
        %2911 = vmatpush1.msra.mxu0 0.0
        %2912 = vmatprep.subr.mxu0 0.0
        %2913 = vmatpush1.msra.mxu0 0.0
        %2914 = vmatprep.subr.mxu0 0.0
        %2915 = vmatpush1.msra.mxu0 0.0
        %2916 = vmatprep.subr.mxu0 0.0
        %2917 = vmatpush1.msra.mxu0 0.0
        %2918 = vmatprep.subr.mxu0 0.0
        %2919 = vmatpush1.msra.mxu0 0.0
        %2920 = vmatprep.subr.mxu0 0.0
        %2921 = vmatpush1.msra.mxu0 0.0
        %2922 = vmatprep.subr.mxu0 0.0
        %2923 = vmatpush1.msra.mxu0 0.0
        %2924 = vmatprep.subr.mxu0 0.0
        %2925 = vmatpush1.msra.mxu0 0.0
        %2926 = vmatprep.subr.mxu0 0.0
        %2927 = vmatpush1.msra.mxu0 0.0
        %2928 = vmatprep.subr.mxu0 0.0
        %2929 = vmatpush1.msra.mxu0 0.0
        %2930 = vmatprep.subr.mxu0 0.0
        %2931 = vmatpush1.msra.mxu0 0.0
        %2932 = vmatprep.subr.mxu0 0.0
        %2933 = vmatpush1.msra.mxu0 0.0
        %2934 = vmatprep.subr.mxu0 0.0
        %2935 = vmatpush1.msra.mxu0 0.0
        %2936 = vmatprep.subr.mxu0 0.0
        %2937 = vmatpush1.msra.mxu0 0.0
        %2938 = vmatprep.subr.mxu0 0.0
        %2939 = vmatpush1.msra.mxu0 0.0
        %2940 = vmatprep.subr.mxu0 0.0
        %2941 = vmatpush1.msra.mxu0 0.0
        %2942 = vmatprep.subr.mxu0 0.0
        %2943 = vmatpush1.msra.mxu0 0.0
        %2944 = vmatprep.subr.mxu0 0.0
        %2945 = vmatpush1.msra.mxu0 0.0
        %2946 = vmatprep.subr.mxu0 0.0
        %2947 = vmatpush1.msra.mxu0 0.0
        %2948 = vmatprep.subr.mxu0 0.0
        %2949 = vmatpush1.msra.mxu0 0.0
        %2950 = vmatprep.subr.mxu0 0.0
        %2951 = vmatpush1.msra.mxu0 0.0
        %2952 = vmatprep.subr.mxu0 0.0
        %2953 = vmatpush1.msra.mxu0 0.0
        %2954 = vmatprep.subr.mxu0 0.0
        %2955 = vmatpush1.msra.mxu0 0.0
        %2956 = vmatprep.subr.mxu0 0.0
        %2957 = vmatpush1.msra.mxu0 0.0
        %2958 = vmatprep.subr.mxu0 0.0
        %2959 = vmatpush1.msra.mxu0 0.0
        %2960 = vmatprep.subr.mxu0 0.0
        %2961 = vmatpush1.msra.mxu0 0.0
        %2962 = vmatprep.subr.mxu0 0.0
        %2963 = vmatpush1.msra.mxu0 0.0
        %2964 = vmatprep.subr.mxu0 0.0
        %2965 = vmatpush1.msra.mxu0 0.0
        %2966 = vmatprep.mubr.f32.mxu0 0.0
        %2967 = vmatmul.mubr.f32.gmra.mrb[0].mxu0 %v2900
        %v2968 = vpop.f32.mrb[0].mxu0
        %v2969 = vadd.f32 0.0, %v2968
        %v2970 = vpop.f32.mrb[0].mxu0
        %2971 = vdwg.mxu0
        %2972 = vrot.lane.b32.xlu0 %v2317, 104
        %v2973 = vpop.permute.xlu0 %2972
        %2974 = vrot.lane.b32.xlu0 %v2398, 104
        %v2975 = vpop.permute.xlu0 %2974
        %v2976 = vsel %vm746, %v2973, 0
        %v2978 = vsel %vm746, %v2975, 0
        %2980 = vmatprep.subr.mxu0 0.0
        %2981 = vmatpush1.xpose.msra.mxu0 %v2978
        %2982 = vmatprep.subr.mxu0 0.0
        %2983 = vmatpush1.xpose.msra.mxu0 0.0
        %2984 = vmatprep.subr.mxu0 0.0
        %2985 = vmatpush1.xpose.msra.mxu0 0.0
        %2986 = vmatprep.subr.mxu0 0.0
        %2987 = vmatpush1.xpose.msra.mxu0 0.0
        %2988 = vmatprep.subr.mxu0 0.0
        %2989 = vmatpush1.xpose.msra.mxu0 0.0
        %2990 = vmatprep.subr.mxu0 0.0
        %2991 = vmatpush1.xpose.msra.mxu0 0.0
        %2992 = vmatprep.subr.mxu0 0.0
        %2993 = vmatpush1.xpose.msra.mxu0 0.0
        %2994 = vmatprep.subr.mxu0 0.0
        %2995 = vmatpush1.xpose.msra.mxu0 0.0
        %2996 = vmatprep.subr.mxu0 0.0
        %2997 = vmatpush1.xpose.msra.mxu0 0.0
        %2998 = vmatprep.subr.mxu0 0.0
        %2999 = vmatpush1.xpose.msra.mxu0 0.0
        %3000 = vmatprep.subr.mxu0 0.0
        %3001 = vmatpush1.xpose.msra.mxu0 0.0
        %3002 = vmatprep.subr.mxu0 0.0
        %3003 = vmatpush1.xpose.msra.mxu0 0.0
        %3004 = vmatprep.subr.mxu0 0.0
        %3005 = vmatpush1.xpose.msra.mxu0 0.0
        %3006 = vmatprep.subr.mxu0 0.0
        %3007 = vmatpush1.xpose.msra.mxu0 0.0
        %3008 = vmatprep.subr.mxu0 0.0
        %3009 = vmatpush1.xpose.msra.mxu0 0.0
        %3010 = vmatprep.subr.mxu0 0.0
        %3011 = vmatpush1.xpose.msra.mxu0 0.0
        %3012 = vmatprep.subr.mxu0 0.0
        %3013 = vmatpush1.xpose.msra.mxu0 0.0
        %3014 = vmatprep.subr.mxu0 0.0
        %3015 = vmatpush1.xpose.msra.mxu0 0.0
        %3016 = vmatprep.subr.mxu0 0.0
        %3017 = vmatpush1.xpose.msra.mxu0 0.0
        %3018 = vmatprep.subr.mxu0 0.0
        %3019 = vmatpush1.xpose.msra.mxu0 0.0
        %3020 = vmatprep.subr.mxu0 0.0
        %3021 = vmatpush1.xpose.msra.mxu0 0.0
        %3022 = vmatprep.subr.mxu0 0.0
        %3023 = vmatpush1.xpose.msra.mxu0 0.0
        %3024 = vmatprep.subr.mxu0 0.0
        %3025 = vmatpush1.xpose.msra.mxu0 0.0
        %3026 = vmatprep.subr.mxu0 0.0
        %3027 = vmatpush1.xpose.msra.mxu0 0.0
        %3028 = vmatprep.subr.mxu0 0.0
        %3029 = vmatpush1.xpose.msra.mxu0 0.0
        %3030 = vmatprep.subr.mxu0 0.0
        %3031 = vmatpush1.xpose.msra.mxu0 0.0
        %3032 = vmatprep.subr.mxu0 0.0
        %3033 = vmatpush1.xpose.msra.mxu0 0.0
        %3034 = vmatprep.subr.mxu0 0.0
        %3035 = vmatpush1.xpose.msra.mxu0 0.0
        %3036 = vmatprep.subr.mxu0 0.0
        %3037 = vmatpush1.xpose.msra.mxu0 0.0
        %3038 = vmatprep.subr.mxu0 0.0
        %3039 = vmatpush1.xpose.msra.mxu0 0.0
        %3040 = vmatprep.subr.mxu0 0.0
        %3041 = vmatpush1.xpose.msra.mxu0 0.0
        %3042 = vmatprep.subr.mxu0 0.0
        %3043 = vmatpush1.xpose.msra.mxu0 0.0
        %3044 = vmatprep.mubr.f32.mxu0 0.0
        %3045 = vmatmul.mubr.f32.gmra.mrb[0].mxu0 %v2976
        %v3046 = vpop.f32.mrb[0].mxu0
        %v3047 = vadd.f32 0.0, %v3046
        %v3048 = vpop.f32.mrb[0].mxu0
        %3049 = vdwg.mxu0
        %v3050 = vsel %vm746, %v3047, -inf
        %3051 = vmax.xlane.f32.xlu0 %v3050
        %v3052 = vpop.xlane.xlu0 %3051
        %v3053 = vsub.f32 %v3047, %v3052
        %v3054 = vmul.f32 %v3053, 1.442695
        %v3055 = vpow.pop %v3054
        %v3056 = vsel %vm746, %v3055, 0.0
        %3057 = vadd.xlane.f32.xlu0 %v3056
        %v3058 = vpop.xlane.xlu0 %3057
        %v3059 = vrcp.pop %v3058
        %v3060 = vmul.f32 %v3055, %v3059
        %3061 = vrot.lane.b32.xlu0 %v2473, 104
        %v3062 = vpop.permute.xlu0 %3061
        %v3065 = vsel %vm746, %v3060, 0
        %3067 = vmatprep.subr.mxu0 0.0
        %3068 = vmatpush1.msra.mxu0 %v3062
        %3069 = vmatprep.subr.mxu0 0.0
        %3070 = vmatpush1.msra.mxu0 0.0
        %3071 = vmatprep.subr.mxu0 0.0
        %3072 = vmatpush1.msra.mxu0 0.0
        %3073 = vmatprep.subr.mxu0 0.0
        %3074 = vmatpush1.msra.mxu0 0.0
        %3075 = vmatprep.subr.mxu0 0.0
        %3076 = vmatpush1.msra.mxu0 0.0
        %3077 = vmatprep.subr.mxu0 0.0
        %3078 = vmatpush1.msra.mxu0 0.0
        %3079 = vmatprep.subr.mxu0 0.0
        %3080 = vmatpush1.msra.mxu0 0.0
        %3081 = vmatprep.subr.mxu0 0.0
        %3082 = vmatpush1.msra.mxu0 0.0
        %3083 = vmatprep.subr.mxu0 0.0
        %3084 = vmatpush1.msra.mxu0 0.0
        %3085 = vmatprep.subr.mxu0 0.0
        %3086 = vmatpush1.msra.mxu0 0.0
        %3087 = vmatprep.subr.mxu0 0.0
        %3088 = vmatpush1.msra.mxu0 0.0
        %3089 = vmatprep.subr.mxu0 0.0
        %3090 = vmatpush1.msra.mxu0 0.0
        %3091 = vmatprep.subr.mxu0 0.0
        %3092 = vmatpush1.msra.mxu0 0.0
        %3093 = vmatprep.subr.mxu0 0.0
        %3094 = vmatpush1.msra.mxu0 0.0
        %3095 = vmatprep.subr.mxu0 0.0
        %3096 = vmatpush1.msra.mxu0 0.0
        %3097 = vmatprep.subr.mxu0 0.0
        %3098 = vmatpush1.msra.mxu0 0.0
        %3099 = vmatprep.subr.mxu0 0.0
        %3100 = vmatpush1.msra.mxu0 0.0
        %3101 = vmatprep.subr.mxu0 0.0
        %3102 = vmatpush1.msra.mxu0 0.0
        %3103 = vmatprep.subr.mxu0 0.0
        %3104 = vmatpush1.msra.mxu0 0.0
        %3105 = vmatprep.subr.mxu0 0.0
        %3106 = vmatpush1.msra.mxu0 0.0
        %3107 = vmatprep.subr.mxu0 0.0
        %3108 = vmatpush1.msra.mxu0 0.0
        %3109 = vmatprep.subr.mxu0 0.0
        %3110 = vmatpush1.msra.mxu0 0.0
        %3111 = vmatprep.subr.mxu0 0.0
        %3112 = vmatpush1.msra.mxu0 0.0
        %3113 = vmatprep.subr.mxu0 0.0
        %3114 = vmatpush1.msra.mxu0 0.0
        %3115 = vmatprep.subr.mxu0 0.0
        %3116 = vmatpush1.msra.mxu0 0.0
        %3117 = vmatprep.subr.mxu0 0.0
        %3118 = vmatpush1.msra.mxu0 0.0
        %3119 = vmatprep.subr.mxu0 0.0
        %3120 = vmatpush1.msra.mxu0 0.0
        %3121 = vmatprep.subr.mxu0 0.0
        %3122 = vmatpush1.msra.mxu0 0.0
        %3123 = vmatprep.subr.mxu0 0.0
        %3124 = vmatpush1.msra.mxu0 0.0
        %3125 = vmatprep.subr.mxu0 0.0
        %3126 = vmatpush1.msra.mxu0 0.0
        %3127 = vmatprep.subr.mxu0 0.0
        %3128 = vmatpush1.msra.mxu0 0.0
        %3129 = vmatprep.subr.mxu0 0.0
        %3130 = vmatpush1.msra.mxu0 0.0
        %3131 = vmatprep.mubr.f32.mxu0 0.0
        %3132 = vmatmul.mubr.f32.gmra.mrb[0].mxu0 %v3065
        %v3133 = vpop.f32.mrb[0].mxu0
        %v3134 = vadd.f32 0.0, %v3133
        %v3135 = vpop.f32.mrb[0].mxu0
        %3136 = vdwg.mxu0
        %3138 = vrot.lane.b32.xlu0 %v2804, 8
        %v3139 = vpop.permute.xlu0 %3138
        %3142 = vrot.lane.b32.xlu0 %v2969, 16
        %v3143 = vpop.permute.xlu0 %3142
        %3146 = vrot.lane.b32.xlu0 %v3134, 24
        %v3147 = vpop.permute.xlu0 %3146
        %v3149 = vsel %vm746, %v2638, %v3139
        %v3150 = vsel %vm1420, %v3149, %v3143
        %v3151 = vsel %vm1422, %v3150, %v3147
        %v3153 = vsel %vm746, %v2322, 0
        %v3156 = vsel %vm746, %v2403, 0
        %3158 = vmatprep.subr.mxu0 0.0
        %3159 = vmatpush1.xpose.msra.mxu0 %v3156
        %3160 = vmatprep.subr.mxu0 0.0
        %3161 = vmatpush1.xpose.msra.mxu0 0.0
        %3162 = vmatprep.subr.mxu0 0.0
        %3163 = vmatpush1.xpose.msra.mxu0 0.0
        %3164 = vmatprep.subr.mxu0 0.0
        %3165 = vmatpush1.xpose.msra.mxu0 0.0
        %3166 = vmatprep.subr.mxu0 0.0
        %3167 = vmatpush1.xpose.msra.mxu0 0.0
        %3168 = vmatprep.subr.mxu0 0.0
        %3169 = vmatpush1.xpose.msra.mxu0 0.0
        %3170 = vmatprep.subr.mxu0 0.0
        %3171 = vmatpush1.xpose.msra.mxu0 0.0
        %3172 = vmatprep.subr.mxu0 0.0
        %3173 = vmatpush1.xpose.msra.mxu0 0.0
        %3174 = vmatprep.subr.mxu0 0.0
        %3175 = vmatpush1.xpose.msra.mxu0 0.0
        %3176 = vmatprep.subr.mxu0 0.0
        %3177 = vmatpush1.xpose.msra.mxu0 0.0
        %3178 = vmatprep.subr.mxu0 0.0
        %3179 = vmatpush1.xpose.msra.mxu0 0.0
        %3180 = vmatprep.subr.mxu0 0.0
        %3181 = vmatpush1.xpose.msra.mxu0 0.0
        %3182 = vmatprep.subr.mxu0 0.0
        %3183 = vmatpush1.xpose.msra.mxu0 0.0
        %3184 = vmatprep.subr.mxu0 0.0
        %3185 = vmatpush1.xpose.msra.mxu0 0.0
        %3186 = vmatprep.subr.mxu0 0.0
        %3187 = vmatpush1.xpose.msra.mxu0 0.0
        %3188 = vmatprep.subr.mxu0 0.0
        %3189 = vmatpush1.xpose.msra.mxu0 0.0
        %3190 = vmatprep.subr.mxu0 0.0
        %3191 = vmatpush1.xpose.msra.mxu0 0.0
        %3192 = vmatprep.subr.mxu0 0.0
        %3193 = vmatpush1.xpose.msra.mxu0 0.0
        %3194 = vmatprep.subr.mxu0 0.0
        %3195 = vmatpush1.xpose.msra.mxu0 0.0
        %3196 = vmatprep.subr.mxu0 0.0
        %3197 = vmatpush1.xpose.msra.mxu0 0.0
        %3198 = vmatprep.subr.mxu0 0.0
        %3199 = vmatpush1.xpose.msra.mxu0 0.0
        %3200 = vmatprep.subr.mxu0 0.0
        %3201 = vmatpush1.xpose.msra.mxu0 0.0
        %3202 = vmatprep.subr.mxu0 0.0
        %3203 = vmatpush1.xpose.msra.mxu0 0.0
        %3204 = vmatprep.subr.mxu0 0.0
        %3205 = vmatpush1.xpose.msra.mxu0 0.0
        %3206 = vmatprep.subr.mxu0 0.0
        %3207 = vmatpush1.xpose.msra.mxu0 0.0
        %3208 = vmatprep.subr.mxu0 0.0
        %3209 = vmatpush1.xpose.msra.mxu0 0.0
        %3210 = vmatprep.subr.mxu0 0.0
        %3211 = vmatpush1.xpose.msra.mxu0 0.0
        %3212 = vmatprep.subr.mxu0 0.0
        %3213 = vmatpush1.xpose.msra.mxu0 0.0
        %3214 = vmatprep.subr.mxu0 0.0
        %3215 = vmatpush1.xpose.msra.mxu0 0.0
        %3216 = vmatprep.subr.mxu0 0.0
        %3217 = vmatpush1.xpose.msra.mxu0 0.0
        %3218 = vmatprep.subr.mxu0 0.0
        %3219 = vmatpush1.xpose.msra.mxu0 0.0
        %3220 = vmatprep.subr.mxu0 0.0
        %3221 = vmatpush1.xpose.msra.mxu0 0.0
        %3222 = vmatprep.mubr.f32.mxu0 0.0
        %3223 = vmatmul.mubr.f32.gmra.mrb[0].mxu0 %v3153
        %v3224 = vpop.f32.mrb[0].mxu0
        %v3225 = vadd.f32 0.0, %v3224
        %v3226 = vpop.f32.mrb[0].mxu0
        %3227 = vdwg.mxu0
        %v3228 = vsel %vm746, %v3225, -inf
        %3229 = vmax.xlane.f32.xlu0 %v3228
        %v3230 = vpop.xlane.xlu0 %3229
        %v3231 = vsub.f32 %v3225, %v3230
        %v3232 = vmul.f32 %v3231, 1.442695
        %v3233 = vpow.pop %v3232
        %v3234 = vsel %vm746, %v3233, 0.0
        %3235 = vadd.xlane.f32.xlu0 %v3234
        %v3236 = vpop.xlane.xlu0 %3235
        %v3237 = vrcp.pop %v3236
        %v3238 = vmul.f32 %v3233, %v3237
        %v3240 = vsel %vm746, %v3238, 0
        %3242 = vmatprep.subr.mxu0 0.0
        %3243 = vmatpush1.msra.mxu0 %v2478
        %3244 = vmatprep.subr.mxu0 0.0
        %3245 = vmatpush1.msra.mxu0 0.0
        %3246 = vmatprep.subr.mxu0 0.0
        %3247 = vmatpush1.msra.mxu0 0.0
        %3248 = vmatprep.subr.mxu0 0.0
        %3249 = vmatpush1.msra.mxu0 0.0
        %3250 = vmatprep.subr.mxu0 0.0
        %3251 = vmatpush1.msra.mxu0 0.0
        %3252 = vmatprep.subr.mxu0 0.0
        %3253 = vmatpush1.msra.mxu0 0.0
        %3254 = vmatprep.subr.mxu0 0.0
        %3255 = vmatpush1.msra.mxu0 0.0
        %3256 = vmatprep.subr.mxu0 0.0
        %3257 = vmatpush1.msra.mxu0 0.0
        %3258 = vmatprep.subr.mxu0 0.0
        %3259 = vmatpush1.msra.mxu0 0.0
        %3260 = vmatprep.subr.mxu0 0.0
        %3261 = vmatpush1.msra.mxu0 0.0
        %3262 = vmatprep.subr.mxu0 0.0
        %3263 = vmatpush1.msra.mxu0 0.0
        %3264 = vmatprep.subr.mxu0 0.0
        %3265 = vmatpush1.msra.mxu0 0.0
        %3266 = vmatprep.subr.mxu0 0.0
        %3267 = vmatpush1.msra.mxu0 0.0
        %3268 = vmatprep.subr.mxu0 0.0
        %3269 = vmatpush1.msra.mxu0 0.0
        %3270 = vmatprep.subr.mxu0 0.0
        %3271 = vmatpush1.msra.mxu0 0.0
        %3272 = vmatprep.subr.mxu0 0.0
        %3273 = vmatpush1.msra.mxu0 0.0
        %3274 = vmatprep.subr.mxu0 0.0
        %3275 = vmatpush1.msra.mxu0 0.0
        %3276 = vmatprep.subr.mxu0 0.0
        %3277 = vmatpush1.msra.mxu0 0.0
        %3278 = vmatprep.subr.mxu0 0.0
        %3279 = vmatpush1.msra.mxu0 0.0
        %3280 = vmatprep.subr.mxu0 0.0
        %3281 = vmatpush1.msra.mxu0 0.0
        %3282 = vmatprep.subr.mxu0 0.0
        %3283 = vmatpush1.msra.mxu0 0.0
        %3284 = vmatprep.subr.mxu0 0.0
        %3285 = vmatpush1.msra.mxu0 0.0
        %3286 = vmatprep.subr.mxu0 0.0
        %3287 = vmatpush1.msra.mxu0 0.0
        %3288 = vmatprep.subr.mxu0 0.0
        %3289 = vmatpush1.msra.mxu0 0.0
        %3290 = vmatprep.subr.mxu0 0.0
        %3291 = vmatpush1.msra.mxu0 0.0
        %3292 = vmatprep.subr.mxu0 0.0
        %3293 = vmatpush1.msra.mxu0 0.0
        %3294 = vmatprep.subr.mxu0 0.0
        %3295 = vmatpush1.msra.mxu0 0.0
        %3296 = vmatprep.subr.mxu0 0.0
        %3297 = vmatpush1.msra.mxu0 0.0
        %3298 = vmatprep.subr.mxu0 0.0
        %3299 = vmatpush1.msra.mxu0 0.0
        %3300 = vmatprep.subr.mxu0 0.0
        %3301 = vmatpush1.msra.mxu0 0.0
        %3302 = vmatprep.subr.mxu0 0.0
        %3303 = vmatpush1.msra.mxu0 0.0
        %3304 = vmatprep.subr.mxu0 0.0
        %3305 = vmatpush1.msra.mxu0 0.0
        %3306 = vmatprep.mubr.f32.mxu0 0.0
        %3307 = vmatmul.mubr.f32.gmra.mrb[0].mxu0 %v3240
        %v3308 = vpop.f32.mrb[0].mxu0
        %v3309 = vadd.f32 0.0, %v3308
        %v3310 = vpop.f32.mrb[0].mxu0
        %3311 = vdwg.mxu0
        %3312 = vrot.lane.b32.xlu0 %v2322, 120
        %v3313 = vpop.permute.xlu0 %3312
        %3314 = vrot.lane.b32.xlu0 %v2403, 120
        %v3315 = vpop.permute.xlu0 %3314
        %v3316 = vsel %vm746, %v3313, 0
        %v3318 = vsel %vm746, %v3315, 0
        %3320 = vmatprep.subr.mxu0 0.0
        %3321 = vmatpush1.xpose.msra.mxu0 %v3318
        %3322 = vmatprep.subr.mxu0 0.0
        %3323 = vmatpush1.xpose.msra.mxu0 0.0
        %3324 = vmatprep.subr.mxu0 0.0
        %3325 = vmatpush1.xpose.msra.mxu0 0.0
        %3326 = vmatprep.subr.mxu0 0.0
        %3327 = vmatpush1.xpose.msra.mxu0 0.0
        %3328 = vmatprep.subr.mxu0 0.0
        %3329 = vmatpush1.xpose.msra.mxu0 0.0
        %3330 = vmatprep.subr.mxu0 0.0
        %3331 = vmatpush1.xpose.msra.mxu0 0.0
        %3332 = vmatprep.subr.mxu0 0.0
        %3333 = vmatpush1.xpose.msra.mxu0 0.0
        %3334 = vmatprep.subr.mxu0 0.0
        %3335 = vmatpush1.xpose.msra.mxu0 0.0
        %3336 = vmatprep.subr.mxu0 0.0
        %3337 = vmatpush1.xpose.msra.mxu0 0.0
        %3338 = vmatprep.subr.mxu0 0.0
        %3339 = vmatpush1.xpose.msra.mxu0 0.0
        %3340 = vmatprep.subr.mxu0 0.0
        %3341 = vmatpush1.xpose.msra.mxu0 0.0
        %3342 = vmatprep.subr.mxu0 0.0
        %3343 = vmatpush1.xpose.msra.mxu0 0.0
        %3344 = vmatprep.subr.mxu0 0.0
        %3345 = vmatpush1.xpose.msra.mxu0 0.0
        %3346 = vmatprep.subr.mxu0 0.0
        %3347 = vmatpush1.xpose.msra.mxu0 0.0
        %3348 = vmatprep.subr.mxu0 0.0
        %3349 = vmatpush1.xpose.msra.mxu0 0.0
        %3350 = vmatprep.subr.mxu0 0.0
        %3351 = vmatpush1.xpose.msra.mxu0 0.0
        %3352 = vmatprep.subr.mxu0 0.0
        %3353 = vmatpush1.xpose.msra.mxu0 0.0
        %3354 = vmatprep.subr.mxu0 0.0
        %3355 = vmatpush1.xpose.msra.mxu0 0.0
        %3356 = vmatprep.subr.mxu0 0.0
        %3357 = vmatpush1.xpose.msra.mxu0 0.0
        %3358 = vmatprep.subr.mxu0 0.0
        %3359 = vmatpush1.xpose.msra.mxu0 0.0
        %3360 = vmatprep.subr.mxu0 0.0
        %3361 = vmatpush1.xpose.msra.mxu0 0.0
        %3362 = vmatprep.subr.mxu0 0.0
        %3363 = vmatpush1.xpose.msra.mxu0 0.0
        %3364 = vmatprep.subr.mxu0 0.0
        %3365 = vmatpush1.xpose.msra.mxu0 0.0
        %3366 = vmatprep.subr.mxu0 0.0
        %3367 = vmatpush1.xpose.msra.mxu0 0.0
        %3368 = vmatprep.subr.mxu0 0.0
        %3369 = vmatpush1.xpose.msra.mxu0 0.0
        %3370 = vmatprep.subr.mxu0 0.0
        %3371 = vmatpush1.xpose.msra.mxu0 0.0
        %3372 = vmatprep.subr.mxu0 0.0
        %3373 = vmatpush1.xpose.msra.mxu0 0.0
        %3374 = vmatprep.subr.mxu0 0.0
        %3375 = vmatpush1.xpose.msra.mxu0 0.0
        %3376 = vmatprep.subr.mxu0 0.0
        %3377 = vmatpush1.xpose.msra.mxu0 0.0
        %3378 = vmatprep.subr.mxu0 0.0
        %3379 = vmatpush1.xpose.msra.mxu0 0.0
        %3380 = vmatprep.subr.mxu0 0.0
        %3381 = vmatpush1.xpose.msra.mxu0 0.0
        %3382 = vmatprep.subr.mxu0 0.0
        %3383 = vmatpush1.xpose.msra.mxu0 0.0
        %3384 = vmatprep.mubr.f32.mxu0 0.0
        %3385 = vmatmul.mubr.f32.gmra.mrb[0].mxu0 %v3316
        %v3386 = vpop.f32.mrb[0].mxu0
        %v3387 = vadd.f32 0.0, %v3386
        %v3388 = vpop.f32.mrb[0].mxu0
        %3389 = vdwg.mxu0
        %v3390 = vsel %vm746, %v3387, -inf
        %3391 = vmax.xlane.f32.xlu0 %v3390
        %v3392 = vpop.xlane.xlu0 %3391
        %v3393 = vsub.f32 %v3387, %v3392
        %v3394 = vmul.f32 %v3393, 1.442695
        %v3395 = vpow.pop %v3394
        %v3396 = vsel %vm746, %v3395, 0.0
        %3397 = vadd.xlane.f32.xlu0 %v3396
        %v3398 = vpop.xlane.xlu0 %3397
        %v3399 = vrcp.pop %v3398
        %v3400 = vmul.f32 %v3395, %v3399
        %3402 = vrot.lane.b32.xlu0 %v2478, 120
        %v3403 = vpop.permute.xlu0 %3402
        %v3406 = vsel %vm746, %v3400, 0
        %3408 = vmatprep.subr.mxu0 0.0
        %3409 = vmatpush1.msra.mxu0 %v3403
        %3410 = vmatprep.subr.mxu0 0.0
        %3411 = vmatpush1.msra.mxu0 0.0
        %3412 = vmatprep.subr.mxu0 0.0
        %3413 = vmatpush1.msra.mxu0 0.0
        %3414 = vmatprep.subr.mxu0 0.0
        %3415 = vmatpush1.msra.mxu0 0.0
        %3416 = vmatprep.subr.mxu0 0.0
        %3417 = vmatpush1.msra.mxu0 0.0
        %3418 = vmatprep.subr.mxu0 0.0
        %3419 = vmatpush1.msra.mxu0 0.0
        %3420 = vmatprep.subr.mxu0 0.0
        %3421 = vmatpush1.msra.mxu0 0.0
        %3422 = vmatprep.subr.mxu0 0.0
        %3423 = vmatpush1.msra.mxu0 0.0
        %3424 = vmatprep.subr.mxu0 0.0
        %3425 = vmatpush1.msra.mxu0 0.0
        %3426 = vmatprep.subr.mxu0 0.0
        %3427 = vmatpush1.msra.mxu0 0.0
        %3428 = vmatprep.subr.mxu0 0.0
        %3429 = vmatpush1.msra.mxu0 0.0
        %3430 = vmatprep.subr.mxu0 0.0
        %3431 = vmatpush1.msra.mxu0 0.0
        %3432 = vmatprep.subr.mxu0 0.0
        %3433 = vmatpush1.msra.mxu0 0.0
        %3434 = vmatprep.subr.mxu0 0.0
        %3435 = vmatpush1.msra.mxu0 0.0
        %3436 = vmatprep.subr.mxu0 0.0
        %3437 = vmatpush1.msra.mxu0 0.0
        %3438 = vmatprep.subr.mxu0 0.0
        %3439 = vmatpush1.msra.mxu0 0.0
        %3440 = vmatprep.subr.mxu0 0.0
        %3441 = vmatpush1.msra.mxu0 0.0
        %3442 = vmatprep.subr.mxu0 0.0
        %3443 = vmatpush1.msra.mxu0 0.0
        %3444 = vmatprep.subr.mxu0 0.0
        %3445 = vmatpush1.msra.mxu0 0.0
        %3446 = vmatprep.subr.mxu0 0.0
        %3447 = vmatpush1.msra.mxu0 0.0
        %3448 = vmatprep.subr.mxu0 0.0
        %3449 = vmatpush1.msra.mxu0 0.0
        %3450 = vmatprep.subr.mxu0 0.0
        %3451 = vmatpush1.msra.mxu0 0.0
        %3452 = vmatprep.subr.mxu0 0.0
        %3453 = vmatpush1.msra.mxu0 0.0
        %3454 = vmatprep.subr.mxu0 0.0
        %3455 = vmatpush1.msra.mxu0 0.0
        %3456 = vmatprep.subr.mxu0 0.0
        %3457 = vmatpush1.msra.mxu0 0.0
        %3458 = vmatprep.subr.mxu0 0.0
        %3459 = vmatpush1.msra.mxu0 0.0
        %3460 = vmatprep.subr.mxu0 0.0
        %3461 = vmatpush1.msra.mxu0 0.0
        %3462 = vmatprep.subr.mxu0 0.0
        %3463 = vmatpush1.msra.mxu0 0.0
        %3464 = vmatprep.subr.mxu0 0.0
        %3465 = vmatpush1.msra.mxu0 0.0
        %3466 = vmatprep.subr.mxu0 0.0
        %3467 = vmatpush1.msra.mxu0 0.0
        %3468 = vmatprep.subr.mxu0 0.0
        %3469 = vmatpush1.msra.mxu0 0.0
        %3470 = vmatprep.subr.mxu0 0.0
        %3471 = vmatpush1.msra.mxu0 0.0
        %3472 = vmatprep.mubr.f32.mxu0 0.0
        %3473 = vmatmul.mubr.f32.gmra.mrb[0].mxu0 %v3406
        %v3474 = vpop.f32.mrb[0].mxu0
        %v3475 = vadd.f32 0.0, %v3474
        %v3476 = vpop.f32.mrb[0].mxu0
        %3477 = vdwg.mxu0
        %3478 = vrot.lane.b32.xlu0 %v2322, 112
        %v3479 = vpop.permute.xlu0 %3478
        %3480 = vrot.lane.b32.xlu0 %v2403, 112
        %v3481 = vpop.permute.xlu0 %3480
        %v3482 = vsel %vm746, %v3479, 0
        %v3484 = vsel %vm746, %v3481, 0
        %3486 = vmatprep.subr.mxu0 0.0
        %3487 = vmatpush1.xpose.msra.mxu0 %v3484
        %3488 = vmatprep.subr.mxu0 0.0
        %3489 = vmatpush1.xpose.msra.mxu0 0.0
        %3490 = vmatprep.subr.mxu0 0.0
        %3491 = vmatpush1.xpose.msra.mxu0 0.0
        %3492 = vmatprep.subr.mxu0 0.0
        %3493 = vmatpush1.xpose.msra.mxu0 0.0
        %3494 = vmatprep.subr.mxu0 0.0
        %3495 = vmatpush1.xpose.msra.mxu0 0.0
        %3496 = vmatprep.subr.mxu0 0.0
        %3497 = vmatpush1.xpose.msra.mxu0 0.0
        %3498 = vmatprep.subr.mxu0 0.0
        %3499 = vmatpush1.xpose.msra.mxu0 0.0
        %3500 = vmatprep.subr.mxu0 0.0
        %3501 = vmatpush1.xpose.msra.mxu0 0.0
        %3502 = vmatprep.subr.mxu0 0.0
        %3503 = vmatpush1.xpose.msra.mxu0 0.0
        %3504 = vmatprep.subr.mxu0 0.0
        %3505 = vmatpush1.xpose.msra.mxu0 0.0
        %3506 = vmatprep.subr.mxu0 0.0
        %3507 = vmatpush1.xpose.msra.mxu0 0.0
        %3508 = vmatprep.subr.mxu0 0.0
        %3509 = vmatpush1.xpose.msra.mxu0 0.0
        %3510 = vmatprep.subr.mxu0 0.0
        %3511 = vmatpush1.xpose.msra.mxu0 0.0
        %3512 = vmatprep.subr.mxu0 0.0
        %3513 = vmatpush1.xpose.msra.mxu0 0.0
        %3514 = vmatprep.subr.mxu0 0.0
        %3515 = vmatpush1.xpose.msra.mxu0 0.0
        %3516 = vmatprep.subr.mxu0 0.0
        %3517 = vmatpush1.xpose.msra.mxu0 0.0
        %3518 = vmatprep.subr.mxu0 0.0
        %3519 = vmatpush1.xpose.msra.mxu0 0.0
        %3520 = vmatprep.subr.mxu0 0.0
        %3521 = vmatpush1.xpose.msra.mxu0 0.0
        %3522 = vmatprep.subr.mxu0 0.0
        %3523 = vmatpush1.xpose.msra.mxu0 0.0
        %3524 = vmatprep.subr.mxu0 0.0
        %3525 = vmatpush1.xpose.msra.mxu0 0.0
        %3526 = vmatprep.subr.mxu0 0.0
        %3527 = vmatpush1.xpose.msra.mxu0 0.0
        %3528 = vmatprep.subr.mxu0 0.0
        %3529 = vmatpush1.xpose.msra.mxu0 0.0
        %3530 = vmatprep.subr.mxu0 0.0
        %3531 = vmatpush1.xpose.msra.mxu0 0.0
        %3532 = vmatprep.subr.mxu0 0.0
        %3533 = vmatpush1.xpose.msra.mxu0 0.0
        %3534 = vmatprep.subr.mxu0 0.0
        %3535 = vmatpush1.xpose.msra.mxu0 0.0
        %3536 = vmatprep.subr.mxu0 0.0
        %3537 = vmatpush1.xpose.msra.mxu0 0.0
        %3538 = vmatprep.subr.mxu0 0.0
        %3539 = vmatpush1.xpose.msra.mxu0 0.0
        %3540 = vmatprep.subr.mxu0 0.0
        %3541 = vmatpush1.xpose.msra.mxu0 0.0
        %3542 = vmatprep.subr.mxu0 0.0
        %3543 = vmatpush1.xpose.msra.mxu0 0.0
        %3544 = vmatprep.subr.mxu0 0.0
        %3545 = vmatpush1.xpose.msra.mxu0 0.0
        %3546 = vmatprep.subr.mxu0 0.0
        %3547 = vmatpush1.xpose.msra.mxu0 0.0
        %3548 = vmatprep.subr.mxu0 0.0
        %3549 = vmatpush1.xpose.msra.mxu0 0.0
        %3550 = vmatprep.mubr.f32.mxu0 0.0
        %3551 = vmatmul.mubr.f32.gmra.mrb[0].mxu0 %v3482
        %v3552 = vpop.f32.mrb[0].mxu0
        %v3553 = vadd.f32 0.0, %v3552
        %v3554 = vpop.f32.mrb[0].mxu0
        %3555 = vdwg.mxu0
        %v3556 = vsel %vm746, %v3553, -inf
        %3557 = vmax.xlane.f32.xlu0 %v3556
        %v3558 = vpop.xlane.xlu0 %3557
        %v3559 = vsub.f32 %v3553, %v3558
        %v3560 = vmul.f32 %v3559, 1.442695
        %v3561 = vpow.pop %v3560
        %v3562 = vsel %vm746, %v3561, 0.0
        %3563 = vadd.xlane.f32.xlu0 %v3562
        %v3564 = vpop.xlane.xlu0 %3563
        %v3565 = vrcp.pop %v3564
        %v3566 = vmul.f32 %v3561, %v3565
        %3567 = vrot.lane.b32.xlu0 %v2478, 112
        %v3568 = vpop.permute.xlu0 %3567
        %v3571 = vsel %vm746, %v3566, 0
        %3573 = vmatprep.subr.mxu0 0.0
        %3574 = vmatpush1.msra.mxu0 %v3568
        %3575 = vmatprep.subr.mxu0 0.0
        %3576 = vmatpush1.msra.mxu0 0.0
        %3577 = vmatprep.subr.mxu0 0.0
        %3578 = vmatpush1.msra.mxu0 0.0
        %3579 = vmatprep.subr.mxu0 0.0
        %3580 = vmatpush1.msra.mxu0 0.0
        %3581 = vmatprep.subr.mxu0 0.0
        %3582 = vmatpush1.msra.mxu0 0.0
        %3583 = vmatprep.subr.mxu0 0.0
        %3584 = vmatpush1.msra.mxu0 0.0
        %3585 = vmatprep.subr.mxu0 0.0
        %3586 = vmatpush1.msra.mxu0 0.0
        %3587 = vmatprep.subr.mxu0 0.0
        %3588 = vmatpush1.msra.mxu0 0.0
        %3589 = vmatprep.subr.mxu0 0.0
        %3590 = vmatpush1.msra.mxu0 0.0
        %3591 = vmatprep.subr.mxu0 0.0
        %3592 = vmatpush1.msra.mxu0 0.0
        %3593 = vmatprep.subr.mxu0 0.0
        %3594 = vmatpush1.msra.mxu0 0.0
        %3595 = vmatprep.subr.mxu0 0.0
        %3596 = vmatpush1.msra.mxu0 0.0
        %3597 = vmatprep.subr.mxu0 0.0
        %3598 = vmatpush1.msra.mxu0 0.0
        %3599 = vmatprep.subr.mxu0 0.0
        %3600 = vmatpush1.msra.mxu0 0.0
        %3601 = vmatprep.subr.mxu0 0.0
        %3602 = vmatpush1.msra.mxu0 0.0
        %3603 = vmatprep.subr.mxu0 0.0
        %3604 = vmatpush1.msra.mxu0 0.0
        %3605 = vmatprep.subr.mxu0 0.0
        %3606 = vmatpush1.msra.mxu0 0.0
        %3607 = vmatprep.subr.mxu0 0.0
        %3608 = vmatpush1.msra.mxu0 0.0
        %3609 = vmatprep.subr.mxu0 0.0
        %3610 = vmatpush1.msra.mxu0 0.0
        %3611 = vmatprep.subr.mxu0 0.0
        %3612 = vmatpush1.msra.mxu0 0.0
        %3613 = vmatprep.subr.mxu0 0.0
        %3614 = vmatpush1.msra.mxu0 0.0
        %3615 = vmatprep.subr.mxu0 0.0
        %3616 = vmatpush1.msra.mxu0 0.0
        %3617 = vmatprep.subr.mxu0 0.0
        %3618 = vmatpush1.msra.mxu0 0.0
        %3619 = vmatprep.subr.mxu0 0.0
        %3620 = vmatpush1.msra.mxu0 0.0
        %3621 = vmatprep.subr.mxu0 0.0
        %3622 = vmatpush1.msra.mxu0 0.0
        %3623 = vmatprep.subr.mxu0 0.0
        %3624 = vmatpush1.msra.mxu0 0.0
        %3625 = vmatprep.subr.mxu0 0.0
        %3626 = vmatpush1.msra.mxu0 0.0
        %3627 = vmatprep.subr.mxu0 0.0
        %3628 = vmatpush1.msra.mxu0 0.0
        %3629 = vmatprep.subr.mxu0 0.0
        %3630 = vmatpush1.msra.mxu0 0.0
        %3631 = vmatprep.subr.mxu0 0.0
        %3632 = vmatpush1.msra.mxu0 0.0
        %3633 = vmatprep.subr.mxu0 0.0
        %3634 = vmatpush1.msra.mxu0 0.0
        %3635 = vmatprep.subr.mxu0 0.0
        %3636 = vmatpush1.msra.mxu0 0.0
        %3637 = vmatprep.mubr.f32.mxu0 0.0
        %3638 = vmatmul.mubr.f32.gmra.mrb[0].mxu0 %v3571
        %v3639 = vpop.f32.mrb[0].mxu0
        %v3640 = vadd.f32 0.0, %v3639
        %v3641 = vpop.f32.mrb[0].mxu0
        %3642 = vdwg.mxu0
        %3643 = vrot.lane.b32.xlu0 %v2322, 104
        %v3644 = vpop.permute.xlu0 %3643
        %3645 = vrot.lane.b32.xlu0 %v2403, 104
        %v3646 = vpop.permute.xlu0 %3645
        %v3647 = vsel %vm746, %v3644, 0
        %v3649 = vsel %vm746, %v3646, 0
        %3651 = vmatprep.subr.mxu0 0.0
        %3652 = vmatpush1.xpose.msra.mxu0 %v3649
        %3653 = vmatprep.subr.mxu0 0.0
        %3654 = vmatpush1.xpose.msra.mxu0 0.0
        %3655 = vmatprep.subr.mxu0 0.0
        %3656 = vmatpush1.xpose.msra.mxu0 0.0
        %3657 = vmatprep.subr.mxu0 0.0
        %3658 = vmatpush1.xpose.msra.mxu0 0.0
        %3659 = vmatprep.subr.mxu0 0.0
        %3660 = vmatpush1.xpose.msra.mxu0 0.0
        %3661 = vmatprep.subr.mxu0 0.0
        %3662 = vmatpush1.xpose.msra.mxu0 0.0
        %3663 = vmatprep.subr.mxu0 0.0
        %3664 = vmatpush1.xpose.msra.mxu0 0.0
        %3665 = vmatprep.subr.mxu0 0.0
        %3666 = vmatpush1.xpose.msra.mxu0 0.0
        %3667 = vmatprep.subr.mxu0 0.0
        %3668 = vmatpush1.xpose.msra.mxu0 0.0
        %3669 = vmatprep.subr.mxu0 0.0
        %3670 = vmatpush1.xpose.msra.mxu0 0.0
        %3671 = vmatprep.subr.mxu0 0.0
        %3672 = vmatpush1.xpose.msra.mxu0 0.0
        %3673 = vmatprep.subr.mxu0 0.0
        %3674 = vmatpush1.xpose.msra.mxu0 0.0
        %3675 = vmatprep.subr.mxu0 0.0
        %3676 = vmatpush1.xpose.msra.mxu0 0.0
        %3677 = vmatprep.subr.mxu0 0.0
        %3678 = vmatpush1.xpose.msra.mxu0 0.0
        %3679 = vmatprep.subr.mxu0 0.0
        %3680 = vmatpush1.xpose.msra.mxu0 0.0
        %3681 = vmatprep.subr.mxu0 0.0
        %3682 = vmatpush1.xpose.msra.mxu0 0.0
        %3683 = vmatprep.subr.mxu0 0.0
        %3684 = vmatpush1.xpose.msra.mxu0 0.0
        %3685 = vmatprep.subr.mxu0 0.0
        %3686 = vmatpush1.xpose.msra.mxu0 0.0
        %3687 = vmatprep.subr.mxu0 0.0
        %3688 = vmatpush1.xpose.msra.mxu0 0.0
        %3689 = vmatprep.subr.mxu0 0.0
        %3690 = vmatpush1.xpose.msra.mxu0 0.0
        %3691 = vmatprep.subr.mxu0 0.0
        %3692 = vmatpush1.xpose.msra.mxu0 0.0
        %3693 = vmatprep.subr.mxu0 0.0
        %3694 = vmatpush1.xpose.msra.mxu0 0.0
        %3695 = vmatprep.subr.mxu0 0.0
        %3696 = vmatpush1.xpose.msra.mxu0 0.0
        %3697 = vmatprep.subr.mxu0 0.0
        %3698 = vmatpush1.xpose.msra.mxu0 0.0
        %3699 = vmatprep.subr.mxu0 0.0
        %3700 = vmatpush1.xpose.msra.mxu0 0.0
        %3701 = vmatprep.subr.mxu0 0.0
        %3702 = vmatpush1.xpose.msra.mxu0 0.0
        %3703 = vmatprep.subr.mxu0 0.0
        %3704 = vmatpush1.xpose.msra.mxu0 0.0
        %3705 = vmatprep.subr.mxu0 0.0
        %3706 = vmatpush1.xpose.msra.mxu0 0.0
        %3707 = vmatprep.subr.mxu0 0.0
        %3708 = vmatpush1.xpose.msra.mxu0 0.0
        %3709 = vmatprep.subr.mxu0 0.0
        %3710 = vmatpush1.xpose.msra.mxu0 0.0
        %3711 = vmatprep.subr.mxu0 0.0
        %3712 = vmatpush1.xpose.msra.mxu0 0.0
        %3713 = vmatprep.subr.mxu0 0.0
        %3714 = vmatpush1.xpose.msra.mxu0 0.0
        %3715 = vmatprep.mubr.f32.mxu0 0.0
        %3716 = vmatmul.mubr.f32.gmra.mrb[0].mxu0 %v3647
        %v3717 = vpop.f32.mrb[0].mxu0
        %v3718 = vadd.f32 0.0, %v3717
        %v3719 = vpop.f32.mrb[0].mxu0
        %3720 = vdwg.mxu0
        %v3721 = vsel %vm746, %v3718, -inf
        %3722 = vmax.xlane.f32.xlu0 %v3721
        %v3723 = vpop.xlane.xlu0 %3722
        %v3724 = vsub.f32 %v3718, %v3723
        %v3725 = vmul.f32 %v3724, 1.442695
        %v3726 = vpow.pop %v3725
        %v3727 = vsel %vm746, %v3726, 0.0
        %3728 = vadd.xlane.f32.xlu0 %v3727
        %v3729 = vpop.xlane.xlu0 %3728
        %v3730 = vrcp.pop %v3729
        %v3731 = vmul.f32 %v3726, %v3730
        %3732 = vrot.lane.b32.xlu0 %v2478, 104
        %v3733 = vpop.permute.xlu0 %3732
        %v3736 = vsel %vm746, %v3731, 0
        %3738 = vmatprep.subr.mxu0 0.0
        %3739 = vmatpush1.msra.mxu0 %v3733
        %3740 = vmatprep.subr.mxu0 0.0
        %3741 = vmatpush1.msra.mxu0 0.0
        %3742 = vmatprep.subr.mxu0 0.0
        %3743 = vmatpush1.msra.mxu0 0.0
        %3744 = vmatprep.subr.mxu0 0.0
        %3745 = vmatpush1.msra.mxu0 0.0
        %3746 = vmatprep.subr.mxu0 0.0
        %3747 = vmatpush1.msra.mxu0 0.0
        %3748 = vmatprep.subr.mxu0 0.0
        %3749 = vmatpush1.msra.mxu0 0.0
        %3750 = vmatprep.subr.mxu0 0.0
        %3751 = vmatpush1.msra.mxu0 0.0
        %3752 = vmatprep.subr.mxu0 0.0
        %3753 = vmatpush1.msra.mxu0 0.0
        %3754 = vmatprep.subr.mxu0 0.0
        %3755 = vmatpush1.msra.mxu0 0.0
        %3756 = vmatprep.subr.mxu0 0.0
        %3757 = vmatpush1.msra.mxu0 0.0
        %3758 = vmatprep.subr.mxu0 0.0
        %3759 = vmatpush1.msra.mxu0 0.0
        %3760 = vmatprep.subr.mxu0 0.0
        %3761 = vmatpush1.msra.mxu0 0.0
        %3762 = vmatprep.subr.mxu0 0.0
        %3763 = vmatpush1.msra.mxu0 0.0
        %3764 = vmatprep.subr.mxu0 0.0
        %3765 = vmatpush1.msra.mxu0 0.0
        %3766 = vmatprep.subr.mxu0 0.0
        %3767 = vmatpush1.msra.mxu0 0.0
        %3768 = vmatprep.subr.mxu0 0.0
        %3769 = vmatpush1.msra.mxu0 0.0
        %3770 = vmatprep.subr.mxu0 0.0
        %3771 = vmatpush1.msra.mxu0 0.0
        %3772 = vmatprep.subr.mxu0 0.0
        %3773 = vmatpush1.msra.mxu0 0.0
        %3774 = vmatprep.subr.mxu0 0.0
        %3775 = vmatpush1.msra.mxu0 0.0
        %3776 = vmatprep.subr.mxu0 0.0
        %3777 = vmatpush1.msra.mxu0 0.0
        %3778 = vmatprep.subr.mxu0 0.0
        %3779 = vmatpush1.msra.mxu0 0.0
        %3780 = vmatprep.subr.mxu0 0.0
        %3781 = vmatpush1.msra.mxu0 0.0
        %3782 = vmatprep.subr.mxu0 0.0
        %3783 = vmatpush1.msra.mxu0 0.0
        %3784 = vmatprep.subr.mxu0 0.0
        %3785 = vmatpush1.msra.mxu0 0.0
        %3786 = vmatprep.subr.mxu0 0.0
        %3787 = vmatpush1.msra.mxu0 0.0
        %3788 = vmatprep.subr.mxu0 0.0
        %3789 = vmatpush1.msra.mxu0 0.0
        %3790 = vmatprep.subr.mxu0 0.0
        %3791 = vmatpush1.msra.mxu0 0.0
        %3792 = vmatprep.subr.mxu0 0.0
        %3793 = vmatpush1.msra.mxu0 0.0
        %3794 = vmatprep.subr.mxu0 0.0
        %3795 = vmatpush1.msra.mxu0 0.0
        %3796 = vmatprep.subr.mxu0 0.0
        %3797 = vmatpush1.msra.mxu0 0.0
        %3798 = vmatprep.subr.mxu0 0.0
        %3799 = vmatpush1.msra.mxu0 0.0
        %3800 = vmatprep.subr.mxu0 0.0
        %3801 = vmatpush1.msra.mxu0 0.0
        %3802 = vmatprep.mubr.f32.mxu0 0.0
        %3803 = vmatmul.mubr.f32.gmra.mrb[0].mxu0 %v3736
        %v3804 = vpop.f32.mrb[0].mxu0
        %v3805 = vadd.f32 0.0, %v3804
        %v3806 = vpop.f32.mrb[0].mxu0
        %3807 = vdwg.mxu0
        %3809 = vrot.lane.b32.xlu0 %v3475, 8
        %v3810 = vpop.permute.xlu0 %3809
        %3813 = vrot.lane.b32.xlu0 %v3640, 16
        %v3814 = vpop.permute.xlu0 %3813
        %3817 = vrot.lane.b32.xlu0 %v3805, 24
        %v3818 = vpop.permute.xlu0 %3817
        %v3820 = vsel %vm746, %v3309, %v3810
        %v3821 = vsel %vm1420, %v3820, %v3814
        %v3822 = vsel %vm1422, %v3821, %v3818
        %v3823 = vlaneseq
        %v3824 = vshrl.u32 %v3823, 7
        %v3825 = vsub.s32 3, %v3824
        %v3826 = vrot.slane %v488, %v3825
        %v3828 = vsel %vm514, %v3151, 0
        %v3831 = vsel %vm514, %v3822, 0
        %3833 = vmatprep.subr.mxu0 0.0
        %3834 = vmatpush1.msra.mxu0 %v2240
        %3835 = vmatprep.subr.mxu0 0.0
        %3836 = vmatpush1.msra.mxu0 %v2241
        %3837 = vmatprep.subr.mxu0 0.0
        %3838 = vmatpush1.msra.mxu0 %v2242
        %3839 = vmatprep.subr.mxu0 0.0
        %3840 = vmatpush1.msra.mxu0 %v2243
        %3841 = vmatprep.subr.mxu0 0.0
        %3842 = vmatpush1.msra.mxu0 0.0
        %3843 = vmatprep.subr.mxu0 0.0
        %3844 = vmatpush1.msra.mxu0 0.0
        %3845 = vmatprep.subr.mxu0 0.0
        %3846 = vmatpush1.msra.mxu0 0.0
        %3847 = vmatprep.subr.mxu0 0.0
        %3848 = vmatpush1.msra.mxu0 0.0
        %3849 = vmatprep.subr.mxu0 0.0
        %3850 = vmatpush1.msra.mxu0 0.0
        %3851 = vmatprep.subr.mxu0 0.0
        %3852 = vmatpush1.msra.mxu0 0.0
        %3853 = vmatprep.subr.mxu0 0.0
        %3854 = vmatpush1.msra.mxu0 0.0
        %3855 = vmatprep.subr.mxu0 0.0
        %3856 = vmatpush1.msra.mxu0 0.0
        %3857 = vmatprep.subr.mxu0 0.0
        %3858 = vmatpush1.msra.mxu0 0.0
        %3859 = vmatprep.subr.mxu0 0.0
        %3860 = vmatpush1.msra.mxu0 0.0
        %3861 = vmatprep.subr.mxu0 0.0
        %3862 = vmatpush1.msra.mxu0 0.0
        %3863 = vmatprep.subr.mxu0 0.0
        %3864 = vmatpush1.msra.mxu0 0.0
        %3865 = vmatprep.subr.mxu0 0.0
        %3866 = vmatpush1.msra.mxu0 0.0
        %3867 = vmatprep.subr.mxu0 0.0
        %3868 = vmatpush1.msra.mxu0 0.0
        %3869 = vmatprep.subr.mxu0 0.0
        %3870 = vmatpush1.msra.mxu0 0.0
        %3871 = vmatprep.subr.mxu0 0.0
        %3872 = vmatpush1.msra.mxu0 0.0
        %3873 = vmatprep.subr.mxu0 0.0
        %3874 = vmatpush1.msra.mxu0 0.0
        %3875 = vmatprep.subr.mxu0 0.0
        %3876 = vmatpush1.msra.mxu0 0.0
        %3877 = vmatprep.subr.mxu0 0.0
        %3878 = vmatpush1.msra.mxu0 0.0
        %3879 = vmatprep.subr.mxu0 0.0
        %3880 = vmatpush1.msra.mxu0 0.0
        %3881 = vmatprep.subr.mxu0 0.0
        %3882 = vmatpush1.msra.mxu0 0.0
        %3883 = vmatprep.subr.mxu0 0.0
        %3884 = vmatpush1.msra.mxu0 0.0
        %3885 = vmatprep.subr.mxu0 0.0
        %3886 = vmatpush1.msra.mxu0 0.0
        %3887 = vmatprep.subr.mxu0 0.0
        %3888 = vmatpush1.msra.mxu0 0.0
        %3889 = vmatprep.subr.mxu0 0.0
        %3890 = vmatpush1.msra.mxu0 0.0
        %3891 = vmatprep.subr.mxu0 0.0
        %3892 = vmatpush1.msra.mxu0 0.0
        %3893 = vmatprep.subr.mxu0 0.0
        %3894 = vmatpush1.msra.mxu0 0.0
        %3895 = vmatprep.subr.mxu0 0.0
        %3896 = vmatpush1.msra.mxu0 0.0
        %3897 = vmatprep.mubr.f32.mxu0 0.0
        %3898 = vmatmul.mubr.f32.gmra.mrb[0].mxu0 %v3828
        %v3899 = vpop.f32.mrb[0].mxu0
        %v3900 = vadd.f32 %v3826, %v3899
        %v3901 = vpop.f32.mrb[0].mxu0
        %3902 = vmatprep.mubr.f32.mxu0 0.0
        %3903 = vmatmul.mubr.f32.gmra.mrb[0].mxu0 %v3831
        %v3904 = vpop.f32.mrb[0].mxu0
        %v3905 = vadd.f32 %v3826, %v3904
        %v3906 = vpop.f32.mrb[0].mxu0
        %3907 = vdwg.mxu0
        %v3908 = vadd.f32 %v2223, %v3900
        %v3909 = vadd.f32 %v2224, %v3905
        %v3910 = vsel %vm514, %v3908, 0.0
        %3911 = vadd.xlane.f32.xlu0 %v3910
        %v3912 = vpop.xlane.xlu0 %3911
        %v3913 = vsel %vm514, %v3909, 0.0
        %3914 = vadd.xlane.f32.xlu0 %v3913
        %v3915 = vpop.xlane.xlu0 %3914
        %v3916 = vmul.f32 %v3912, %v2192
        %v3917 = vmul.f32 %v3915, %v2192
        %v3918 = vsub.f32 %v3908, %v3916
        %v3919 = vsub.f32 %v3909, %v3917
        %v3920 = vmul.f32 %v3918, %v3918
        %v3921 = vmul.f32 %v3919, %v3919
        %v3922 = vsel %vm514, %v3920, 0.0
        %3923 = vadd.xlane.f32.xlu0 %v3922
        %v3924 = vpop.xlane.xlu0 %3923
        %v3925 = vsel %vm514, %v3921, 0.0
        %3926 = vadd.xlane.f32.xlu0 %v3925
        %v3927 = vpop.xlane.xlu0 %3926
        %v3928 = vmul.f32 %v3924, %v2192
        %v3929 = vmul.f32 %v3927, %v2192
        %v3930 = vadd.f32 %v3928, 1e-05
        %v3931 = vadd.f32 %v3929, 1e-05
        %v3932 = vrsqrt.pop %v3930
        %v3933 = vrsqrt.pop %v3931
        %v3934 = vmul.f32 %v3918, %v3932
        %v3935 = vmul.f32 %v3919, %v3933
        %v3936 = vlaneseq
        %v3937 = vshrl.u32 %v3936, 7
        %v3938 = vsub.s32 4, %v3937
        %v3939 = vrot.slane %v488, %v3938
        %v3940 = vmul.f32 %v3934, %v3939
        %v3941 = vmul.f32 %v3935, %v3939
        %v3942 = vlaneseq
        %v3943 = vshrl.u32 %v3942, 7
        %v3944 = vsub.s32 5, %v3943
        %v3945 = vrot.slane %v488, %v3944
        %v3946 = vadd.f32 %v3940, %v3945
        %v3947 = vadd.f32 %v3941, %v3945
        %v3948 = vld [vmem:[%s393] sm:$0xff]
        %v3949 = vld [vmem:[%s393 + $0x8] sm:$0xff]
        %v3950 = vld [vmem:[%s393 + $0x10] sm:$0xff]
        %v3951 = vld [vmem:[%s393 + $0x18] sm:$0xff]
        %v3952 = vld [vmem:[%s464] sm:$0x1]
        %v3954 = vlaneseq
        %v3955 = vshrl.u32 %v3954, 7
        %v3956 = vsub.s32 0, %v3955
        %v3957 = vrot.slane %v3952, %v3956
        %v3960 = vsel %vm514, %v3946, 0
        %v3963 = vsel %vm514, %v3947, 0
        %3965 = vmatprep.subr.mxu0 0.0
        %3966 = vmatpush1.msra.mxu0 %v3948
        %3967 = vmatprep.subr.mxu0 0.0
        %3968 = vmatpush1.msra.mxu0 %v3949
        %3969 = vmatprep.subr.mxu0 0.0
        %3970 = vmatpush1.msra.mxu0 %v3950
        %3971 = vmatprep.subr.mxu0 0.0
        %3972 = vmatpush1.msra.mxu0 %v3951
        %3973 = vmatprep.subr.mxu0 0.0
        %3974 = vmatpush1.msra.mxu0 0.0
        %3975 = vmatprep.subr.mxu0 0.0
        %3976 = vmatpush1.msra.mxu0 0.0
        %3977 = vmatprep.subr.mxu0 0.0
        %3978 = vmatpush1.msra.mxu0 0.0
        %3979 = vmatprep.subr.mxu0 0.0
        %3980 = vmatpush1.msra.mxu0 0.0
        %3981 = vmatprep.subr.mxu0 0.0
        %3982 = vmatpush1.msra.mxu0 0.0
        %3983 = vmatprep.subr.mxu0 0.0
        %3984 = vmatpush1.msra.mxu0 0.0
        %3985 = vmatprep.subr.mxu0 0.0
        %3986 = vmatpush1.msra.mxu0 0.0
        %3987 = vmatprep.subr.mxu0 0.0
        %3988 = vmatpush1.msra.mxu0 0.0
        %3989 = vmatprep.subr.mxu0 0.0
        %3990 = vmatpush1.msra.mxu0 0.0
        %3991 = vmatprep.subr.mxu0 0.0
        %3992 = vmatpush1.msra.mxu0 0.0
        %3993 = vmatprep.subr.mxu0 0.0
        %3994 = vmatpush1.msra.mxu0 0.0
        %3995 = vmatprep.subr.mxu0 0.0
        %3996 = vmatpush1.msra.mxu0 0.0
        %3997 = vmatprep.subr.mxu0 0.0
        %3998 = vmatpush1.msra.mxu0 0.0
        %3999 = vmatprep.subr.mxu0 0.0
        %4000 = vmatpush1.msra.mxu0 0.0
        %4001 = vmatprep.subr.mxu0 0.0
        %4002 = vmatpush1.msra.mxu0 0.0
        %4003 = vmatprep.subr.mxu0 0.0
        %4004 = vmatpush1.msra.mxu0 0.0
        %4005 = vmatprep.subr.mxu0 0.0
        %4006 = vmatpush1.msra.mxu0 0.0
        %4007 = vmatprep.subr.mxu0 0.0
        %4008 = vmatpush1.msra.mxu0 0.0
        %4009 = vmatprep.subr.mxu0 0.0
        %4010 = vmatpush1.msra.mxu0 0.0
        %4011 = vmatprep.subr.mxu0 0.0
        %4012 = vmatpush1.msra.mxu0 0.0
        %4013 = vmatprep.subr.mxu0 0.0
        %4014 = vmatpush1.msra.mxu0 0.0
        %4015 = vmatprep.subr.mxu0 0.0
        %4016 = vmatpush1.msra.mxu0 0.0
        %4017 = vmatprep.subr.mxu0 0.0
        %4018 = vmatpush1.msra.mxu0 0.0
        %4019 = vmatprep.subr.mxu0 0.0
        %4020 = vmatpush1.msra.mxu0 0.0
        %4021 = vmatprep.subr.mxu0 0.0
        %4022 = vmatpush1.msra.mxu0 0.0
        %4023 = vmatprep.subr.mxu0 0.0
        %4024 = vmatpush1.msra.mxu0 0.0
        %4025 = vmatprep.subr.mxu0 0.0
        %4026 = vmatpush1.msra.mxu0 0.0
        %4027 = vmatprep.subr.mxu0 0.0
        %4028 = vmatpush1.msra.mxu0 0.0
        %4029 = vmatprep.mubr.f32.mxu0 0.0
        %4030 = vmatmul.mubr.f32.gmra.mrb[0].mxu0 %v3960
        %v4031 = vpop.f32.mrb[0].mxu0
        %v4032 = vadd.f32 %v3957, %v4031
        %v4033 = vpop.f32.mrb[0].mxu0
        %4034 = vmatprep.mubr.f32.mxu0 0.0
        %4035 = vmatmul.mubr.f32.gmra.mrb[0].mxu0 %v3963
        %v4036 = vpop.f32.mrb[0].mxu0
        %v4037 = vadd.f32 %v3957, %v4036
        %v4038 = vpop.f32.mrb[0].mxu0
        %4039 = vdwg.mxu0
        %v4040 = vmax.f32 %v4032, 0.0
        %v4041 = vmax.f32 %v4037, 0.0
        %v4042 = vld [vmem:[%s469] sm:$0xff]
        %v4043 = vld [vmem:[%s469 + $0x8] sm:$0xff]
        %v4044 = vld [vmem:[%s469 + $0x10] sm:$0xff]
        %v4045 = vld [vmem:[%s469 + $0x18] sm:$0xff]
        %v4046 = vld [vmem:[%s469 + $0x20] sm:$0xff]
        %v4047 = vld [vmem:[%s469 + $0x28] sm:$0xff]
        %v4048 = vld [vmem:[%s469 + $0x30] sm:$0xff]
        %v4049 = vld [vmem:[%s469 + $0x38] sm:$0xff]
        %v4050 = vlaneseq
        %v4051 = vshrl.u32 %v4050, 7
        %v4052 = vsub.s32 6, %v4051
        %v4053 = vrot.slane %v488, %v4052
        %vm4054 = vcmask 523264
        %v4056 = vsel %vm4054, %v4040, 0
        %v4059 = vsel %vm4054, %v4041, 0
        %4061 = vmatprep.subr.mxu0 0.0
        %4062 = vmatpush1.msra.mxu0 %v4042
        %4063 = vmatprep.subr.mxu0 0.0
        %4064 = vmatpush1.msra.mxu0 %v4043
        %4065 = vmatprep.subr.mxu0 0.0
        %4066 = vmatpush1.msra.mxu0 %v4044
        %4067 = vmatprep.subr.mxu0 0.0
        %4068 = vmatpush1.msra.mxu0 %v4045
        %4069 = vmatprep.subr.mxu0 0.0
        %4070 = vmatpush1.msra.mxu0 %v4046
        %4071 = vmatprep.subr.mxu0 0.0
        %4072 = vmatpush1.msra.mxu0 %v4047
        %4073 = vmatprep.subr.mxu0 0.0
        %4074 = vmatpush1.msra.mxu0 %v4048
        %4075 = vmatprep.subr.mxu0 0.0
        %4076 = vmatpush1.msra.mxu0 %v4049
        %4077 = vmatprep.subr.mxu0 0.0
        %4078 = vmatpush1.msra.mxu0 0.0
        %4079 = vmatprep.subr.mxu0 0.0
        %4080 = vmatpush1.msra.mxu0 0.0
        %4081 = vmatprep.subr.mxu0 0.0
        %4082 = vmatpush1.msra.mxu0 0.0
        %4083 = vmatprep.subr.mxu0 0.0
        %4084 = vmatpush1.msra.mxu0 0.0
        %4085 = vmatprep.subr.mxu0 0.0
        %4086 = vmatpush1.msra.mxu0 0.0
        %4087 = vmatprep.subr.mxu0 0.0
        %4088 = vmatpush1.msra.mxu0 0.0
        %4089 = vmatprep.subr.mxu0 0.0
        %4090 = vmatpush1.msra.mxu0 0.0
        %4091 = vmatprep.subr.mxu0 0.0
        %4092 = vmatpush1.msra.mxu0 0.0
        %4093 = vmatprep.subr.mxu0 0.0
        %4094 = vmatpush1.msra.mxu0 0.0
        %4095 = vmatprep.subr.mxu0 0.0
        %4096 = vmatpush1.msra.mxu0 0.0
        %4097 = vmatprep.subr.mxu0 0.0
        %4098 = vmatpush1.msra.mxu0 0.0
        %4099 = vmatprep.subr.mxu0 0.0
        %4100 = vmatpush1.msra.mxu0 0.0
        %4101 = vmatprep.subr.mxu0 0.0
        %4102 = vmatpush1.msra.mxu0 0.0
        %4103 = vmatprep.subr.mxu0 0.0
        %4104 = vmatpush1.msra.mxu0 0.0
        %4105 = vmatprep.subr.mxu0 0.0
        %4106 = vmatpush1.msra.mxu0 0.0
        %4107 = vmatprep.subr.mxu0 0.0
        %4108 = vmatpush1.msra.mxu0 0.0
        %4109 = vmatprep.subr.mxu0 0.0
        %4110 = vmatpush1.msra.mxu0 0.0
        %4111 = vmatprep.subr.mxu0 0.0
        %4112 = vmatpush1.msra.mxu0 0.0
        %4113 = vmatprep.subr.mxu0 0.0
        %4114 = vmatpush1.msra.mxu0 0.0
        %4115 = vmatprep.subr.mxu0 0.0
        %4116 = vmatpush1.msra.mxu0 0.0
        %4117 = vmatprep.subr.mxu0 0.0
        %4118 = vmatpush1.msra.mxu0 0.0
        %4119 = vmatprep.subr.mxu0 0.0
        %4120 = vmatpush1.msra.mxu0 0.0
        %4121 = vmatprep.subr.mxu0 0.0
        %4122 = vmatpush1.msra.mxu0 0.0
        %4123 = vmatprep.subr.mxu0 0.0
        %4124 = vmatpush1.msra.mxu0 0.0
        %4125 = vmatprep.mubr.f32.mxu0 0.0
        %4126 = vmatmul.mubr.f32.gmra.mrb[0].mxu0 %v4056
        %v4127 = vpop.f32.mrb[0].mxu0
        %v4128 = vadd.f32 %v4053, %v4127
        %v4129 = vpop.f32.mrb[0].mxu0
        %4130 = vmatprep.mubr.f32.mxu0 0.0
        %4131 = vmatmul.mubr.f32.gmra.mrb[0].mxu0 %v4059
        %v4132 = vpop.f32.mrb[0].mxu0
        %v4133 = vadd.f32 %v4053, %v4132
        %v4134 = vpop.f32.mrb[0].mxu0
        %4135 = vdwg.mxu0
        %v4136 = vadd.f32 %v3946, %v4128
        %v4137 = vadd.f32 %v3947, %v4133
        %v4138 = vsel %vm514, %v4136, 0.0
        %4139 = vadd.xlane.f32.xlu0 %v4138
        %v4140 = vpop.xlane.xlu0 %4139
        %v4141 = vsel %vm514, %v4137, 0.0
        %4142 = vadd.xlane.f32.xlu0 %v4141
        %v4143 = vpop.xlane.xlu0 %4142
        %v4144 = vmul.f32 %v4140, %v2192
        %v4145 = vmul.f32 %v4143, %v2192
        %v4146 = vsub.f32 %v4136, %v4144
        %v4147 = vsub.f32 %v4137, %v4145
        %v4148 = vmul.f32 %v4146, %v4146
        %v4149 = vmul.f32 %v4147, %v4147
        %v4150 = vsel %vm514, %v4148, 0.0
        %4151 = vadd.xlane.f32.xlu0 %v4150
        %v4152 = vpop.xlane.xlu0 %4151
        %v4153 = vsel %vm514, %v4149, 0.0
        %4154 = vadd.xlane.f32.xlu0 %v4153
        %v4155 = vpop.xlane.xlu0 %4154
        %v4156 = vmul.f32 %v4152, %v2192
        %v4157 = vmul.f32 %v4155, %v2192
        %v4158 = vadd.f32 %v4156, 1e-05
        %v4159 = vadd.f32 %v4157, 1e-05
        %v4160 = vrsqrt.pop %v4158
        %v4161 = vrsqrt.pop %v4159
        %v4162 = vmul.f32 %v4146, %v4160
        %v4163 = vmul.f32 %v4147, %v4161
        %v4164 = vlaneseq
        %v4165 = vshrl.u32 %v4164, 7
        %v4166 = vsub.s32 7, %v4165
        %v4167 = vrot.slane %v488, %v4166
        %v4168 = vmul.f32 %v4162, %v4167
        %v4169 = vmul.f32 %v4163, %v4167
        %v4170 = vlaneseq
        %v4171 = vshrl.u32 %v4170, 7
        %v4172 = vsub.s32 0, %v4171
        %v4173 = vrot.slane %v489, %v4172
        %v4174 = vadd.f32 %v4168, %v4173
        %v4175 = vadd.f32 %v4169, %v4173
        %4176 = vst.msk [vmem:[#allocation2] sm:$0xff] %vm514, %v4174
        %4177 = vst.msk [vmem:[#allocation2 + $0x8] sm:$0xff] %vm514, %v4175
        %v4178 = vld [vmem:[#allocation6] sm:$0xff]
        %v4179 = vld [vmem:[#allocation6 + $0x8] sm:$0xff]
        %v4180 = vld [vmem:[#allocation6 + $0x10] sm:$0xff]
        %v4181 = vld [vmem:[#allocation6 + $0x18] sm:$0xff]
        %v4182 = vld [vmem:[%s9] sm:$0x1]
        %v4184 = vlaneseq
        %v4185 = vshrl.u32 %v4184, 7
        %v4186 = vsub.s32 0, %v4185
        %v4187 = vrot.slane %v4182, %v4186
        %v4190 = vsel %vm514, %v4174, 0
        %v4193 = vsel %vm514, %v4175, 0
        %4195 = vmatprep.subr.mxu0 0.0
        %4196 = vmatpush1.msra.mxu0 %v4178
        %4197 = vmatprep.subr.mxu0 0.0
        %4198 = vmatpush1.msra.mxu0 %v4179
        %4199 = vmatprep.subr.mxu0 0.0
        %4200 = vmatpush1.msra.mxu0 %v4180
        %4201 = vmatprep.subr.mxu0 0.0
        %4202 = vmatpush1.msra.mxu0 %v4181
        %4203 = vmatprep.subr.mxu0 0.0
        %4204 = vmatpush1.msra.mxu0 0.0
        %4205 = vmatprep.subr.mxu0 0.0
        %4206 = vmatpush1.msra.mxu0 0.0
        %4207 = vmatprep.subr.mxu0 0.0
        %4208 = vmatpush1.msra.mxu0 0.0
        %4209 = vmatprep.subr.mxu0 0.0
        %4210 = vmatpush1.msra.mxu0 0.0
        %4211 = vmatprep.subr.mxu0 0.0
        %4212 = vmatpush1.msra.mxu0 0.0
        %4213 = vmatprep.subr.mxu0 0.0
        %4214 = vmatpush1.msra.mxu0 0.0
        %4215 = vmatprep.subr.mxu0 0.0
        %4216 = vmatpush1.msra.mxu0 0.0
        %4217 = vmatprep.subr.mxu0 0.0
        %4218 = vmatpush1.msra.mxu0 0.0
        %4219 = vmatprep.subr.mxu0 0.0
        %4220 = vmatpush1.msra.mxu0 0.0
        %4221 = vmatprep.subr.mxu0 0.0
        %4222 = vmatpush1.msra.mxu0 0.0
        %4223 = vmatprep.subr.mxu0 0.0
        %4224 = vmatpush1.msra.mxu0 0.0
        %4225 = vmatprep.subr.mxu0 0.0
        %4226 = vmatpush1.msra.mxu0 0.0
        %4227 = vmatprep.subr.mxu0 0.0
        %4228 = vmatpush1.msra.mxu0 0.0
        %4229 = vmatprep.subr.mxu0 0.0
        %4230 = vmatpush1.msra.mxu0 0.0
        %4231 = vmatprep.subr.mxu0 0.0
        %4232 = vmatpush1.msra.mxu0 0.0
        %4233 = vmatprep.subr.mxu0 0.0
        %4234 = vmatpush1.msra.mxu0 0.0
        %4235 = vmatprep.subr.mxu0 0.0
        %4236 = vmatpush1.msra.mxu0 0.0
        %4237 = vmatprep.subr.mxu0 0.0
        %4238 = vmatpush1.msra.mxu0 0.0
        %4239 = vmatprep.subr.mxu0 0.0
        %4240 = vmatpush1.msra.mxu0 0.0
        %4241 = vmatprep.subr.mxu0 0.0
        %4242 = vmatpush1.msra.mxu0 0.0
        %4243 = vmatprep.subr.mxu0 0.0
        %4244 = vmatpush1.msra.mxu0 0.0
        %4245 = vmatprep.subr.mxu0 0.0
        %4246 = vmatpush1.msra.mxu0 0.0
        %4247 = vmatprep.subr.mxu0 0.0
        %4248 = vmatpush1.msra.mxu0 0.0
        %4249 = vmatprep.subr.mxu0 0.0
        %4250 = vmatpush1.msra.mxu0 0.0
        %4251 = vmatprep.subr.mxu0 0.0
        %4252 = vmatpush1.msra.mxu0 0.0
        %4253 = vmatprep.subr.mxu0 0.0
        %4254 = vmatpush1.msra.mxu0 0.0
        %4255 = vmatprep.subr.mxu0 0.0
        %4256 = vmatpush1.msra.mxu0 0.0
        %4257 = vmatprep.subr.mxu0 0.0
        %4258 = vmatpush1.msra.mxu0 0.0
        %4259 = vmatprep.mubr.f32.mxu0 0.0
        %4260 = vmatmul.mubr.f32.gmra.mrb[0].mxu0 %v4190
        %v4261 = vpop.f32.mrb[0].mxu0
        %v4262 = vadd.f32 %v4187, %v4261
        %v4263 = vpop.f32.mrb[0].mxu0
        %4264 = vmatprep.mubr.f32.mxu0 0.0
        %4265 = vmatmul.mubr.f32.gmra.mrb[0].mxu0 %v4193
        %v4266 = vpop.f32.mrb[0].mxu0
        %v4267 = vadd.f32 %v4187, %v4266
        %v4268 = vpop.f32.mrb[0].mxu0
        %4269 = vdwg.mxu0
        %4270 = vst [vmem:[#allocation8] sm:$0xff] %v4262
        %4271 = vst [vmem:[#allocation8 + $0x8] sm:$0xff] %v4267
        // Predicated region
        $region73: #{decoder_forward.1} parent=59 // pred_check
          %p4272 = pneg %p279
        $region74: #{decoder_forward.1} parent=59 // pred_check_branch
          %4274 = sbr.rel (%p4272) target = $region76
        $region75: #{decoder_forward.1} parent=59 // pred_region
          %s4276 = ssub.s32 256, 256
          %4277 = vsyncadd [#allocation5], %s4276
          %s4278 = sshll.u32 [#allocation8], 4
          %s4279 = int_to_ptr.vmem [resolvable:$true] %s4278
          %4284 = dma.vmem_to_hbm [thread:$0]  %s4279, 256, %s10, [#allocation5], 128, 128, 8
        $region76: #{decoder_forward.1} parent=59 // pred_fallthru
          _
        // Predicated region
        $region77: #{decoder_forward.1} parent=59 // pred_check
          %p4285 = pneg %p279
        $region78: #{decoder_forward.1} parent=59 // pred_check_branch
          %4287 = sbr.rel (%p4285) target = $region80
        $region79: #{decoder_forward.1} parent=59 // pred_region
          %4288 = dma.done [#allocation5], 256
        $region80: #{decoder_forward.1} parent=59 // pred_fallthru
          _
      $region60: #{decoder_forward.1} parent=5 // pred_fallthru
        _
      %p4289 = scmp.le.s32.totalorder 2, %s21
      // Predicated region
      $region81: #{decoder_forward.1} parent=5 // pred_check
        %p4290 = pneg %p4289
      $region82: #{decoder_forward.1} parent=5 // pred_check_branch
        %4292 = sbr.rel (%p4290) target = $region84
      $region83: #{decoder_forward.1} parent=5 // pred_region
        %s4293 = ssub.s32 %s21, 2
      $region84: #{decoder_forward.1} parent=5 // pred_fallthru
        _
    $region6: #{decoder_forward.1} parent=1 // loop_footer
      %s25 = sadd.s32 1, %s21
    $region7: #{decoder_forward.1} parent=1 // loop_footer_branch
      %20 = sbr.rel target = $region3
    $region8: #{decoder_forward.1} parent=1 // loop_exit
      _
    %4294 = vsyncpa [#allocation4], 1
    %s4295 = scalar_lea.sflag [#allocation4], 1
    %4296 = vsyncpa %s4295, 1
    %4297 = vsyncpa [#allocation7], 1
    %4298 = vsyncpa [#allocation5], 1
    %s4299 = scalar_lea.sflag [#allocation5], 1
    %4300 = vsyncpa %s4299, 1

</llo_original>
